<compile_context>
chip_gen: v7x
topology: tpu7x:2x2x1
jax: 0.10.0
libtpu: 0.0.40
codegen_flags: <defaults>
</compile_context>

<pallas_src>
import jax
import jax.numpy as jnp
from jax.experimental import pallas as pl
from jax.experimental.pallas import tpu as pltpu

DIM = 2       # flow dimensionality   (module default)
WIDTH = 128   # coupling MLP width    (module default)
DEPTH = 10    # number of FlowSteps   (module default)
BATCH = 8

EPS = 1e-6

assert DIM == 2, "kernel hard-codes DIM == 2 (1x1 conv expansion, t/s column split)"


# ----------------------------------------------------------------------------
# In-kernel helpers
# ----------------------------------------------------------------------------
def _actnorm_x(h):
    """Actnorm (data-dependent init path) on the flow variable.
    Two-pass variance (cancellation-safe), exact divide / exact log so the logdet
    accumulated over DEPTH stays within tolerance.  Returns (z, -log(scale)) where
    -log(scale) is a (1, DIM) lane vector (reduction deferred to after the loop)."""
    inv_n = 1.0 / h.shape[0]
    mean = jnp.sum(h, axis=0, keepdims=True) * inv_n       # sublane reduce
    c = h - mean
    var = jnp.sum(c * c, axis=0, keepdims=True) * inv_n    # sublane reduce
    scale = jnp.sqrt(var) + EPS                             # > 0, abs() redundant
    z = c / scale
    return z, -jnp.log(scale)


def _actnorm_hidden(h):
    """Actnorm inside the coupling MLP: its logdet is discarded by the module, so
    never trace the log / lane reduce; fuse sqrt+add+recip into one EUP rsqrt."""
    inv_n = 1.0 / h.shape[0]
    s1 = jnp.sum(h, axis=0, keepdims=True)                  # two independent reduces
    s2 = jnp.sum(h * h, axis=0, keepdims=True)
    mean = s1 * inv_n
    var = jnp.maximum(s2 * inv_n - mean * mean, 0.0)
    inv = jax.lax.rsqrt(var + EPS * EPS)                    # ~ 1/(std + EPS)
    return (h - mean) * inv


# ----------------------------------------------------------------------------
# Pallas kernel
# ----------------------------------------------------------------------------
def flow_level_kernel(x_ref,          # (B, DIM)               f32
                      small_ref,      # (DEPTH, 8, WIDTH)      f32  packed small params
                      fc2_wT_ref,     # (DEPTH, WIDTH, WIDTH)  bf16 == W2^T
                      conv_ld_ref,    # (1, 1) SMEM: sum_d log|det W_d|
                      z_ref,          # out (B, DIM)
                      logdet_ref):    # out (B, 1)
    x = x_ref[...].astype(jnp.float32)
    B = x.shape[0]
    logdet = jnp.zeros((B, 1), jnp.float32)
    nls_acc = jnp.zeros((1, DIM), jnp.float32)     # deferred sum of -log(actnorm scale)

    for d in range(DEPTH):            # depth unrolled at trace time
        p = small_ref[d]              # (8, WIDTH) — one packed tile per step
        # packed rows: 0 = fc1 W^T row, 1 = conv W^T row0, 2 = conv W^T row1,
        #              3 = fc3 W row0 (t), 4 = fc3 W row1 (s), 5 = fc3_b,
        #              6 = exp(log_scale_factor)

        # ---------------- Actnorm (data-dependent init path) ----------------
        x, nls = _actnorm_x(x)
        nls_acc = nls_acc + nls       # (1, DIM); reduced once after the loop

        # ------------- Invertible 1x1 conv:  x @ W^T  (DIM == 2) -------------
        x = x[:, 0:1] * p[1:2, 0:DIM] + x[:, 1:2] * p[2:3, 0:DIM]
        # its log|det W| is data-independent; pre-summed in conv_ld_ref (SMEM)

        # ------------------------- Affine coupling ---------------------------
        x_a = x[:, 0:1]                                       # (B, 1)
        x_b = x[:, 1:2]                                       # (B, 1)

        # fc1: (B,1) @ (1,WIDTH) contraction == broadcast multiply.
        # fc1 bias omitted: it cancels exactly in the data-dependent-init actnorm.
        h = x_b * p[0:1, :]                                   # (B, WIDTH)
        h = jnp.maximum(_actnorm_hidden(h), 0.0)

        # fc2: bf16 x bf16 -> single native MXU pass, f32 accumulate.
        # fc2 bias omitted for the same cancellation reason.
        h = jnp.dot(h.astype(jnp.bfloat16), fc2_wT_ref[d],
                    preferred_element_type=jnp.float32)
        h = jnp.maximum(_actnorm_hidden(h), 0.0)

        # fc3 kept OFF the MXU (N=2 output): broadcast-mul + lane-reduce per column,
        # then bias and the precomputed exp(log_scale_factor).
        t = jnp.sum(h * p[3:4, :], axis=1, keepdims=True)     # (B, 1)
        y = jnp.sum(h * p[4:5, :], axis=1, keepdims=True)     # (B, 1)
        t = (t + p[5:6, 0:1]) * p[6:7, 0:1]
        y = (y + p[5:6, 1:2]) * p[6:7, 1:2] + 2.0

        # Fused sigmoid+log:  log_s = log(sigmoid(y)) = -softplus(-y),  s = exp(log_s)
        # (log(1+e^-|y|) kept over log1p: difference is sub-1e-7 absolute here.)
        log_s = -(jnp.maximum(-y, 0.0) + jnp.log(1.0 + jnp.exp(-jnp.abs(y))))
        s = jnp.exp(log_s)

        x = jnp.concatenate([s * x_a + t, x_b], axis=1)
        logdet = logdet + log_s                               # (B,1): no size-1 reduce

    z_ref[...] = x.astype(z_ref.dtype)
    # One deferred cross-lane reduce for all x-actnorm logdets + 1x1-conv slogdets.
    logdet_ref[...] = logdet + jnp.sum(nls_acc) + conv_ld_ref[0, 0]


# ----------------------------------------------------------------------------
# Parameter setup (glue) — raw params mirror the torch module, pack for the kernel
# ----------------------------------------------------------------------------
def init_raw_params(key):
    ks = jax.random.split(key, 5)

    # Invertible 1x1 conv: W = QR(randn)[0] per step (orthogonal => log|det| = 0)
    w = jax.random.normal(ks[0], (DEPTH, DIM, DIM), jnp.float32)
    w = jnp.linalg.qr(w)[0]
    conv_ld = jnp.sum(jnp.linalg.slogdet(w)[1]).astype(jnp.float32)  # data-independent

    # AffineCoupling MLP (deterministic synthetic init for fc1/fc2; fc3 & lsf are
    # zero-initialized exactly as in the torch module).
    fc1_w = 0.5 * jax.random.normal(ks[1], (DEPTH, WIDTH, DIM // 2), jnp.float32)
    fc1_b = 0.1 * jax.random.normal(ks[2], (DEPTH, WIDTH), jnp.float32)
    fc2_w = (1.0 / jnp.sqrt(WIDTH)) * jax.random.normal(
        ks[3], (DEPTH, WIDTH, WIDTH), jnp.float32)
    fc2_b = 0.1 * jax.random.normal(ks[4], (DEPTH, WIDTH), jnp.float32)
    fc3_w = jnp.zeros((DEPTH, DIM, WIDTH), jnp.float32)
    fc3_b = jnp.zeros((DEPTH, DIM), jnp.float32)
    lsf = jnp.zeros((DEPTH, DIM), jnp.float32)

    return dict(conv_w=w, conv_ld=conv_ld, fc1_w=fc1_w, fc1_b=fc1_b,
                fc2_w=fc2_w, fc2_b=fc2_b, fc3_w=fc3_w, fc3_b=fc3_b, lsf=lsf)


def pack_params(raw):
    conv_wT = jnp.transpose(raw["conv_w"], (0, 2, 1))                 # (DEPTH, DIM, DIM)

    # One (DEPTH, 8, 128) f32 tile holds all the small per-step parameters (1 DMA).
    # fc1_b / fc2_b are intentionally NOT packed: they cancel exactly in the
    # data-dependent-init actnorms that immediately follow fc1 / fc2.
    small = jnp.zeros((DEPTH, 8, WIDTH), jnp.float32)
    small = small.at[:, 0, :].set(raw["fc1_w"][:, :, 0])              # fc1 W^T row
    small = small.at[:, 1, :DIM].set(conv_wT[:, 0, :])                # conv W^T row 0
    small = small.at[:, 2, :DIM].set(conv_wT[:, 1, :])                # conv W^T row 1
    small = small.at[:, 3, :].set(raw["fc3_w"][:, 0, :])              # fc3 W row 0 (t)
    small = small.at[:, 4, :].set(raw["fc3_w"][:, 1, :])              # fc3 W row 1 (s)
    small = small.at[:, 5, :DIM].set(raw["fc3_b"])
    small = small.at[:, 6, :DIM].set(jnp.exp(raw["lsf"]))             # precomputed exp(lsf)

    fc2_wT = jnp.transpose(raw["fc2_w"], (0, 2, 1)).astype(jnp.bfloat16)
    conv_ld = raw["conv_ld"].reshape(1, 1)
    return small, fc2_wT, conv_ld


@jax.jit
def flow_level_forward(x, small, fc2_wT, conv_ld):
    B = x.shape[0]
    flops = DEPTH * (2 * B * WIDTH * WIDTH      # fc2 matmul
                     + 4 * B * WIDTH            # fc3 lane-reduce pair
                     + 10 * B * WIDTH)          # actnorms / relu / fc1 (approx)
    transcendentals = DEPTH * (2 * WIDTH + 2 * DIM + 3 * B)
    bytes_accessed = (x.size * 4 + small.size * 4 + fc2_wT.size * 2 + 4
                      + B * (DIM + 1) * 4)

    vmem = lambda: pl.BlockSpec(memory_space=pltpu.MemorySpace.VMEM)
    smem = lambda: pl.BlockSpec(memory_space=pltpu.MemorySpace.SMEM)

    z, logdet = pl.pallas_call(
        flow_level_kernel,
        out_shape=(jax.ShapeDtypeStruct((B, DIM), jnp.float32),
                   jax.ShapeDtypeStruct((B, 1), jnp.float32)),
        in_specs=[vmem(), vmem(), vmem(), smem()],
        out_specs=(vmem(), vmem()),
        cost_estimate=pl.CostEstimate(flops=flops,
                                      transcendentals=transcendentals,
                                      bytes_accessed=bytes_accessed),
    )(x, small, fc2_wT, conv_ld)
    return z, logdet[:, 0]


# ----------------------------------------------------------------------------
# Pure-JAX reference (mirrors the torch forward) for self-check
# ----------------------------------------------------------------------------
def flow_level_reference(x, raw):
    def actnorm(h):
        mean = h.mean(axis=0, keepdims=True)
        scale = h.std(axis=0, keepdims=True) + EPS         # population std (ddof=0)
        return (h - mean) / scale, -jnp.sum(jnp.log(jnp.abs(scale)))

    logdet = jnp.zeros((x.shape[0],), jnp.float32)
    for d in range(DEPTH):
        x, ld = actnorm(x)
        logdet = logdet + ld
        x = x @ raw["conv_w"][d].T
        x_a, x_b = x[:, : DIM // 2], x[:, DIM // 2:]
        h = x_b @ raw["fc1_w"][d].T + raw["fc1_b"][d]
        h = jnp.maximum(actnorm(h)[0], 0.0)
        h = h @ raw["fc2_w"][d].T + raw["fc2_b"][d]
        h = jnp.maximum(actnorm(h)[0], 0.0)
        h = (h @ raw["fc3_w"][d].T + raw["fc3_b"][d]) * jnp.exp(raw["lsf"][d])
        t = h[:, 0::2]
        s = jax.nn.sigmoid(h[:, 1::2] + 2.0)
        x = jnp.concatenate([s * x_a + t, x_b], axis=1)
        logdet = logdet + jnp.log(s).sum(axis=1)
    return x, logdet + raw["conv_ld"]


if __name__ == "__main__":
    key = jax.random.PRNGKey(0)
    kx, kp = jax.random.split(key)
    x = jax.random.normal(kx, (BATCH, DIM), jnp.float32)

    raw = init_raw_params(kp)
    small, fc2_wT, conv_ld = pack_params(raw)

    z, logdet = flow_level_forward(x, small, fc2_wT, conv_ld)
    jax.block_until_ready((z, logdet))

    z_ref, ld_ref = flow_level_reference(x, raw)
    assert z.shape == (BATCH, DIM) and logdet.shape == (BATCH,)
    assert jnp.allclose(z, z_ref, atol=1e-4, rtol=1e-4)
    assert jnp.allclose(logdet, ld_ref, atol=1e-4, rtol=1e-4)
    print("KERNEL_OK")
</pallas_src>

<mosaic_0001>
module attributes {stable_mosaic.version = 11 : i64} {
  func.func @flow_level_kernel(%arg0: memref<8x2xf32, #tpu.memory_space<vmem>>, %arg1: memref<10x8x128xf32, #tpu.memory_space<vmem>>, %arg2: memref<10x128x128xbf16, #tpu.memory_space<vmem>>, %arg3: memref<1x1xf32, #tpu.memory_space<smem>>, %arg4: memref<8x2xf32, #tpu.memory_space<vmem>>, %arg5: memref<8x1xf32, #tpu.memory_space<vmem>>) attributes {dimension_semantics = [], scalar_prefetch = 0 : i64, scratch_operands = 0 : i64, tpu.core_type = #tpu.core_type<tc>} {
    %c0 = arith.constant 0 : index
    %c0_0 = arith.constant 0 : index
    %0 = vector.load %arg0[%c0, %c0_0] : memref<8x2xf32, #tpu.memory_space<vmem>>, vector<8x2xf32>
    %cst = arith.constant 0.000000e+00 : f32
    %1 = vector.broadcast %cst : f32 to vector<8x1xf32>
    %cst_1 = arith.constant 0.000000e+00 : f32
    %2 = vector.broadcast %cst_1 : f32 to vector<1x2xf32>
    %c0_2 = arith.constant 0 : index
    %c0_3 = arith.constant 0 : index
    %c0_4 = arith.constant 0 : index
    %3 = vector.load %arg1[%c0_2, %c0_3, %c0_4] : memref<10x8x128xf32, #tpu.memory_space<vmem>>, vector<1x8x128xf32>
    %4 = vector.shape_cast %3 : vector<1x8x128xf32> to vector<8x128xf32>
    %cst_5 = arith.constant dense<0.000000e+00> : vector<2xf32>
    %5 = vector.multi_reduction <add>, %0, %cst_5 [0] : vector<8x2xf32> to vector<2xf32>
    %6 = vector.shape_cast %5 : vector<2xf32> to vector<1x2xf32>
    %cst_6 = arith.constant 1.250000e-01 : f32
    %7 = vector.broadcast %cst_6 : f32 to vector<1x2xf32>
    %8 = arith.mulf %6, %7 : vector<1x2xf32>
    %9 = vector.broadcast %8 : vector<1x2xf32> to vector<8x2xf32>
    %10 = arith.subf %0, %9 : vector<8x2xf32>
    %11 = arith.mulf %10, %10 : vector<8x2xf32>
    %cst_7 = arith.constant dense<0.000000e+00> : vector<2xf32>
    %12 = vector.multi_reduction <add>, %11, %cst_7 [0] : vector<8x2xf32> to vector<2xf32>
    %13 = vector.shape_cast %12 : vector<2xf32> to vector<1x2xf32>
    %cst_8 = arith.constant 1.250000e-01 : f32
    %14 = vector.broadcast %cst_8 : f32 to vector<1x2xf32>
    %15 = arith.mulf %13, %14 : vector<1x2xf32>
    %16 = math.sqrt %15 : vector<1x2xf32>
    %cst_9 = arith.constant 9.99999997E-7 : f32
    %17 = vector.broadcast %cst_9 : f32 to vector<1x2xf32>
    %18 = arith.addf %16, %17 : vector<1x2xf32>
    %19 = vector.broadcast %18 : vector<1x2xf32> to vector<8x2xf32>
    %20 = arith.divf %10, %19 : vector<8x2xf32>
    %21 = math.log %18 : vector<1x2xf32>
    %cst_10 = arith.constant 0.000000e+00 : f32
    %22 = vector.broadcast %cst_10 : f32 to vector<1x2xf32>
    %23 = arith.subf %22, %21 : vector<1x2xf32>
    %24 = arith.addf %2, %23 : vector<1x2xf32>
    %25 = vector.extract_strided_slice %20 {offsets = [0, 0], sizes = [8, 1], strides = [1, 1]} : vector<8x2xf32> to vector<8x1xf32>
    %26 = vector.extract_strided_slice %4 {offsets = [1, 0], sizes = [1, 2], strides = [1, 1]} : vector<8x128xf32> to vector<1x2xf32>
    %27 = vector.broadcast %25 : vector<8x1xf32> to vector<8x2xf32>
    %28 = vector.broadcast %26 : vector<1x2xf32> to vector<8x2xf32>
    %29 = arith.mulf %27, %28 : vector<8x2xf32>
    %30 = vector.extract_strided_slice %20 {offsets = [0, 1], sizes = [8, 1], strides = [1, 1]} : vector<8x2xf32> to vector<8x1xf32>
    %31 = vector.extract_strided_slice %4 {offsets = [2, 0], sizes = [1, 2], strides = [1, 1]} : vector<8x128xf32> to vector<1x2xf32>
    %32 = vector.broadcast %30 : vector<8x1xf32> to vector<8x2xf32>
    %33 = vector.broadcast %31 : vector<1x2xf32> to vector<8x2xf32>
    %34 = arith.mulf %32, %33 : vector<8x2xf32>
    %35 = arith.addf %29, %34 : vector<8x2xf32>
    %36 = vector.extract_strided_slice %35 {offsets = [0, 0], sizes = [8, 1], strides = [1, 1]} : vector<8x2xf32> to vector<8x1xf32>
    %37 = vector.extract_strided_slice %35 {offsets = [0, 1], sizes = [8, 1], strides = [1, 1]} : vector<8x2xf32> to vector<8x1xf32>
    %38 = vector.extract_strided_slice %4 {offsets = [0, 0], sizes = [1, 128], strides = [1, 1]} : vector<8x128xf32> to vector<1x128xf32>
    %39 = vector.broadcast %37 : vector<8x1xf32> to vector<8x128xf32>
    %40 = vector.broadcast %38 : vector<1x128xf32> to vector<8x128xf32>
    %41 = arith.mulf %39, %40 : vector<8x128xf32>
    %cst_11 = arith.constant dense<0.000000e+00> : vector<128xf32>
    %42 = vector.multi_reduction <add>, %41, %cst_11 [0] : vector<8x128xf32> to vector<128xf32>
    %43 = vector.shape_cast %42 : vector<128xf32> to vector<1x128xf32>
    %44 = arith.mulf %41, %41 : vector<8x128xf32>
    %cst_12 = arith.constant dense<0.000000e+00> : vector<128xf32>
    %45 = vector.multi_reduction <add>, %44, %cst_12 [0] : vector<8x128xf32> to vector<128xf32>
    %46 = vector.shape_cast %45 : vector<128xf32> to vector<1x128xf32>
    %cst_13 = arith.constant 1.250000e-01 : f32
    %47 = vector.broadcast %cst_13 : f32 to vector<1x128xf32>
    %48 = arith.mulf %43, %47 : vector<1x128xf32>
    %cst_14 = arith.constant 1.250000e-01 : f32
    %49 = vector.broadcast %cst_14 : f32 to vector<1x128xf32>
    %50 = arith.mulf %46, %49 : vector<1x128xf32>
    %51 = arith.mulf %48, %48 : vector<1x128xf32>
    %52 = arith.subf %50, %51 : vector<1x128xf32>
    %cst_15 = arith.constant 0.000000e+00 : f32
    %53 = vector.broadcast %cst_15 : f32 to vector<1x128xf32>
    %54 = arith.maximumf %52, %53 : vector<1x128xf32>
    %cst_16 = arith.constant 9.99999996E-13 : f32
    %55 = vector.broadcast %cst_16 : f32 to vector<1x128xf32>
    %56 = arith.addf %54, %55 : vector<1x128xf32>
    %57 = math.rsqrt %56 : vector<1x128xf32>
    %58 = vector.broadcast %48 : vector<1x128xf32> to vector<8x128xf32>
    %59 = arith.subf %41, %58 : vector<8x128xf32>
    %60 = vector.broadcast %57 : vector<1x128xf32> to vector<8x128xf32>
    %61 = arith.mulf %59, %60 : vector<8x128xf32>
    %cst_17 = arith.constant 0.000000e+00 : f32
    %62 = vector.broadcast %cst_17 : f32 to vector<8x128xf32>
    %63 = arith.maximumf %61, %62 : vector<8x128xf32>
    %64 = arith.truncf %63 : vector<8x128xf32> to vector<8x128xbf16>
    %c0_18 = arith.constant 0 : index
    %c0_19 = arith.constant 0 : index
    %c0_20 = arith.constant 0 : index
    %65 = vector.load %arg2[%c0_18, %c0_19, %c0_20] : memref<10x128x128xbf16, #tpu.memory_space<vmem>>, vector<1x128x128xbf16>
    %66 = vector.shape_cast %65 : vector<1x128x128xbf16> to vector<128x128xbf16>
    %cst_21 = arith.constant dense<0.000000e+00> : vector<8x128xf32>
    %67 = tpu.matmul %64, %66, %cst_21 {dimension_numbers = #tpu.dot_dimension_numbers<[1], [0], [0], [1], [0, 0, 1, 1], [], []>} : vector<8x128xbf16>, vector<128x128xbf16>, vector<8x128xf32> -> vector<8x128xf32>
    %cst_22 = arith.constant dense<0.000000e+00> : vector<128xf32>
    %68 = vector.multi_reduction <add>, %67, %cst_22 [0] : vector<8x128xf32> to vector<128xf32>
    %69 = vector.shape_cast %68 : vector<128xf32> to vector<1x128xf32>
    %70 = arith.mulf %67, %67 : vector<8x128xf32>
    %cst_23 = arith.constant dense<0.000000e+00> : vector<128xf32>
    %71 = vector.multi_reduction <add>, %70, %cst_23 [0] : vector<8x128xf32> to vector<128xf32>
    %72 = vector.shape_cast %71 : vector<128xf32> to vector<1x128xf32>
    %cst_24 = arith.constant 1.250000e-01 : f32
    %73 = vector.broadcast %cst_24 : f32 to vector<1x128xf32>
    %74 = arith.mulf %69, %73 : vector<1x128xf32>
    %cst_25 = arith.constant 1.250000e-01 : f32
    %75 = vector.broadcast %cst_25 : f32 to vector<1x128xf32>
    %76 = arith.mulf %72, %75 : vector<1x128xf32>
    %77 = arith.mulf %74, %74 : vector<1x128xf32>
    %78 = arith.subf %76, %77 : vector<1x128xf32>
    %cst_26 = arith.constant 0.000000e+00 : f32
    %79 = vector.broadcast %cst_26 : f32 to vector<1x128xf32>
    %80 = arith.maximumf %78, %79 : vector<1x128xf32>
    %cst_27 = arith.constant 9.99999996E-13 : f32
    %81 = vector.broadcast %cst_27 : f32 to vector<1x128xf32>
    %82 = arith.addf %80, %81 : vector<1x128xf32>
    %83 = math.rsqrt %82 : vector<1x128xf32>
    %84 = vector.broadcast %74 : vector<1x128xf32> to vector<8x128xf32>
    %85 = arith.subf %67, %84 : vector<8x128xf32>
    %86 = vector.broadcast %83 : vector<1x128xf32> to vector<8x128xf32>
    %87 = arith.mulf %85, %86 : vector<8x128xf32>
    %cst_28 = arith.constant 0.000000e+00 : f32
    %88 = vector.broadcast %cst_28 : f32 to vector<8x128xf32>
    %89 = arith.maximumf %87, %88 : vector<8x128xf32>
    %90 = vector.extract_strided_slice %4 {offsets = [3, 0], sizes = [1, 128], strides = [1, 1]} : vector<8x128xf32> to vector<1x128xf32>
    %91 = vector.broadcast %90 : vector<1x128xf32> to vector<8x128xf32>
    %92 = arith.mulf %89, %91 : vector<8x128xf32>
    %cst_29 = arith.constant dense<0.000000e+00> : vector<8xf32>
    %93 = vector.multi_reduction <add>, %92, %cst_29 [1] : vector<8x128xf32> to vector<8xf32>
    %94 = vector.shape_cast %93 : vector<8xf32> to vector<8x1xf32>
    %95 = vector.extract_strided_slice %4 {offsets = [4, 0], sizes = [1, 128], strides = [1, 1]} : vector<8x128xf32> to vector<1x128xf32>
    %96 = vector.broadcast %95 : vector<1x128xf32> to vector<8x128xf32>
    %97 = arith.mulf %89, %96 : vector<8x128xf32>
    %cst_30 = arith.constant dense<0.000000e+00> : vector<8xf32>
    %98 = vector.multi_reduction <add>, %97, %cst_30 [1] : vector<8x128xf32> to vector<8xf32>
    %99 = vector.shape_cast %98 : vector<8xf32> to vector<8x1xf32>
    %100 = vector.extract_strided_slice %4 {offsets = [5, 0], sizes = [1, 1], strides = [1, 1]} : vector<8x128xf32> to vector<1x1xf32>
    %101 = vector.broadcast %100 : vector<1x1xf32> to vector<8x1xf32>
    %102 = arith.addf %94, %101 : vector<8x1xf32>
    %103 = vector.extract_strided_slice %4 {offsets = [6, 0], sizes = [1, 1], strides = [1, 1]} : vector<8x128xf32> to vector<1x1xf32>
    %104 = vector.broadcast %103 : vector<1x1xf32> to vector<8x1xf32>
    %105 = arith.mulf %102, %104 : vector<8x1xf32>
    %106 = vector.extract_strided_slice %4 {offsets = [5, 1], sizes = [1, 1], strides = [1, 1]} : vector<8x128xf32> to vector<1x1xf32>
    %107 = vector.broadcast %106 : vector<1x1xf32> to vector<8x1xf32>
    %108 = arith.addf %99, %107 : vector<8x1xf32>
    %109 = vector.extract_strided_slice %4 {offsets = [6, 1], sizes = [1, 1], strides = [1, 1]} : vector<8x128xf32> to vector<1x1xf32>
    %110 = vector.broadcast %109 : vector<1x1xf32> to vector<8x1xf32>
    %111 = arith.mulf %108, %110 : vector<8x1xf32>
    %cst_31 = arith.constant 2.000000e+00 : f32
    %112 = vector.broadcast %cst_31 : f32 to vector<8x1xf32>
    %113 = arith.addf %111, %112 : vector<8x1xf32>
    %cst_32 = arith.constant 0.000000e+00 : f32
    %114 = vector.broadcast %cst_32 : f32 to vector<8x1xf32>
    %115 = arith.subf %114, %113 : vector<8x1xf32>
    %cst_33 = arith.constant 0.000000e+00 : f32
    %116 = vector.broadcast %cst_33 : f32 to vector<8x1xf32>
    %117 = arith.maximumf %115, %116 : vector<8x1xf32>
    %118 = math.absf %113 : vector<8x1xf32>
    %cst_34 = arith.constant 0.000000e+00 : f32
    %119 = vector.broadcast %cst_34 : f32 to vector<8x1xf32>
    %120 = arith.subf %119, %118 : vector<8x1xf32>
    %121 = math.exp %120 : vector<8x1xf32>
    %cst_35 = arith.constant 1.000000e+00 : f32
    %122 = vector.broadcast %cst_35 : f32 to vector<8x1xf32>
    %123 = arith.addf %122, %121 : vector<8x1xf32>
    %124 = math.log %123 : vector<8x1xf32>
    %125 = arith.addf %117, %124 : vector<8x1xf32>
    %cst_36 = arith.constant 0.000000e+00 : f32
    %126 = vector.broadcast %cst_36 : f32 to vector<8x1xf32>
    %127 = arith.subf %126, %125 : vector<8x1xf32>
    %128 = math.exp %127 : vector<8x1xf32>
    %129 = arith.mulf %128, %36 : vector<8x1xf32>
    %130 = arith.addf %129, %105 : vector<8x1xf32>
    %131 = tpu.concatenate %130, %37 in 1 : vector<8x1xf32>, vector<8x1xf32> -> vector<8x2xf32>
    %132 = arith.addf %1, %127 : vector<8x1xf32>
    %c1 = arith.constant 1 : index
    %c0_37 = arith.constant 0 : index
    %c0_38 = arith.constant 0 : index
    %133 = vector.load %arg1[%c1, %c0_37, %c0_38] : memref<10x8x128xf32, #tpu.memory_space<vmem>>, vector<1x8x128xf32>
    %134 = vector.shape_cast %133 : vector<1x8x128xf32> to vector<8x128xf32>
    %cst_39 = arith.constant dense<0.000000e+00> : vector<2xf32>
    %135 = vector.multi_reduction <add>, %131, %cst_39 [0] : vector<8x2xf32> to vector<2xf32>
    %136 = vector.shape_cast %135 : vector<2xf32> to vector<1x2xf32>
    %cst_40 = arith.constant 1.250000e-01 : f32
    %137 = vector.broadcast %cst_40 : f32 to vector<1x2xf32>
    %138 = arith.mulf %136, %137 : vector<1x2xf32>
    %139 = vector.broadcast %138 : vector<1x2xf32> to vector<8x2xf32>
    %140 = arith.subf %131, %139 : vector<8x2xf32>
    %141 = arith.mulf %140, %140 : vector<8x2xf32>
    %cst_41 = arith.constant dense<0.000000e+00> : vector<2xf32>
    %142 = vector.multi_reduction <add>, %141, %cst_41 [0] : vector<8x2xf32> to vector<2xf32>
    %143 = vector.shape_cast %142 : vector<2xf32> to vector<1x2xf32>
    %cst_42 = arith.constant 1.250000e-01 : f32
    %144 = vector.broadcast %cst_42 : f32 to vector<1x2xf32>
    %145 = arith.mulf %143, %144 : vector<1x2xf32>
    %146 = math.sqrt %145 : vector<1x2xf32>
    %cst_43 = arith.constant 9.99999997E-7 : f32
    %147 = vector.broadcast %cst_43 : f32 to vector<1x2xf32>
    %148 = arith.addf %146, %147 : vector<1x2xf32>
    %149 = vector.broadcast %148 : vector<1x2xf32> to vector<8x2xf32>
    %150 = arith.divf %140, %149 : vector<8x2xf32>
    %151 = math.log %148 : vector<1x2xf32>
    %cst_44 = arith.constant 0.000000e+00 : f32
    %152 = vector.broadcast %cst_44 : f32 to vector<1x2xf32>
    %153 = arith.subf %152, %151 : vector<1x2xf32>
    %154 = arith.addf %24, %153 : vector<1x2xf32>
    %155 = vector.extract_strided_slice %150 {offsets = [0, 0], sizes = [8, 1], strides = [1, 1]} : vector<8x2xf32> to vector<8x1xf32>
    %156 = vector.extract_strided_slice %134 {offsets = [1, 0], sizes = [1, 2], strides = [1, 1]} : vector<8x128xf32> to vector<1x2xf32>
    %157 = vector.broadcast %155 : vector<8x1xf32> to vector<8x2xf32>
    %158 = vector.broadcast %156 : vector<1x2xf32> to vector<8x2xf32>
    %159 = arith.mulf %157, %158 : vector<8x2xf32>
    %160 = vector.extract_strided_slice %150 {offsets = [0, 1], sizes = [8, 1], strides = [1, 1]} : vector<8x2xf32> to vector<8x1xf32>
    %161 = vector.extract_strided_slice %134 {offsets = [2, 0], sizes = [1, 2], strides = [1, 1]} : vector<8x128xf32> to vector<1x2xf32>
    %162 = vector.broadcast %160 : vector<8x1xf32> to vector<8x2xf32>
    %163 = vector.broadcast %161 : vector<1x2xf32> to vector<8x2xf32>
    %164 = arith.mulf %162, %163 : vector<8x2xf32>
    %165 = arith.addf %159, %164 : vector<8x2xf32>
    %166 = vector.extract_strided_slice %165 {offsets = [0, 0], sizes = [8, 1], strides = [1, 1]} : vector<8x2xf32> to vector<8x1xf32>
    %167 = vector.extract_strided_slice %165 {offsets = [0, 1], sizes = [8, 1], strides = [1, 1]} : vector<8x2xf32> to vector<8x1xf32>
    %168 = vector.extract_strided_slice %134 {offsets = [0, 0], sizes = [1, 128], strides = [1, 1]} : vector<8x128xf32> to vector<1x128xf32>
    %169 = vector.broadcast %167 : vector<8x1xf32> to vector<8x128xf32>
    %170 = vector.broadcast %168 : vector<1x128xf32> to vector<8x128xf32>
    %171 = arith.mulf %169, %170 : vector<8x128xf32>
    %cst_45 = arith.constant dense<0.000000e+00> : vector<128xf32>
    %172 = vector.multi_reduction <add>, %171, %cst_45 [0] : vector<8x128xf32> to vector<128xf32>
    %173 = vector.shape_cast %172 : vector<128xf32> to vector<1x128xf32>
    %174 = arith.mulf %171, %171 : vector<8x128xf32>
    %cst_46 = arith.constant dense<0.000000e+00> : vector<128xf32>
    %175 = vector.multi_reduction <add>, %174, %cst_46 [0] : vector<8x128xf32> to vector<128xf32>
    %176 = vector.shape_cast %175 : vector<128xf32> to vector<1x128xf32>
    %cst_47 = arith.constant 1.250000e-01 : f32
    %177 = vector.broadcast %cst_47 : f32 to vector<1x128xf32>
    %178 = arith.mulf %173, %177 : vector<1x128xf32>
    %cst_48 = arith.constant 1.250000e-01 : f32
    %179 = vector.broadcast %cst_48 : f32 to vector<1x128xf32>
    %180 = arith.mulf %176, %179 : vector<1x128xf32>
    %181 = arith.mulf %178, %178 : vector<1x128xf32>
    %182 = arith.subf %180, %181 : vector<1x128xf32>
    %cst_49 = arith.constant 0.000000e+00 : f32
    %183 = vector.broadcast %cst_49 : f32 to vector<1x128xf32>
    %184 = arith.maximumf %182, %183 : vector<1x128xf32>
    %cst_50 = arith.constant 9.99999996E-13 : f32
    %185 = vector.broadcast %cst_50 : f32 to vector<1x128xf32>
    %186 = arith.addf %184, %185 : vector<1x128xf32>
    %187 = math.rsqrt %186 : vector<1x128xf32>
    %188 = vector.broadcast %178 : vector<1x128xf32> to vector<8x128xf32>
    %189 = arith.subf %171, %188 : vector<8x128xf32>
    %190 = vector.broadcast %187 : vector<1x128xf32> to vector<8x128xf32>
    %191 = arith.mulf %189, %190 : vector<8x128xf32>
    %cst_51 = arith.constant 0.000000e+00 : f32
    %192 = vector.broadcast %cst_51 : f32 to vector<8x128xf32>
    %193 = arith.maximumf %191, %192 : vector<8x128xf32>
    %194 = arith.truncf %193 : vector<8x128xf32> to vector<8x128xbf16>
    %c1_52 = arith.constant 1 : index
    %c0_53 = arith.constant 0 : index
    %c0_54 = arith.constant 0 : index
    %195 = vector.load %arg2[%c1_52, %c0_53, %c0_54] : memref<10x128x128xbf16, #tpu.memory_space<vmem>>, vector<1x128x128xbf16>
    %196 = vector.shape_cast %195 : vector<1x128x128xbf16> to vector<128x128xbf16>
    %cst_55 = arith.constant dense<0.000000e+00> : vector<8x128xf32>
    %197 = tpu.matmul %194, %196, %cst_55 {dimension_numbers = #tpu.dot_dimension_numbers<[1], [0], [0], [1], [0, 0, 1, 1], [], []>} : vector<8x128xbf16>, vector<128x128xbf16>, vector<8x128xf32> -> vector<8x128xf32>
    %cst_56 = arith.constant dense<0.000000e+00> : vector<128xf32>
    %198 = vector.multi_reduction <add>, %197, %cst_56 [0] : vector<8x128xf32> to vector<128xf32>
    %199 = vector.shape_cast %198 : vector<128xf32> to vector<1x128xf32>
    %200 = arith.mulf %197, %197 : vector<8x128xf32>
    %cst_57 = arith.constant dense<0.000000e+00> : vector<128xf32>
    %201 = vector.multi_reduction <add>, %200, %cst_57 [0] : vector<8x128xf32> to vector<128xf32>
    %202 = vector.shape_cast %201 : vector<128xf32> to vector<1x128xf32>
    %cst_58 = arith.constant 1.250000e-01 : f32
    %203 = vector.broadcast %cst_58 : f32 to vector<1x128xf32>
    %204 = arith.mulf %199, %203 : vector<1x128xf32>
    %cst_59 = arith.constant 1.250000e-01 : f32
    %205 = vector.broadcast %cst_59 : f32 to vector<1x128xf32>
    %206 = arith.mulf %202, %205 : vector<1x128xf32>
    %207 = arith.mulf %204, %204 : vector<1x128xf32>
    %208 = arith.subf %206, %207 : vector<1x128xf32>
    %cst_60 = arith.constant 0.000000e+00 : f32
    %209 = vector.broadcast %cst_60 : f32 to vector<1x128xf32>
    %210 = arith.maximumf %208, %209 : vector<1x128xf32>
    %cst_61 = arith.constant 9.99999996E-13 : f32
    %211 = vector.broadcast %cst_61 : f32 to vector<1x128xf32>
    %212 = arith.addf %210, %211 : vector<1x128xf32>
    %213 = math.rsqrt %212 : vector<1x128xf32>
    %214 = vector.broadcast %204 : vector<1x128xf32> to vector<8x128xf32>
    %215 = arith.subf %197, %214 : vector<8x128xf32>
    %216 = vector.broadcast %213 : vector<1x128xf32> to vector<8x128xf32>
    %217 = arith.mulf %215, %216 : vector<8x128xf32>
    %cst_62 = arith.constant 0.000000e+00 : f32
    %218 = vector.broadcast %cst_62 : f32 to vector<8x128xf32>
    %219 = arith.maximumf %217, %218 : vector<8x128xf32>
    %220 = vector.extract_strided_slice %134 {offsets = [3, 0], sizes = [1, 128], strides = [1, 1]} : vector<8x128xf32> to vector<1x128xf32>
    %221 = vector.broadcast %220 : vector<1x128xf32> to vector<8x128xf32>
    %222 = arith.mulf %219, %221 : vector<8x128xf32>
    %cst_63 = arith.constant dense<0.000000e+00> : vector<8xf32>
    %223 = vector.multi_reduction <add>, %222, %cst_63 [1] : vector<8x128xf32> to vector<8xf32>
    %224 = vector.shape_cast %223 : vector<8xf32> to vector<8x1xf32>
    %225 = vector.extract_strided_slice %134 {offsets = [4, 0], sizes = [1, 128], strides = [1, 1]} : vector<8x128xf32> to vector<1x128xf32>
    %226 = vector.broadcast %225 : vector<1x128xf32> to vector<8x128xf32>
    %227 = arith.mulf %219, %226 : vector<8x128xf32>
    %cst_64 = arith.constant dense<0.000000e+00> : vector<8xf32>
    %228 = vector.multi_reduction <add>, %227, %cst_64 [1] : vector<8x128xf32> to vector<8xf32>
    %229 = vector.shape_cast %228 : vector<8xf32> to vector<8x1xf32>
    %230 = vector.extract_strided_slice %134 {offsets = [5, 0], sizes = [1, 1], strides = [1, 1]} : vector<8x128xf32> to vector<1x1xf32>
    %231 = vector.broadcast %230 : vector<1x1xf32> to vector<8x1xf32>
    %232 = arith.addf %224, %231 : vector<8x1xf32>
    %233 = vector.extract_strided_slice %134 {offsets = [6, 0], sizes = [1, 1], strides = [1, 1]} : vector<8x128xf32> to vector<1x1xf32>
    %234 = vector.broadcast %233 : vector<1x1xf32> to vector<8x1xf32>
    %235 = arith.mulf %232, %234 : vector<8x1xf32>
    %236 = vector.extract_strided_slice %134 {offsets = [5, 1], sizes = [1, 1], strides = [1, 1]} : vector<8x128xf32> to vector<1x1xf32>
    %237 = vector.broadcast %236 : vector<1x1xf32> to vector<8x1xf32>
    %238 = arith.addf %229, %237 : vector<8x1xf32>
    %239 = vector.extract_strided_slice %134 {offsets = [6, 1], sizes = [1, 1], strides = [1, 1]} : vector<8x128xf32> to vector<1x1xf32>
    %240 = vector.broadcast %239 : vector<1x1xf32> to vector<8x1xf32>
    %241 = arith.mulf %238, %240 : vector<8x1xf32>
    %cst_65 = arith.constant 2.000000e+00 : f32
    %242 = vector.broadcast %cst_65 : f32 to vector<8x1xf32>
    %243 = arith.addf %241, %242 : vector<8x1xf32>
    %cst_66 = arith.constant 0.000000e+00 : f32
    %244 = vector.broadcast %cst_66 : f32 to vector<8x1xf32>
    %245 = arith.subf %244, %243 : vector<8x1xf32>
    %cst_67 = arith.constant 0.000000e+00 : f32
    %246 = vector.broadcast %cst_67 : f32 to vector<8x1xf32>
    %247 = arith.maximumf %245, %246 : vector<8x1xf32>
    %248 = math.absf %243 : vector<8x1xf32>
    %cst_68 = arith.constant 0.000000e+00 : f32
    %249 = vector.broadcast %cst_68 : f32 to vector<8x1xf32>
    %250 = arith.subf %249, %248 : vector<8x1xf32>
    %251 = math.exp %250 : vector<8x1xf32>
    %cst_69 = arith.constant 1.000000e+00 : f32
    %252 = vector.broadcast %cst_69 : f32 to vector<8x1xf32>
    %253 = arith.addf %252, %251 : vector<8x1xf32>
    %254 = math.log %253 : vector<8x1xf32>
    %255 = arith.addf %247, %254 : vector<8x1xf32>
    %cst_70 = arith.constant 0.000000e+00 : f32
    %256 = vector.broadcast %cst_70 : f32 to vector<8x1xf32>
    %257 = arith.subf %256, %255 : vector<8x1xf32>
    %258 = math.exp %257 : vector<8x1xf32>
    %259 = arith.mulf %258, %166 : vector<8x1xf32>
    %260 = arith.addf %259, %235 : vector<8x1xf32>
    %261 = tpu.concatenate %260, %167 in 1 : vector<8x1xf32>, vector<8x1xf32> -> vector<8x2xf32>
    %262 = arith.addf %132, %257 : vector<8x1xf32>
    %c2 = arith.constant 2 : index
    %c0_71 = arith.constant 0 : index
    %c0_72 = arith.constant 0 : index
    %263 = vector.load %arg1[%c2, %c0_71, %c0_72] : memref<10x8x128xf32, #tpu.memory_space<vmem>>, vector<1x8x128xf32>
    %264 = vector.shape_cast %263 : vector<1x8x128xf32> to vector<8x128xf32>
    %cst_73 = arith.constant dense<0.000000e+00> : vector<2xf32>
    %265 = vector.multi_reduction <add>, %261, %cst_73 [0] : vector<8x2xf32> to vector<2xf32>
    %266 = vector.shape_cast %265 : vector<2xf32> to vector<1x2xf32>
    %cst_74 = arith.constant 1.250000e-01 : f32
    %267 = vector.broadcast %cst_74 : f32 to vector<1x2xf32>
    %268 = arith.mulf %266, %267 : vector<1x2xf32>
    %269 = vector.broadcast %268 : vector<1x2xf32> to vector<8x2xf32>
    %270 = arith.subf %261, %269 : vector<8x2xf32>
    %271 = arith.mulf %270, %270 : vector<8x2xf32>
    %cst_75 = arith.constant dense<0.000000e+00> : vector<2xf32>
    %272 = vector.multi_reduction <add>, %271, %cst_75 [0] : vector<8x2xf32> to vector<2xf32>
    %273 = vector.shape_cast %272 : vector<2xf32> to vector<1x2xf32>
    %cst_76 = arith.constant 1.250000e-01 : f32
    %274 = vector.broadcast %cst_76 : f32 to vector<1x2xf32>
    %275 = arith.mulf %273, %274 : vector<1x2xf32>
    %276 = math.sqrt %275 : vector<1x2xf32>
    %cst_77 = arith.constant 9.99999997E-7 : f32
    %277 = vector.broadcast %cst_77 : f32 to vector<1x2xf32>
    %278 = arith.addf %276, %277 : vector<1x2xf32>
    %279 = vector.broadcast %278 : vector<1x2xf32> to vector<8x2xf32>
    %280 = arith.divf %270, %279 : vector<8x2xf32>
    %281 = math.log %278 : vector<1x2xf32>
    %cst_78 = arith.constant 0.000000e+00 : f32
    %282 = vector.broadcast %cst_78 : f32 to vector<1x2xf32>
    %283 = arith.subf %282, %281 : vector<1x2xf32>
    %284 = arith.addf %154, %283 : vector<1x2xf32>
    %285 = vector.extract_strided_slice %280 {offsets = [0, 0], sizes = [8, 1], strides = [1, 1]} : vector<8x2xf32> to vector<8x1xf32>
    %286 = vector.extract_strided_slice %264 {offsets = [1, 0], sizes = [1, 2], strides = [1, 1]} : vector<8x128xf32> to vector<1x2xf32>
    %287 = vector.broadcast %285 : vector<8x1xf32> to vector<8x2xf32>
    %288 = vector.broadcast %286 : vector<1x2xf32> to vector<8x2xf32>
    %289 = arith.mulf %287, %288 : vector<8x2xf32>
    %290 = vector.extract_strided_slice %280 {offsets = [0, 1], sizes = [8, 1], strides = [1, 1]} : vector<8x2xf32> to vector<8x1xf32>
    %291 = vector.extract_strided_slice %264 {offsets = [2, 0], sizes = [1, 2], strides = [1, 1]} : vector<8x128xf32> to vector<1x2xf32>
    %292 = vector.broadcast %290 : vector<8x1xf32> to vector<8x2xf32>
    %293 = vector.broadcast %291 : vector<1x2xf32> to vector<8x2xf32>
    %294 = arith.mulf %292, %293 : vector<8x2xf32>
    %295 = arith.addf %289, %294 : vector<8x2xf32>
    %296 = vector.extract_strided_slice %295 {offsets = [0, 0], sizes = [8, 1], strides = [1, 1]} : vector<8x2xf32> to vector<8x1xf32>
    %297 = vector.extract_strided_slice %295 {offsets = [0, 1], sizes = [8, 1], strides = [1, 1]} : vector<8x2xf32> to vector<8x1xf32>
    %298 = vector.extract_strided_slice %264 {offsets = [0, 0], sizes = [1, 128], strides = [1, 1]} : vector<8x128xf32> to vector<1x128xf32>
    %299 = vector.broadcast %297 : vector<8x1xf32> to vector<8x128xf32>
    %300 = vector.broadcast %298 : vector<1x128xf32> to vector<8x128xf32>
    %301 = arith.mulf %299, %300 : vector<8x128xf32>
    %cst_79 = arith.constant dense<0.000000e+00> : vector<128xf32>
    %302 = vector.multi_reduction <add>, %301, %cst_79 [0] : vector<8x128xf32> to vector<128xf32>
    %303 = vector.shape_cast %302 : vector<128xf32> to vector<1x128xf32>
    %304 = arith.mulf %301, %301 : vector<8x128xf32>
    %cst_80 = arith.constant dense<0.000000e+00> : vector<128xf32>
    %305 = vector.multi_reduction <add>, %304, %cst_80 [0] : vector<8x128xf32> to vector<128xf32>
    %306 = vector.shape_cast %305 : vector<128xf32> to vector<1x128xf32>
    %cst_81 = arith.constant 1.250000e-01 : f32
    %307 = vector.broadcast %cst_81 : f32 to vector<1x128xf32>
    %308 = arith.mulf %303, %307 : vector<1x128xf32>
    %cst_82 = arith.constant 1.250000e-01 : f32
    %309 = vector.broadcast %cst_82 : f32 to vector<1x128xf32>
    %310 = arith.mulf %306, %309 : vector<1x128xf32>
    %311 = arith.mulf %308, %308 : vector<1x128xf32>
    %312 = arith.subf %310, %311 : vector<1x128xf32>
    %cst_83 = arith.constant 0.000000e+00 : f32
    %313 = vector.broadcast %cst_83 : f32 to vector<1x128xf32>
    %314 = arith.maximumf %312, %313 : vector<1x128xf32>
    %cst_84 = arith.constant 9.99999996E-13 : f32
    %315 = vector.broadcast %cst_84 : f32 to vector<1x128xf32>
    %316 = arith.addf %314, %315 : vector<1x128xf32>
    %317 = math.rsqrt %316 : vector<1x128xf32>
    %318 = vector.broadcast %308 : vector<1x128xf32> to vector<8x128xf32>
    %319 = arith.subf %301, %318 : vector<8x128xf32>
    %320 = vector.broadcast %317 : vector<1x128xf32> to vector<8x128xf32>
    %321 = arith.mulf %319, %320 : vector<8x128xf32>
    %cst_85 = arith.constant 0.000000e+00 : f32
    %322 = vector.broadcast %cst_85 : f32 to vector<8x128xf32>
    %323 = arith.maximumf %321, %322 : vector<8x128xf32>
    %324 = arith.truncf %323 : vector<8x128xf32> to vector<8x128xbf16>
    %c2_86 = arith.constant 2 : index
    %c0_87 = arith.constant 0 : index
    %c0_88 = arith.constant 0 : index
    %325 = vector.load %arg2[%c2_86, %c0_87, %c0_88] : memref<10x128x128xbf16, #tpu.memory_space<vmem>>, vector<1x128x128xbf16>
    %326 = vector.shape_cast %325 : vector<1x128x128xbf16> to vector<128x128xbf16>
    %cst_89 = arith.constant dense<0.000000e+00> : vector<8x128xf32>
    %327 = tpu.matmul %324, %326, %cst_89 {dimension_numbers = #tpu.dot_dimension_numbers<[1], [0], [0], [1], [0, 0, 1, 1], [], []>} : vector<8x128xbf16>, vector<128x128xbf16>, vector<8x128xf32> -> vector<8x128xf32>
    %cst_90 = arith.constant dense<0.000000e+00> : vector<128xf32>
    %328 = vector.multi_reduction <add>, %327, %cst_90 [0] : vector<8x128xf32> to vector<128xf32>
    %329 = vector.shape_cast %328 : vector<128xf32> to vector<1x128xf32>
    %330 = arith.mulf %327, %327 : vector<8x128xf32>
    %cst_91 = arith.constant dense<0.000000e+00> : vector<128xf32>
    %331 = vector.multi_reduction <add>, %330, %cst_91 [0] : vector<8x128xf32> to vector<128xf32>
    %332 = vector.shape_cast %331 : vector<128xf32> to vector<1x128xf32>
    %cst_92 = arith.constant 1.250000e-01 : f32
    %333 = vector.broadcast %cst_92 : f32 to vector<1x128xf32>
    %334 = arith.mulf %329, %333 : vector<1x128xf32>
    %cst_93 = arith.constant 1.250000e-01 : f32
    %335 = vector.broadcast %cst_93 : f32 to vector<1x128xf32>
    %336 = arith.mulf %332, %335 : vector<1x128xf32>
    %337 = arith.mulf %334, %334 : vector<1x128xf32>
    %338 = arith.subf %336, %337 : vector<1x128xf32>
    %cst_94 = arith.constant 0.000000e+00 : f32
    %339 = vector.broadcast %cst_94 : f32 to vector<1x128xf32>
    %340 = arith.maximumf %338, %339 : vector<1x128xf32>
    %cst_95 = arith.constant 9.99999996E-13 : f32
    %341 = vector.broadcast %cst_95 : f32 to vector<1x128xf32>
    %342 = arith.addf %340, %341 : vector<1x128xf32>
    %343 = math.rsqrt %342 : vector<1x128xf32>
    %344 = vector.broadcast %334 : vector<1x128xf32> to vector<8x128xf32>
    %345 = arith.subf %327, %344 : vector<8x128xf32>
    %346 = vector.broadcast %343 : vector<1x128xf32> to vector<8x128xf32>
    %347 = arith.mulf %345, %346 : vector<8x128xf32>
    %cst_96 = arith.constant 0.000000e+00 : f32
    %348 = vector.broadcast %cst_96 : f32 to vector<8x128xf32>
    %349 = arith.maximumf %347, %348 : vector<8x128xf32>
    %350 = vector.extract_strided_slice %264 {offsets = [3, 0], sizes = [1, 128], strides = [1, 1]} : vector<8x128xf32> to vector<1x128xf32>
    %351 = vector.broadcast %350 : vector<1x128xf32> to vector<8x128xf32>
    %352 = arith.mulf %349, %351 : vector<8x128xf32>
    %cst_97 = arith.constant dense<0.000000e+00> : vector<8xf32>
    %353 = vector.multi_reduction <add>, %352, %cst_97 [1] : vector<8x128xf32> to vector<8xf32>
    %354 = vector.shape_cast %353 : vector<8xf32> to vector<8x1xf32>
    %355 = vector.extract_strided_slice %264 {offsets = [4, 0], sizes = [1, 128], strides = [1, 1]} : vector<8x128xf32> to vector<1x128xf32>
    %356 = vector.broadcast %355 : vector<1x128xf32> to vector<8x128xf32>
    %357 = arith.mulf %349, %356 : vector<8x128xf32>
    %cst_98 = arith.constant dense<0.000000e+00> : vector<8xf32>
    %358 = vector.multi_reduction <add>, %357, %cst_98 [1] : vector<8x128xf32> to vector<8xf32>
    %359 = vector.shape_cast %358 : vector<8xf32> to vector<8x1xf32>
    %360 = vector.extract_strided_slice %264 {offsets = [5, 0], sizes = [1, 1], strides = [1, 1]} : vector<8x128xf32> to vector<1x1xf32>
    %361 = vector.broadcast %360 : vector<1x1xf32> to vector<8x1xf32>
    %362 = arith.addf %354, %361 : vector<8x1xf32>
    %363 = vector.extract_strided_slice %264 {offsets = [6, 0], sizes = [1, 1], strides = [1, 1]} : vector<8x128xf32> to vector<1x1xf32>
    %364 = vector.broadcast %363 : vector<1x1xf32> to vector<8x1xf32>
    %365 = arith.mulf %362, %364 : vector<8x1xf32>
    %366 = vector.extract_strided_slice %264 {offsets = [5, 1], sizes = [1, 1], strides = [1, 1]} : vector<8x128xf32> to vector<1x1xf32>
    %367 = vector.broadcast %366 : vector<1x1xf32> to vector<8x1xf32>
    %368 = arith.addf %359, %367 : vector<8x1xf32>
    %369 = vector.extract_strided_slice %264 {offsets = [6, 1], sizes = [1, 1], strides = [1, 1]} : vector<8x128xf32> to vector<1x1xf32>
    %370 = vector.broadcast %369 : vector<1x1xf32> to vector<8x1xf32>
    %371 = arith.mulf %368, %370 : vector<8x1xf32>
    %cst_99 = arith.constant 2.000000e+00 : f32
    %372 = vector.broadcast %cst_99 : f32 to vector<8x1xf32>
    %373 = arith.addf %371, %372 : vector<8x1xf32>
    %cst_100 = arith.constant 0.000000e+00 : f32
    %374 = vector.broadcast %cst_100 : f32 to vector<8x1xf32>
    %375 = arith.subf %374, %373 : vector<8x1xf32>
    %cst_101 = arith.constant 0.000000e+00 : f32
    %376 = vector.broadcast %cst_101 : f32 to vector<8x1xf32>
    %377 = arith.maximumf %375, %376 : vector<8x1xf32>
    %378 = math.absf %373 : vector<8x1xf32>
    %cst_102 = arith.constant 0.000000e+00 : f32
    %379 = vector.broadcast %cst_102 : f32 to vector<8x1xf32>
    %380 = arith.subf %379, %378 : vector<8x1xf32>
    %381 = math.exp %380 : vector<8x1xf32>
    %cst_103 = arith.constant 1.000000e+00 : f32
    %382 = vector.broadcast %cst_103 : f32 to vector<8x1xf32>
    %383 = arith.addf %382, %381 : vector<8x1xf32>
    %384 = math.log %383 : vector<8x1xf32>
    %385 = arith.addf %377, %384 : vector<8x1xf32>
    %cst_104 = arith.constant 0.000000e+00 : f32
    %386 = vector.broadcast %cst_104 : f32 to vector<8x1xf32>
    %387 = arith.subf %386, %385 : vector<8x1xf32>
    %388 = math.exp %387 : vector<8x1xf32>
    %389 = arith.mulf %388, %296 : vector<8x1xf32>
    %390 = arith.addf %389, %365 : vector<8x1xf32>
    %391 = tpu.concatenate %390, %297 in 1 : vector<8x1xf32>, vector<8x1xf32> -> vector<8x2xf32>
    %392 = arith.addf %262, %387 : vector<8x1xf32>
    %c3 = arith.constant 3 : index
    %c0_105 = arith.constant 0 : index
    %c0_106 = arith.constant 0 : index
    %393 = vector.load %arg1[%c3, %c0_105, %c0_106] : memref<10x8x128xf32, #tpu.memory_space<vmem>>, vector<1x8x128xf32>
    %394 = vector.shape_cast %393 : vector<1x8x128xf32> to vector<8x128xf32>
    %cst_107 = arith.constant dense<0.000000e+00> : vector<2xf32>
    %395 = vector.multi_reduction <add>, %391, %cst_107 [0] : vector<8x2xf32> to vector<2xf32>
    %396 = vector.shape_cast %395 : vector<2xf32> to vector<1x2xf32>
    %cst_108 = arith.constant 1.250000e-01 : f32
    %397 = vector.broadcast %cst_108 : f32 to vector<1x2xf32>
    %398 = arith.mulf %396, %397 : vector<1x2xf32>
    %399 = vector.broadcast %398 : vector<1x2xf32> to vector<8x2xf32>
    %400 = arith.subf %391, %399 : vector<8x2xf32>
    %401 = arith.mulf %400, %400 : vector<8x2xf32>
    %cst_109 = arith.constant dense<0.000000e+00> : vector<2xf32>
    %402 = vector.multi_reduction <add>, %401, %cst_109 [0] : vector<8x2xf32> to vector<2xf32>
    %403 = vector.shape_cast %402 : vector<2xf32> to vector<1x2xf32>
    %cst_110 = arith.constant 1.250000e-01 : f32
    %404 = vector.broadcast %cst_110 : f32 to vector<1x2xf32>
    %405 = arith.mulf %403, %404 : vector<1x2xf32>
    %406 = math.sqrt %405 : vector<1x2xf32>
    %cst_111 = arith.constant 9.99999997E-7 : f32
    %407 = vector.broadcast %cst_111 : f32 to vector<1x2xf32>
    %408 = arith.addf %406, %407 : vector<1x2xf32>
    %409 = vector.broadcast %408 : vector<1x2xf32> to vector<8x2xf32>
    %410 = arith.divf %400, %409 : vector<8x2xf32>
    %411 = math.log %408 : vector<1x2xf32>
    %cst_112 = arith.constant 0.000000e+00 : f32
    %412 = vector.broadcast %cst_112 : f32 to vector<1x2xf32>
    %413 = arith.subf %412, %411 : vector<1x2xf32>
    %414 = arith.addf %284, %413 : vector<1x2xf32>
    %415 = vector.extract_strided_slice %410 {offsets = [0, 0], sizes = [8, 1], strides = [1, 1]} : vector<8x2xf32> to vector<8x1xf32>
    %416 = vector.extract_strided_slice %394 {offsets = [1, 0], sizes = [1, 2], strides = [1, 1]} : vector<8x128xf32> to vector<1x2xf32>
    %417 = vector.broadcast %415 : vector<8x1xf32> to vector<8x2xf32>
    %418 = vector.broadcast %416 : vector<1x2xf32> to vector<8x2xf32>
    %419 = arith.mulf %417, %418 : vector<8x2xf32>
    %420 = vector.extract_strided_slice %410 {offsets = [0, 1], sizes = [8, 1], strides = [1, 1]} : vector<8x2xf32> to vector<8x1xf32>
    %421 = vector.extract_strided_slice %394 {offsets = [2, 0], sizes = [1, 2], strides = [1, 1]} : vector<8x128xf32> to vector<1x2xf32>
    %422 = vector.broadcast %420 : vector<8x1xf32> to vector<8x2xf32>
    %423 = vector.broadcast %421 : vector<1x2xf32> to vector<8x2xf32>
    %424 = arith.mulf %422, %423 : vector<8x2xf32>
    %425 = arith.addf %419, %424 : vector<8x2xf32>
    %426 = vector.extract_strided_slice %425 {offsets = [0, 0], sizes = [8, 1], strides = [1, 1]} : vector<8x2xf32> to vector<8x1xf32>
    %427 = vector.extract_strided_slice %425 {offsets = [0, 1], sizes = [8, 1], strides = [1, 1]} : vector<8x2xf32> to vector<8x1xf32>
    %428 = vector.extract_strided_slice %394 {offsets = [0, 0], sizes = [1, 128], strides = [1, 1]} : vector<8x128xf32> to vector<1x128xf32>
    %429 = vector.broadcast %427 : vector<8x1xf32> to vector<8x128xf32>
    %430 = vector.broadcast %428 : vector<1x128xf32> to vector<8x128xf32>
    %431 = arith.mulf %429, %430 : vector<8x128xf32>
    %cst_113 = arith.constant dense<0.000000e+00> : vector<128xf32>
    %432 = vector.multi_reduction <add>, %431, %cst_113 [0] : vector<8x128xf32> to vector<128xf32>
    %433 = vector.shape_cast %432 : vector<128xf32> to vector<1x128xf32>
    %434 = arith.mulf %431, %431 : vector<8x128xf32>
    %cst_114 = arith.constant dense<0.000000e+00> : vector<128xf32>
    %435 = vector.multi_reduction <add>, %434, %cst_114 [0] : vector<8x128xf32> to vector<128xf32>
    %436 = vector.shape_cast %435 : vector<128xf32> to vector<1x128xf32>
    %cst_115 = arith.constant 1.250000e-01 : f32
    %437 = vector.broadcast %cst_115 : f32 to vector<1x128xf32>
    %438 = arith.mulf %433, %437 : vector<1x128xf32>
    %cst_116 = arith.constant 1.250000e-01 : f32
    %439 = vector.broadcast %cst_116 : f32 to vector<1x128xf32>
    %440 = arith.mulf %436, %439 : vector<1x128xf32>
    %441 = arith.mulf %438, %438 : vector<1x128xf32>
    %442 = arith.subf %440, %441 : vector<1x128xf32>
    %cst_117 = arith.constant 0.000000e+00 : f32
    %443 = vector.broadcast %cst_117 : f32 to vector<1x128xf32>
    %444 = arith.maximumf %442, %443 : vector<1x128xf32>
    %cst_118 = arith.constant 9.99999996E-13 : f32
    %445 = vector.broadcast %cst_118 : f32 to vector<1x128xf32>
    %446 = arith.addf %444, %445 : vector<1x128xf32>
    %447 = math.rsqrt %446 : vector<1x128xf32>
    %448 = vector.broadcast %438 : vector<1x128xf32> to vector<8x128xf32>
    %449 = arith.subf %431, %448 : vector<8x128xf32>
    %450 = vector.broadcast %447 : vector<1x128xf32> to vector<8x128xf32>
    %451 = arith.mulf %449, %450 : vector<8x128xf32>
    %cst_119 = arith.constant 0.000000e+00 : f32
    %452 = vector.broadcast %cst_119 : f32 to vector<8x128xf32>
    %453 = arith.maximumf %451, %452 : vector<8x128xf32>
    %454 = arith.truncf %453 : vector<8x128xf32> to vector<8x128xbf16>
    %c3_120 = arith.constant 3 : index
    %c0_121 = arith.constant 0 : index
    %c0_122 = arith.constant 0 : index
    %455 = vector.load %arg2[%c3_120, %c0_121, %c0_122] : memref<10x128x128xbf16, #tpu.memory_space<vmem>>, vector<1x128x128xbf16>
    %456 = vector.shape_cast %455 : vector<1x128x128xbf16> to vector<128x128xbf16>
    %cst_123 = arith.constant dense<0.000000e+00> : vector<8x128xf32>
    %457 = tpu.matmul %454, %456, %cst_123 {dimension_numbers = #tpu.dot_dimension_numbers<[1], [0], [0], [1], [0, 0, 1, 1], [], []>} : vector<8x128xbf16>, vector<128x128xbf16>, vector<8x128xf32> -> vector<8x128xf32>
    %cst_124 = arith.constant dense<0.000000e+00> : vector<128xf32>
    %458 = vector.multi_reduction <add>, %457, %cst_124 [0] : vector<8x128xf32> to vector<128xf32>
    %459 = vector.shape_cast %458 : vector<128xf32> to vector<1x128xf32>
    %460 = arith.mulf %457, %457 : vector<8x128xf32>
    %cst_125 = arith.constant dense<0.000000e+00> : vector<128xf32>
    %461 = vector.multi_reduction <add>, %460, %cst_125 [0] : vector<8x128xf32> to vector<128xf32>
    %462 = vector.shape_cast %461 : vector<128xf32> to vector<1x128xf32>
    %cst_126 = arith.constant 1.250000e-01 : f32
    %463 = vector.broadcast %cst_126 : f32 to vector<1x128xf32>
    %464 = arith.mulf %459, %463 : vector<1x128xf32>
    %cst_127 = arith.constant 1.250000e-01 : f32
    %465 = vector.broadcast %cst_127 : f32 to vector<1x128xf32>
    %466 = arith.mulf %462, %465 : vector<1x128xf32>
    %467 = arith.mulf %464, %464 : vector<1x128xf32>
    %468 = arith.subf %466, %467 : vector<1x128xf32>
    %cst_128 = arith.constant 0.000000e+00 : f32
    %469 = vector.broadcast %cst_128 : f32 to vector<1x128xf32>
    %470 = arith.maximumf %468, %469 : vector<1x128xf32>
    %cst_129 = arith.constant 9.99999996E-13 : f32
    %471 = vector.broadcast %cst_129 : f32 to vector<1x128xf32>
    %472 = arith.addf %470, %471 : vector<1x128xf32>
    %473 = math.rsqrt %472 : vector<1x128xf32>
    %474 = vector.broadcast %464 : vector<1x128xf32> to vector<8x128xf32>
    %475 = arith.subf %457, %474 : vector<8x128xf32>
    %476 = vector.broadcast %473 : vector<1x128xf32> to vector<8x128xf32>
    %477 = arith.mulf %475, %476 : vector<8x128xf32>
    %cst_130 = arith.constant 0.000000e+00 : f32
    %478 = vector.broadcast %cst_130 : f32 to vector<8x128xf32>
    %479 = arith.maximumf %477, %478 : vector<8x128xf32>
    %480 = vector.extract_strided_slice %394 {offsets = [3, 0], sizes = [1, 128], strides = [1, 1]} : vector<8x128xf32> to vector<1x128xf32>
    %481 = vector.broadcast %480 : vector<1x128xf32> to vector<8x128xf32>
    %482 = arith.mulf %479, %481 : vector<8x128xf32>
    %cst_131 = arith.constant dense<0.000000e+00> : vector<8xf32>
    %483 = vector.multi_reduction <add>, %482, %cst_131 [1] : vector<8x128xf32> to vector<8xf32>
    %484 = vector.shape_cast %483 : vector<8xf32> to vector<8x1xf32>
    %485 = vector.extract_strided_slice %394 {offsets = [4, 0], sizes = [1, 128], strides = [1, 1]} : vector<8x128xf32> to vector<1x128xf32>
    %486 = vector.broadcast %485 : vector<1x128xf32> to vector<8x128xf32>
    %487 = arith.mulf %479, %486 : vector<8x128xf32>
    %cst_132 = arith.constant dense<0.000000e+00> : vector<8xf32>
    %488 = vector.multi_reduction <add>, %487, %cst_132 [1] : vector<8x128xf32> to vector<8xf32>
    %489 = vector.shape_cast %488 : vector<8xf32> to vector<8x1xf32>
    %490 = vector.extract_strided_slice %394 {offsets = [5, 0], sizes = [1, 1], strides = [1, 1]} : vector<8x128xf32> to vector<1x1xf32>
    %491 = vector.broadcast %490 : vector<1x1xf32> to vector<8x1xf32>
    %492 = arith.addf %484, %491 : vector<8x1xf32>
    %493 = vector.extract_strided_slice %394 {offsets = [6, 0], sizes = [1, 1], strides = [1, 1]} : vector<8x128xf32> to vector<1x1xf32>
    %494 = vector.broadcast %493 : vector<1x1xf32> to vector<8x1xf32>
    %495 = arith.mulf %492, %494 : vector<8x1xf32>
    %496 = vector.extract_strided_slice %394 {offsets = [5, 1], sizes = [1, 1], strides = [1, 1]} : vector<8x128xf32> to vector<1x1xf32>
    %497 = vector.broadcast %496 : vector<1x1xf32> to vector<8x1xf32>
    %498 = arith.addf %489, %497 : vector<8x1xf32>
    %499 = vector.extract_strided_slice %394 {offsets = [6, 1], sizes = [1, 1], strides = [1, 1]} : vector<8x128xf32> to vector<1x1xf32>
    %500 = vector.broadcast %499 : vector<1x1xf32> to vector<8x1xf32>
    %501 = arith.mulf %498, %500 : vector<8x1xf32>
    %cst_133 = arith.constant 2.000000e+00 : f32
    %502 = vector.broadcast %cst_133 : f32 to vector<8x1xf32>
    %503 = arith.addf %501, %502 : vector<8x1xf32>
    %cst_134 = arith.constant 0.000000e+00 : f32
    %504 = vector.broadcast %cst_134 : f32 to vector<8x1xf32>
    %505 = arith.subf %504, %503 : vector<8x1xf32>
    %cst_135 = arith.constant 0.000000e+00 : f32
    %506 = vector.broadcast %cst_135 : f32 to vector<8x1xf32>
    %507 = arith.maximumf %505, %506 : vector<8x1xf32>
    %508 = math.absf %503 : vector<8x1xf32>
    %cst_136 = arith.constant 0.000000e+00 : f32
    %509 = vector.broadcast %cst_136 : f32 to vector<8x1xf32>
    %510 = arith.subf %509, %508 : vector<8x1xf32>
    %511 = math.exp %510 : vector<8x1xf32>
    %cst_137 = arith.constant 1.000000e+00 : f32
    %512 = vector.broadcast %cst_137 : f32 to vector<8x1xf32>
    %513 = arith.addf %512, %511 : vector<8x1xf32>
    %514 = math.log %513 : vector<8x1xf32>
    %515 = arith.addf %507, %514 : vector<8x1xf32>
    %cst_138 = arith.constant 0.000000e+00 : f32
    %516 = vector.broadcast %cst_138 : f32 to vector<8x1xf32>
    %517 = arith.subf %516, %515 : vector<8x1xf32>
    %518 = math.exp %517 : vector<8x1xf32>
    %519 = arith.mulf %518, %426 : vector<8x1xf32>
    %520 = arith.addf %519, %495 : vector<8x1xf32>
    %521 = tpu.concatenate %520, %427 in 1 : vector<8x1xf32>, vector<8x1xf32> -> vector<8x2xf32>
    %522 = arith.addf %392, %517 : vector<8x1xf32>
    %c4 = arith.constant 4 : index
    %c0_139 = arith.constant 0 : index
    %c0_140 = arith.constant 0 : index
    %523 = vector.load %arg1[%c4, %c0_139, %c0_140] : memref<10x8x128xf32, #tpu.memory_space<vmem>>, vector<1x8x128xf32>
    %524 = vector.shape_cast %523 : vector<1x8x128xf32> to vector<8x128xf32>
    %cst_141 = arith.constant dense<0.000000e+00> : vector<2xf32>
    %525 = vector.multi_reduction <add>, %521, %cst_141 [0] : vector<8x2xf32> to vector<2xf32>
    %526 = vector.shape_cast %525 : vector<2xf32> to vector<1x2xf32>
    %cst_142 = arith.constant 1.250000e-01 : f32
    %527 = vector.broadcast %cst_142 : f32 to vector<1x2xf32>
    %528 = arith.mulf %526, %527 : vector<1x2xf32>
    %529 = vector.broadcast %528 : vector<1x2xf32> to vector<8x2xf32>
    %530 = arith.subf %521, %529 : vector<8x2xf32>
    %531 = arith.mulf %530, %530 : vector<8x2xf32>
    %cst_143 = arith.constant dense<0.000000e+00> : vector<2xf32>
    %532 = vector.multi_reduction <add>, %531, %cst_143 [0] : vector<8x2xf32> to vector<2xf32>
    %533 = vector.shape_cast %532 : vector<2xf32> to vector<1x2xf32>
    %cst_144 = arith.constant 1.250000e-01 : f32
    %534 = vector.broadcast %cst_144 : f32 to vector<1x2xf32>
    %535 = arith.mulf %533, %534 : vector<1x2xf32>
    %536 = math.sqrt %535 : vector<1x2xf32>
    %cst_145 = arith.constant 9.99999997E-7 : f32
    %537 = vector.broadcast %cst_145 : f32 to vector<1x2xf32>
    %538 = arith.addf %536, %537 : vector<1x2xf32>
    %539 = vector.broadcast %538 : vector<1x2xf32> to vector<8x2xf32>
    %540 = arith.divf %530, %539 : vector<8x2xf32>
    %541 = math.log %538 : vector<1x2xf32>
    %cst_146 = arith.constant 0.000000e+00 : f32
    %542 = vector.broadcast %cst_146 : f32 to vector<1x2xf32>
    %543 = arith.subf %542, %541 : vector<1x2xf32>
    %544 = arith.addf %414, %543 : vector<1x2xf32>
    %545 = vector.extract_strided_slice %540 {offsets = [0, 0], sizes = [8, 1], strides = [1, 1]} : vector<8x2xf32> to vector<8x1xf32>
    %546 = vector.extract_strided_slice %524 {offsets = [1, 0], sizes = [1, 2], strides = [1, 1]} : vector<8x128xf32> to vector<1x2xf32>
    %547 = vector.broadcast %545 : vector<8x1xf32> to vector<8x2xf32>
    %548 = vector.broadcast %546 : vector<1x2xf32> to vector<8x2xf32>
    %549 = arith.mulf %547, %548 : vector<8x2xf32>
    %550 = vector.extract_strided_slice %540 {offsets = [0, 1], sizes = [8, 1], strides = [1, 1]} : vector<8x2xf32> to vector<8x1xf32>
    %551 = vector.extract_strided_slice %524 {offsets = [2, 0], sizes = [1, 2], strides = [1, 1]} : vector<8x128xf32> to vector<1x2xf32>
    %552 = vector.broadcast %550 : vector<8x1xf32> to vector<8x2xf32>
    %553 = vector.broadcast %551 : vector<1x2xf32> to vector<8x2xf32>
    %554 = arith.mulf %552, %553 : vector<8x2xf32>
    %555 = arith.addf %549, %554 : vector<8x2xf32>
    %556 = vector.extract_strided_slice %555 {offsets = [0, 0], sizes = [8, 1], strides = [1, 1]} : vector<8x2xf32> to vector<8x1xf32>
    %557 = vector.extract_strided_slice %555 {offsets = [0, 1], sizes = [8, 1], strides = [1, 1]} : vector<8x2xf32> to vector<8x1xf32>
    %558 = vector.extract_strided_slice %524 {offsets = [0, 0], sizes = [1, 128], strides = [1, 1]} : vector<8x128xf32> to vector<1x128xf32>
    %559 = vector.broadcast %557 : vector<8x1xf32> to vector<8x128xf32>
    %560 = vector.broadcast %558 : vector<1x128xf32> to vector<8x128xf32>
    %561 = arith.mulf %559, %560 : vector<8x128xf32>
    %cst_147 = arith.constant dense<0.000000e+00> : vector<128xf32>
    %562 = vector.multi_reduction <add>, %561, %cst_147 [0] : vector<8x128xf32> to vector<128xf32>
    %563 = vector.shape_cast %562 : vector<128xf32> to vector<1x128xf32>
    %564 = arith.mulf %561, %561 : vector<8x128xf32>
    %cst_148 = arith.constant dense<0.000000e+00> : vector<128xf32>
    %565 = vector.multi_reduction <add>, %564, %cst_148 [0] : vector<8x128xf32> to vector<128xf32>
    %566 = vector.shape_cast %565 : vector<128xf32> to vector<1x128xf32>
    %cst_149 = arith.constant 1.250000e-01 : f32
    %567 = vector.broadcast %cst_149 : f32 to vector<1x128xf32>
    %568 = arith.mulf %563, %567 : vector<1x128xf32>
    %cst_150 = arith.constant 1.250000e-01 : f32
    %569 = vector.broadcast %cst_150 : f32 to vector<1x128xf32>
    %570 = arith.mulf %566, %569 : vector<1x128xf32>
    %571 = arith.mulf %568, %568 : vector<1x128xf32>
    %572 = arith.subf %570, %571 : vector<1x128xf32>
    %cst_151 = arith.constant 0.000000e+00 : f32
    %573 = vector.broadcast %cst_151 : f32 to vector<1x128xf32>
    %574 = arith.maximumf %572, %573 : vector<1x128xf32>
    %cst_152 = arith.constant 9.99999996E-13 : f32
    %575 = vector.broadcast %cst_152 : f32 to vector<1x128xf32>
    %576 = arith.addf %574, %575 : vector<1x128xf32>
    %577 = math.rsqrt %576 : vector<1x128xf32>
    %578 = vector.broadcast %568 : vector<1x128xf32> to vector<8x128xf32>
    %579 = arith.subf %561, %578 : vector<8x128xf32>
    %580 = vector.broadcast %577 : vector<1x128xf32> to vector<8x128xf32>
    %581 = arith.mulf %579, %580 : vector<8x128xf32>
    %cst_153 = arith.constant 0.000000e+00 : f32
    %582 = vector.broadcast %cst_153 : f32 to vector<8x128xf32>
    %583 = arith.maximumf %581, %582 : vector<8x128xf32>
    %584 = arith.truncf %583 : vector<8x128xf32> to vector<8x128xbf16>
    %c4_154 = arith.constant 4 : index
    %c0_155 = arith.constant 0 : index
    %c0_156 = arith.constant 0 : index
    %585 = vector.load %arg2[%c4_154, %c0_155, %c0_156] : memref<10x128x128xbf16, #tpu.memory_space<vmem>>, vector<1x128x128xbf16>
    %586 = vector.shape_cast %585 : vector<1x128x128xbf16> to vector<128x128xbf16>
    %cst_157 = arith.constant dense<0.000000e+00> : vector<8x128xf32>
    %587 = tpu.matmul %584, %586, %cst_157 {dimension_numbers = #tpu.dot_dimension_numbers<[1], [0], [0], [1], [0, 0, 1, 1], [], []>} : vector<8x128xbf16>, vector<128x128xbf16>, vector<8x128xf32> -> vector<8x128xf32>
    %cst_158 = arith.constant dense<0.000000e+00> : vector<128xf32>
    %588 = vector.multi_reduction <add>, %587, %cst_158 [0] : vector<8x128xf32> to vector<128xf32>
    %589 = vector.shape_cast %588 : vector<128xf32> to vector<1x128xf32>
    %590 = arith.mulf %587, %587 : vector<8x128xf32>
    %cst_159 = arith.constant dense<0.000000e+00> : vector<128xf32>
    %591 = vector.multi_reduction <add>, %590, %cst_159 [0] : vector<8x128xf32> to vector<128xf32>
    %592 = vector.shape_cast %591 : vector<128xf32> to vector<1x128xf32>
    %cst_160 = arith.constant 1.250000e-01 : f32
    %593 = vector.broadcast %cst_160 : f32 to vector<1x128xf32>
    %594 = arith.mulf %589, %593 : vector<1x128xf32>
    %cst_161 = arith.constant 1.250000e-01 : f32
    %595 = vector.broadcast %cst_161 : f32 to vector<1x128xf32>
    %596 = arith.mulf %592, %595 : vector<1x128xf32>
    %597 = arith.mulf %594, %594 : vector<1x128xf32>
    %598 = arith.subf %596, %597 : vector<1x128xf32>
    %cst_162 = arith.constant 0.000000e+00 : f32
    %599 = vector.broadcast %cst_162 : f32 to vector<1x128xf32>
    %600 = arith.maximumf %598, %599 : vector<1x128xf32>
    %cst_163 = arith.constant 9.99999996E-13 : f32
    %601 = vector.broadcast %cst_163 : f32 to vector<1x128xf32>
    %602 = arith.addf %600, %601 : vector<1x128xf32>
    %603 = math.rsqrt %602 : vector<1x128xf32>
    %604 = vector.broadcast %594 : vector<1x128xf32> to vector<8x128xf32>
    %605 = arith.subf %587, %604 : vector<8x128xf32>
    %606 = vector.broadcast %603 : vector<1x128xf32> to vector<8x128xf32>
    %607 = arith.mulf %605, %606 : vector<8x128xf32>
    %cst_164 = arith.constant 0.000000e+00 : f32
    %608 = vector.broadcast %cst_164 : f32 to vector<8x128xf32>
    %609 = arith.maximumf %607, %608 : vector<8x128xf32>
    %610 = vector.extract_strided_slice %524 {offsets = [3, 0], sizes = [1, 128], strides = [1, 1]} : vector<8x128xf32> to vector<1x128xf32>
    %611 = vector.broadcast %610 : vector<1x128xf32> to vector<8x128xf32>
    %612 = arith.mulf %609, %611 : vector<8x128xf32>
    %cst_165 = arith.constant dense<0.000000e+00> : vector<8xf32>
    %613 = vector.multi_reduction <add>, %612, %cst_165 [1] : vector<8x128xf32> to vector<8xf32>
    %614 = vector.shape_cast %613 : vector<8xf32> to vector<8x1xf32>
    %615 = vector.extract_strided_slice %524 {offsets = [4, 0], sizes = [1, 128], strides = [1, 1]} : vector<8x128xf32> to vector<1x128xf32>
    %616 = vector.broadcast %615 : vector<1x128xf32> to vector<8x128xf32>
    %617 = arith.mulf %609, %616 : vector<8x128xf32>
    %cst_166 = arith.constant dense<0.000000e+00> : vector<8xf32>
    %618 = vector.multi_reduction <add>, %617, %cst_166 [1] : vector<8x128xf32> to vector<8xf32>
    %619 = vector.shape_cast %618 : vector<8xf32> to vector<8x1xf32>
    %620 = vector.extract_strided_slice %524 {offsets = [5, 0], sizes = [1, 1], strides = [1, 1]} : vector<8x128xf32> to vector<1x1xf32>
    %621 = vector.broadcast %620 : vector<1x1xf32> to vector<8x1xf32>
    %622 = arith.addf %614, %621 : vector<8x1xf32>
    %623 = vector.extract_strided_slice %524 {offsets = [6, 0], sizes = [1, 1], strides = [1, 1]} : vector<8x128xf32> to vector<1x1xf32>
    %624 = vector.broadcast %623 : vector<1x1xf32> to vector<8x1xf32>
    %625 = arith.mulf %622, %624 : vector<8x1xf32>
    %626 = vector.extract_strided_slice %524 {offsets = [5, 1], sizes = [1, 1], strides = [1, 1]} : vector<8x128xf32> to vector<1x1xf32>
    %627 = vector.broadcast %626 : vector<1x1xf32> to vector<8x1xf32>
    %628 = arith.addf %619, %627 : vector<8x1xf32>
    %629 = vector.extract_strided_slice %524 {offsets = [6, 1], sizes = [1, 1], strides = [1, 1]} : vector<8x128xf32> to vector<1x1xf32>
    %630 = vector.broadcast %629 : vector<1x1xf32> to vector<8x1xf32>
    %631 = arith.mulf %628, %630 : vector<8x1xf32>
    %cst_167 = arith.constant 2.000000e+00 : f32
    %632 = vector.broadcast %cst_167 : f32 to vector<8x1xf32>
    %633 = arith.addf %631, %632 : vector<8x1xf32>
    %cst_168 = arith.constant 0.000000e+00 : f32
    %634 = vector.broadcast %cst_168 : f32 to vector<8x1xf32>
    %635 = arith.subf %634, %633 : vector<8x1xf32>
    %cst_169 = arith.constant 0.000000e+00 : f32
    %636 = vector.broadcast %cst_169 : f32 to vector<8x1xf32>
    %637 = arith.maximumf %635, %636 : vector<8x1xf32>
    %638 = math.absf %633 : vector<8x1xf32>
    %cst_170 = arith.constant 0.000000e+00 : f32
    %639 = vector.broadcast %cst_170 : f32 to vector<8x1xf32>
    %640 = arith.subf %639, %638 : vector<8x1xf32>
    %641 = math.exp %640 : vector<8x1xf32>
    %cst_171 = arith.constant 1.000000e+00 : f32
    %642 = vector.broadcast %cst_171 : f32 to vector<8x1xf32>
    %643 = arith.addf %642, %641 : vector<8x1xf32>
    %644 = math.log %643 : vector<8x1xf32>
    %645 = arith.addf %637, %644 : vector<8x1xf32>
    %cst_172 = arith.constant 0.000000e+00 : f32
    %646 = vector.broadcast %cst_172 : f32 to vector<8x1xf32>
    %647 = arith.subf %646, %645 : vector<8x1xf32>
    %648 = math.exp %647 : vector<8x1xf32>
    %649 = arith.mulf %648, %556 : vector<8x1xf32>
    %650 = arith.addf %649, %625 : vector<8x1xf32>
    %651 = tpu.concatenate %650, %557 in 1 : vector<8x1xf32>, vector<8x1xf32> -> vector<8x2xf32>
    %652 = arith.addf %522, %647 : vector<8x1xf32>
    %c5 = arith.constant 5 : index
    %c0_173 = arith.constant 0 : index
    %c0_174 = arith.constant 0 : index
    %653 = vector.load %arg1[%c5, %c0_173, %c0_174] : memref<10x8x128xf32, #tpu.memory_space<vmem>>, vector<1x8x128xf32>
    %654 = vector.shape_cast %653 : vector<1x8x128xf32> to vector<8x128xf32>
    %cst_175 = arith.constant dense<0.000000e+00> : vector<2xf32>
    %655 = vector.multi_reduction <add>, %651, %cst_175 [0] : vector<8x2xf32> to vector<2xf32>
    %656 = vector.shape_cast %655 : vector<2xf32> to vector<1x2xf32>
    %cst_176 = arith.constant 1.250000e-01 : f32
    %657 = vector.broadcast %cst_176 : f32 to vector<1x2xf32>
    %658 = arith.mulf %656, %657 : vector<1x2xf32>
    %659 = vector.broadcast %658 : vector<1x2xf32> to vector<8x2xf32>
    %660 = arith.subf %651, %659 : vector<8x2xf32>
    %661 = arith.mulf %660, %660 : vector<8x2xf32>
    %cst_177 = arith.constant dense<0.000000e+00> : vector<2xf32>
    %662 = vector.multi_reduction <add>, %661, %cst_177 [0] : vector<8x2xf32> to vector<2xf32>
    %663 = vector.shape_cast %662 : vector<2xf32> to vector<1x2xf32>
    %cst_178 = arith.constant 1.250000e-01 : f32
    %664 = vector.broadcast %cst_178 : f32 to vector<1x2xf32>
    %665 = arith.mulf %663, %664 : vector<1x2xf32>
    %666 = math.sqrt %665 : vector<1x2xf32>
    %cst_179 = arith.constant 9.99999997E-7 : f32
    %667 = vector.broadcast %cst_179 : f32 to vector<1x2xf32>
    %668 = arith.addf %666, %667 : vector<1x2xf32>
    %669 = vector.broadcast %668 : vector<1x2xf32> to vector<8x2xf32>
    %670 = arith.divf %660, %669 : vector<8x2xf32>
    %671 = math.log %668 : vector<1x2xf32>
    %cst_180 = arith.constant 0.000000e+00 : f32
    %672 = vector.broadcast %cst_180 : f32 to vector<1x2xf32>
    %673 = arith.subf %672, %671 : vector<1x2xf32>
    %674 = arith.addf %544, %673 : vector<1x2xf32>
    %675 = vector.extract_strided_slice %670 {offsets = [0, 0], sizes = [8, 1], strides = [1, 1]} : vector<8x2xf32> to vector<8x1xf32>
    %676 = vector.extract_strided_slice %654 {offsets = [1, 0], sizes = [1, 2], strides = [1, 1]} : vector<8x128xf32> to vector<1x2xf32>
    %677 = vector.broadcast %675 : vector<8x1xf32> to vector<8x2xf32>
    %678 = vector.broadcast %676 : vector<1x2xf32> to vector<8x2xf32>
    %679 = arith.mulf %677, %678 : vector<8x2xf32>
    %680 = vector.extract_strided_slice %670 {offsets = [0, 1], sizes = [8, 1], strides = [1, 1]} : vector<8x2xf32> to vector<8x1xf32>
    %681 = vector.extract_strided_slice %654 {offsets = [2, 0], sizes = [1, 2], strides = [1, 1]} : vector<8x128xf32> to vector<1x2xf32>
    %682 = vector.broadcast %680 : vector<8x1xf32> to vector<8x2xf32>
    %683 = vector.broadcast %681 : vector<1x2xf32> to vector<8x2xf32>
    %684 = arith.mulf %682, %683 : vector<8x2xf32>
    %685 = arith.addf %679, %684 : vector<8x2xf32>
    %686 = vector.extract_strided_slice %685 {offsets = [0, 0], sizes = [8, 1], strides = [1, 1]} : vector<8x2xf32> to vector<8x1xf32>
    %687 = vector.extract_strided_slice %685 {offsets = [0, 1], sizes = [8, 1], strides = [1, 1]} : vector<8x2xf32> to vector<8x1xf32>
    %688 = vector.extract_strided_slice %654 {offsets = [0, 0], sizes = [1, 128], strides = [1, 1]} : vector<8x128xf32> to vector<1x128xf32>
    %689 = vector.broadcast %687 : vector<8x1xf32> to vector<8x128xf32>
    %690 = vector.broadcast %688 : vector<1x128xf32> to vector<8x128xf32>
    %691 = arith.mulf %689, %690 : vector<8x128xf32>
    %cst_181 = arith.constant dense<0.000000e+00> : vector<128xf32>
    %692 = vector.multi_reduction <add>, %691, %cst_181 [0] : vector<8x128xf32> to vector<128xf32>
    %693 = vector.shape_cast %692 : vector<128xf32> to vector<1x128xf32>
    %694 = arith.mulf %691, %691 : vector<8x128xf32>
    %cst_182 = arith.constant dense<0.000000e+00> : vector<128xf32>
    %695 = vector.multi_reduction <add>, %694, %cst_182 [0] : vector<8x128xf32> to vector<128xf32>
    %696 = vector.shape_cast %695 : vector<128xf32> to vector<1x128xf32>
    %cst_183 = arith.constant 1.250000e-01 : f32
    %697 = vector.broadcast %cst_183 : f32 to vector<1x128xf32>
    %698 = arith.mulf %693, %697 : vector<1x128xf32>
    %cst_184 = arith.constant 1.250000e-01 : f32
    %699 = vector.broadcast %cst_184 : f32 to vector<1x128xf32>
    %700 = arith.mulf %696, %699 : vector<1x128xf32>
    %701 = arith.mulf %698, %698 : vector<1x128xf32>
    %702 = arith.subf %700, %701 : vector<1x128xf32>
    %cst_185 = arith.constant 0.000000e+00 : f32
    %703 = vector.broadcast %cst_185 : f32 to vector<1x128xf32>
    %704 = arith.maximumf %702, %703 : vector<1x128xf32>
    %cst_186 = arith.constant 9.99999996E-13 : f32
    %705 = vector.broadcast %cst_186 : f32 to vector<1x128xf32>
    %706 = arith.addf %704, %705 : vector<1x128xf32>
    %707 = math.rsqrt %706 : vector<1x128xf32>
    %708 = vector.broadcast %698 : vector<1x128xf32> to vector<8x128xf32>
    %709 = arith.subf %691, %708 : vector<8x128xf32>
    %710 = vector.broadcast %707 : vector<1x128xf32> to vector<8x128xf32>
    %711 = arith.mulf %709, %710 : vector<8x128xf32>
    %cst_187 = arith.constant 0.000000e+00 : f32
    %712 = vector.broadcast %cst_187 : f32 to vector<8x128xf32>
    %713 = arith.maximumf %711, %712 : vector<8x128xf32>
    %714 = arith.truncf %713 : vector<8x128xf32> to vector<8x128xbf16>
    %c5_188 = arith.constant 5 : index
    %c0_189 = arith.constant 0 : index
    %c0_190 = arith.constant 0 : index
    %715 = vector.load %arg2[%c5_188, %c0_189, %c0_190] : memref<10x128x128xbf16, #tpu.memory_space<vmem>>, vector<1x128x128xbf16>
    %716 = vector.shape_cast %715 : vector<1x128x128xbf16> to vector<128x128xbf16>
    %cst_191 = arith.constant dense<0.000000e+00> : vector<8x128xf32>
    %717 = tpu.matmul %714, %716, %cst_191 {dimension_numbers = #tpu.dot_dimension_numbers<[1], [0], [0], [1], [0, 0, 1, 1], [], []>} : vector<8x128xbf16>, vector<128x128xbf16>, vector<8x128xf32> -> vector<8x128xf32>
    %cst_192 = arith.constant dense<0.000000e+00> : vector<128xf32>
    %718 = vector.multi_reduction <add>, %717, %cst_192 [0] : vector<8x128xf32> to vector<128xf32>
    %719 = vector.shape_cast %718 : vector<128xf32> to vector<1x128xf32>
    %720 = arith.mulf %717, %717 : vector<8x128xf32>
    %cst_193 = arith.constant dense<0.000000e+00> : vector<128xf32>
    %721 = vector.multi_reduction <add>, %720, %cst_193 [0] : vector<8x128xf32> to vector<128xf32>
    %722 = vector.shape_cast %721 : vector<128xf32> to vector<1x128xf32>
    %cst_194 = arith.constant 1.250000e-01 : f32
    %723 = vector.broadcast %cst_194 : f32 to vector<1x128xf32>
    %724 = arith.mulf %719, %723 : vector<1x128xf32>
    %cst_195 = arith.constant 1.250000e-01 : f32
    %725 = vector.broadcast %cst_195 : f32 to vector<1x128xf32>
    %726 = arith.mulf %722, %725 : vector<1x128xf32>
    %727 = arith.mulf %724, %724 : vector<1x128xf32>
    %728 = arith.subf %726, %727 : vector<1x128xf32>
    %cst_196 = arith.constant 0.000000e+00 : f32
    %729 = vector.broadcast %cst_196 : f32 to vector<1x128xf32>
    %730 = arith.maximumf %728, %729 : vector<1x128xf32>
    %cst_197 = arith.constant 9.99999996E-13 : f32
    %731 = vector.broadcast %cst_197 : f32 to vector<1x128xf32>
    %732 = arith.addf %730, %731 : vector<1x128xf32>
    %733 = math.rsqrt %732 : vector<1x128xf32>
    %734 = vector.broadcast %724 : vector<1x128xf32> to vector<8x128xf32>
    %735 = arith.subf %717, %734 : vector<8x128xf32>
    %736 = vector.broadcast %733 : vector<1x128xf32> to vector<8x128xf32>
    %737 = arith.mulf %735, %736 : vector<8x128xf32>
    %cst_198 = arith.constant 0.000000e+00 : f32
    %738 = vector.broadcast %cst_198 : f32 to vector<8x128xf32>
    %739 = arith.maximumf %737, %738 : vector<8x128xf32>
    %740 = vector.extract_strided_slice %654 {offsets = [3, 0], sizes = [1, 128], strides = [1, 1]} : vector<8x128xf32> to vector<1x128xf32>
    %741 = vector.broadcast %740 : vector<1x128xf32> to vector<8x128xf32>
    %742 = arith.mulf %739, %741 : vector<8x128xf32>
    %cst_199 = arith.constant dense<0.000000e+00> : vector<8xf32>
    %743 = vector.multi_reduction <add>, %742, %cst_199 [1] : vector<8x128xf32> to vector<8xf32>
    %744 = vector.shape_cast %743 : vector<8xf32> to vector<8x1xf32>
    %745 = vector.extract_strided_slice %654 {offsets = [4, 0], sizes = [1, 128], strides = [1, 1]} : vector<8x128xf32> to vector<1x128xf32>
    %746 = vector.broadcast %745 : vector<1x128xf32> to vector<8x128xf32>
    %747 = arith.mulf %739, %746 : vector<8x128xf32>
    %cst_200 = arith.constant dense<0.000000e+00> : vector<8xf32>
    %748 = vector.multi_reduction <add>, %747, %cst_200 [1] : vector<8x128xf32> to vector<8xf32>
    %749 = vector.shape_cast %748 : vector<8xf32> to vector<8x1xf32>
    %750 = vector.extract_strided_slice %654 {offsets = [5, 0], sizes = [1, 1], strides = [1, 1]} : vector<8x128xf32> to vector<1x1xf32>
    %751 = vector.broadcast %750 : vector<1x1xf32> to vector<8x1xf32>
    %752 = arith.addf %744, %751 : vector<8x1xf32>
    %753 = vector.extract_strided_slice %654 {offsets = [6, 0], sizes = [1, 1], strides = [1, 1]} : vector<8x128xf32> to vector<1x1xf32>
    %754 = vector.broadcast %753 : vector<1x1xf32> to vector<8x1xf32>
    %755 = arith.mulf %752, %754 : vector<8x1xf32>
    %756 = vector.extract_strided_slice %654 {offsets = [5, 1], sizes = [1, 1], strides = [1, 1]} : vector<8x128xf32> to vector<1x1xf32>
    %757 = vector.broadcast %756 : vector<1x1xf32> to vector<8x1xf32>
    %758 = arith.addf %749, %757 : vector<8x1xf32>
    %759 = vector.extract_strided_slice %654 {offsets = [6, 1], sizes = [1, 1], strides = [1, 1]} : vector<8x128xf32> to vector<1x1xf32>
    %760 = vector.broadcast %759 : vector<1x1xf32> to vector<8x1xf32>
    %761 = arith.mulf %758, %760 : vector<8x1xf32>
    %cst_201 = arith.constant 2.000000e+00 : f32
    %762 = vector.broadcast %cst_201 : f32 to vector<8x1xf32>
    %763 = arith.addf %761, %762 : vector<8x1xf32>
    %cst_202 = arith.constant 0.000000e+00 : f32
    %764 = vector.broadcast %cst_202 : f32 to vector<8x1xf32>
    %765 = arith.subf %764, %763 : vector<8x1xf32>
    %cst_203 = arith.constant 0.000000e+00 : f32
    %766 = vector.broadcast %cst_203 : f32 to vector<8x1xf32>
    %767 = arith.maximumf %765, %766 : vector<8x1xf32>
    %768 = math.absf %763 : vector<8x1xf32>
    %cst_204 = arith.constant 0.000000e+00 : f32
    %769 = vector.broadcast %cst_204 : f32 to vector<8x1xf32>
    %770 = arith.subf %769, %768 : vector<8x1xf32>
    %771 = math.exp %770 : vector<8x1xf32>
    %cst_205 = arith.constant 1.000000e+00 : f32
    %772 = vector.broadcast %cst_205 : f32 to vector<8x1xf32>
    %773 = arith.addf %772, %771 : vector<8x1xf32>
    %774 = math.log %773 : vector<8x1xf32>
    %775 = arith.addf %767, %774 : vector<8x1xf32>
    %cst_206 = arith.constant 0.000000e+00 : f32
    %776 = vector.broadcast %cst_206 : f32 to vector<8x1xf32>
    %777 = arith.subf %776, %775 : vector<8x1xf32>
    %778 = math.exp %777 : vector<8x1xf32>
    %779 = arith.mulf %778, %686 : vector<8x1xf32>
    %780 = arith.addf %779, %755 : vector<8x1xf32>
    %781 = tpu.concatenate %780, %687 in 1 : vector<8x1xf32>, vector<8x1xf32> -> vector<8x2xf32>
    %782 = arith.addf %652, %777 : vector<8x1xf32>
    %c6 = arith.constant 6 : index
    %c0_207 = arith.constant 0 : index
    %c0_208 = arith.constant 0 : index
    %783 = vector.load %arg1[%c6, %c0_207, %c0_208] : memref<10x8x128xf32, #tpu.memory_space<vmem>>, vector<1x8x128xf32>
    %784 = vector.shape_cast %783 : vector<1x8x128xf32> to vector<8x128xf32>
    %cst_209 = arith.constant dense<0.000000e+00> : vector<2xf32>
    %785 = vector.multi_reduction <add>, %781, %cst_209 [0] : vector<8x2xf32> to vector<2xf32>
    %786 = vector.shape_cast %785 : vector<2xf32> to vector<1x2xf32>
    %cst_210 = arith.constant 1.250000e-01 : f32
    %787 = vector.broadcast %cst_210 : f32 to vector<1x2xf32>
    %788 = arith.mulf %786, %787 : vector<1x2xf32>
    %789 = vector.broadcast %788 : vector<1x2xf32> to vector<8x2xf32>
    %790 = arith.subf %781, %789 : vector<8x2xf32>
    %791 = arith.mulf %790, %790 : vector<8x2xf32>
    %cst_211 = arith.constant dense<0.000000e+00> : vector<2xf32>
    %792 = vector.multi_reduction <add>, %791, %cst_211 [0] : vector<8x2xf32> to vector<2xf32>
    %793 = vector.shape_cast %792 : vector<2xf32> to vector<1x2xf32>
    %cst_212 = arith.constant 1.250000e-01 : f32
    %794 = vector.broadcast %cst_212 : f32 to vector<1x2xf32>
    %795 = arith.mulf %793, %794 : vector<1x2xf32>
    %796 = math.sqrt %795 : vector<1x2xf32>
    %cst_213 = arith.constant 9.99999997E-7 : f32
    %797 = vector.broadcast %cst_213 : f32 to vector<1x2xf32>
    %798 = arith.addf %796, %797 : vector<1x2xf32>
    %799 = vector.broadcast %798 : vector<1x2xf32> to vector<8x2xf32>
    %800 = arith.divf %790, %799 : vector<8x2xf32>
    %801 = math.log %798 : vector<1x2xf32>
    %cst_214 = arith.constant 0.000000e+00 : f32
    %802 = vector.broadcast %cst_214 : f32 to vector<1x2xf32>
    %803 = arith.subf %802, %801 : vector<1x2xf32>
    %804 = arith.addf %674, %803 : vector<1x2xf32>
    %805 = vector.extract_strided_slice %800 {offsets = [0, 0], sizes = [8, 1], strides = [1, 1]} : vector<8x2xf32> to vector<8x1xf32>
    %806 = vector.extract_strided_slice %784 {offsets = [1, 0], sizes = [1, 2], strides = [1, 1]} : vector<8x128xf32> to vector<1x2xf32>
    %807 = vector.broadcast %805 : vector<8x1xf32> to vector<8x2xf32>
    %808 = vector.broadcast %806 : vector<1x2xf32> to vector<8x2xf32>
    %809 = arith.mulf %807, %808 : vector<8x2xf32>
    %810 = vector.extract_strided_slice %800 {offsets = [0, 1], sizes = [8, 1], strides = [1, 1]} : vector<8x2xf32> to vector<8x1xf32>
    %811 = vector.extract_strided_slice %784 {offsets = [2, 0], sizes = [1, 2], strides = [1, 1]} : vector<8x128xf32> to vector<1x2xf32>
    %812 = vector.broadcast %810 : vector<8x1xf32> to vector<8x2xf32>
    %813 = vector.broadcast %811 : vector<1x2xf32> to vector<8x2xf32>
    %814 = arith.mulf %812, %813 : vector<8x2xf32>
    %815 = arith.addf %809, %814 : vector<8x2xf32>
    %816 = vector.extract_strided_slice %815 {offsets = [0, 0], sizes = [8, 1], strides = [1, 1]} : vector<8x2xf32> to vector<8x1xf32>
    %817 = vector.extract_strided_slice %815 {offsets = [0, 1], sizes = [8, 1], strides = [1, 1]} : vector<8x2xf32> to vector<8x1xf32>
    %818 = vector.extract_strided_slice %784 {offsets = [0, 0], sizes = [1, 128], strides = [1, 1]} : vector<8x128xf32> to vector<1x128xf32>
    %819 = vector.broadcast %817 : vector<8x1xf32> to vector<8x128xf32>
    %820 = vector.broadcast %818 : vector<1x128xf32> to vector<8x128xf32>
    %821 = arith.mulf %819, %820 : vector<8x128xf32>
    %cst_215 = arith.constant dense<0.000000e+00> : vector<128xf32>
    %822 = vector.multi_reduction <add>, %821, %cst_215 [0] : vector<8x128xf32> to vector<128xf32>
    %823 = vector.shape_cast %822 : vector<128xf32> to vector<1x128xf32>
    %824 = arith.mulf %821, %821 : vector<8x128xf32>
    %cst_216 = arith.constant dense<0.000000e+00> : vector<128xf32>
    %825 = vector.multi_reduction <add>, %824, %cst_216 [0] : vector<8x128xf32> to vector<128xf32>
    %826 = vector.shape_cast %825 : vector<128xf32> to vector<1x128xf32>
    %cst_217 = arith.constant 1.250000e-01 : f32
    %827 = vector.broadcast %cst_217 : f32 to vector<1x128xf32>
    %828 = arith.mulf %823, %827 : vector<1x128xf32>
    %cst_218 = arith.constant 1.250000e-01 : f32
    %829 = vector.broadcast %cst_218 : f32 to vector<1x128xf32>
    %830 = arith.mulf %826, %829 : vector<1x128xf32>
    %831 = arith.mulf %828, %828 : vector<1x128xf32>
    %832 = arith.subf %830, %831 : vector<1x128xf32>
    %cst_219 = arith.constant 0.000000e+00 : f32
    %833 = vector.broadcast %cst_219 : f32 to vector<1x128xf32>
    %834 = arith.maximumf %832, %833 : vector<1x128xf32>
    %cst_220 = arith.constant 9.99999996E-13 : f32
    %835 = vector.broadcast %cst_220 : f32 to vector<1x128xf32>
    %836 = arith.addf %834, %835 : vector<1x128xf32>
    %837 = math.rsqrt %836 : vector<1x128xf32>
    %838 = vector.broadcast %828 : vector<1x128xf32> to vector<8x128xf32>
    %839 = arith.subf %821, %838 : vector<8x128xf32>
    %840 = vector.broadcast %837 : vector<1x128xf32> to vector<8x128xf32>
    %841 = arith.mulf %839, %840 : vector<8x128xf32>
    %cst_221 = arith.constant 0.000000e+00 : f32
    %842 = vector.broadcast %cst_221 : f32 to vector<8x128xf32>
    %843 = arith.maximumf %841, %842 : vector<8x128xf32>
    %844 = arith.truncf %843 : vector<8x128xf32> to vector<8x128xbf16>
    %c6_222 = arith.constant 6 : index
    %c0_223 = arith.constant 0 : index
    %c0_224 = arith.constant 0 : index
    %845 = vector.load %arg2[%c6_222, %c0_223, %c0_224] : memref<10x128x128xbf16, #tpu.memory_space<vmem>>, vector<1x128x128xbf16>
    %846 = vector.shape_cast %845 : vector<1x128x128xbf16> to vector<128x128xbf16>
    %cst_225 = arith.constant dense<0.000000e+00> : vector<8x128xf32>
    %847 = tpu.matmul %844, %846, %cst_225 {dimension_numbers = #tpu.dot_dimension_numbers<[1], [0], [0], [1], [0, 0, 1, 1], [], []>} : vector<8x128xbf16>, vector<128x128xbf16>, vector<8x128xf32> -> vector<8x128xf32>
    %cst_226 = arith.constant dense<0.000000e+00> : vector<128xf32>
    %848 = vector.multi_reduction <add>, %847, %cst_226 [0] : vector<8x128xf32> to vector<128xf32>
    %849 = vector.shape_cast %848 : vector<128xf32> to vector<1x128xf32>
    %850 = arith.mulf %847, %847 : vector<8x128xf32>
    %cst_227 = arith.constant dense<0.000000e+00> : vector<128xf32>
    %851 = vector.multi_reduction <add>, %850, %cst_227 [0] : vector<8x128xf32> to vector<128xf32>
    %852 = vector.shape_cast %851 : vector<128xf32> to vector<1x128xf32>
    %cst_228 = arith.constant 1.250000e-01 : f32
    %853 = vector.broadcast %cst_228 : f32 to vector<1x128xf32>
    %854 = arith.mulf %849, %853 : vector<1x128xf32>
    %cst_229 = arith.constant 1.250000e-01 : f32
    %855 = vector.broadcast %cst_229 : f32 to vector<1x128xf32>
    %856 = arith.mulf %852, %855 : vector<1x128xf32>
    %857 = arith.mulf %854, %854 : vector<1x128xf32>
    %858 = arith.subf %856, %857 : vector<1x128xf32>
    %cst_230 = arith.constant 0.000000e+00 : f32
    %859 = vector.broadcast %cst_230 : f32 to vector<1x128xf32>
    %860 = arith.maximumf %858, %859 : vector<1x128xf32>
    %cst_231 = arith.constant 9.99999996E-13 : f32
    %861 = vector.broadcast %cst_231 : f32 to vector<1x128xf32>
    %862 = arith.addf %860, %861 : vector<1x128xf32>
    %863 = math.rsqrt %862 : vector<1x128xf32>
    %864 = vector.broadcast %854 : vector<1x128xf32> to vector<8x128xf32>
    %865 = arith.subf %847, %864 : vector<8x128xf32>
    %866 = vector.broadcast %863 : vector<1x128xf32> to vector<8x128xf32>
    %867 = arith.mulf %865, %866 : vector<8x128xf32>
    %cst_232 = arith.constant 0.000000e+00 : f32
    %868 = vector.broadcast %cst_232 : f32 to vector<8x128xf32>
    %869 = arith.maximumf %867, %868 : vector<8x128xf32>
    %870 = vector.extract_strided_slice %784 {offsets = [3, 0], sizes = [1, 128], strides = [1, 1]} : vector<8x128xf32> to vector<1x128xf32>
    %871 = vector.broadcast %870 : vector<1x128xf32> to vector<8x128xf32>
    %872 = arith.mulf %869, %871 : vector<8x128xf32>
    %cst_233 = arith.constant dense<0.000000e+00> : vector<8xf32>
    %873 = vector.multi_reduction <add>, %872, %cst_233 [1] : vector<8x128xf32> to vector<8xf32>
    %874 = vector.shape_cast %873 : vector<8xf32> to vector<8x1xf32>
    %875 = vector.extract_strided_slice %784 {offsets = [4, 0], sizes = [1, 128], strides = [1, 1]} : vector<8x128xf32> to vector<1x128xf32>
    %876 = vector.broadcast %875 : vector<1x128xf32> to vector<8x128xf32>
    %877 = arith.mulf %869, %876 : vector<8x128xf32>
    %cst_234 = arith.constant dense<0.000000e+00> : vector<8xf32>
    %878 = vector.multi_reduction <add>, %877, %cst_234 [1] : vector<8x128xf32> to vector<8xf32>
    %879 = vector.shape_cast %878 : vector<8xf32> to vector<8x1xf32>
    %880 = vector.extract_strided_slice %784 {offsets = [5, 0], sizes = [1, 1], strides = [1, 1]} : vector<8x128xf32> to vector<1x1xf32>
    %881 = vector.broadcast %880 : vector<1x1xf32> to vector<8x1xf32>
    %882 = arith.addf %874, %881 : vector<8x1xf32>
    %883 = vector.extract_strided_slice %784 {offsets = [6, 0], sizes = [1, 1], strides = [1, 1]} : vector<8x128xf32> to vector<1x1xf32>
    %884 = vector.broadcast %883 : vector<1x1xf32> to vector<8x1xf32>
    %885 = arith.mulf %882, %884 : vector<8x1xf32>
    %886 = vector.extract_strided_slice %784 {offsets = [5, 1], sizes = [1, 1], strides = [1, 1]} : vector<8x128xf32> to vector<1x1xf32>
    %887 = vector.broadcast %886 : vector<1x1xf32> to vector<8x1xf32>
    %888 = arith.addf %879, %887 : vector<8x1xf32>
    %889 = vector.extract_strided_slice %784 {offsets = [6, 1], sizes = [1, 1], strides = [1, 1]} : vector<8x128xf32> to vector<1x1xf32>
    %890 = vector.broadcast %889 : vector<1x1xf32> to vector<8x1xf32>
    %891 = arith.mulf %888, %890 : vector<8x1xf32>
    %cst_235 = arith.constant 2.000000e+00 : f32
    %892 = vector.broadcast %cst_235 : f32 to vector<8x1xf32>
    %893 = arith.addf %891, %892 : vector<8x1xf32>
    %cst_236 = arith.constant 0.000000e+00 : f32
    %894 = vector.broadcast %cst_236 : f32 to vector<8x1xf32>
    %895 = arith.subf %894, %893 : vector<8x1xf32>
    %cst_237 = arith.constant 0.000000e+00 : f32
    %896 = vector.broadcast %cst_237 : f32 to vector<8x1xf32>
    %897 = arith.maximumf %895, %896 : vector<8x1xf32>
    %898 = math.absf %893 : vector<8x1xf32>
    %cst_238 = arith.constant 0.000000e+00 : f32
    %899 = vector.broadcast %cst_238 : f32 to vector<8x1xf32>
    %900 = arith.subf %899, %898 : vector<8x1xf32>
    %901 = math.exp %900 : vector<8x1xf32>
    %cst_239 = arith.constant 1.000000e+00 : f32
    %902 = vector.broadcast %cst_239 : f32 to vector<8x1xf32>
    %903 = arith.addf %902, %901 : vector<8x1xf32>
    %904 = math.log %903 : vector<8x1xf32>
    %905 = arith.addf %897, %904 : vector<8x1xf32>
    %cst_240 = arith.constant 0.000000e+00 : f32
    %906 = vector.broadcast %cst_240 : f32 to vector<8x1xf32>
    %907 = arith.subf %906, %905 : vector<8x1xf32>
    %908 = math.exp %907 : vector<8x1xf32>
    %909 = arith.mulf %908, %816 : vector<8x1xf32>
    %910 = arith.addf %909, %885 : vector<8x1xf32>
    %911 = tpu.concatenate %910, %817 in 1 : vector<8x1xf32>, vector<8x1xf32> -> vector<8x2xf32>
    %912 = arith.addf %782, %907 : vector<8x1xf32>
    %c7 = arith.constant 7 : index
    %c0_241 = arith.constant 0 : index
    %c0_242 = arith.constant 0 : index
    %913 = vector.load %arg1[%c7, %c0_241, %c0_242] : memref<10x8x128xf32, #tpu.memory_space<vmem>>, vector<1x8x128xf32>
    %914 = vector.shape_cast %913 : vector<1x8x128xf32> to vector<8x128xf32>
    %cst_243 = arith.constant dense<0.000000e+00> : vector<2xf32>
    %915 = vector.multi_reduction <add>, %911, %cst_243 [0] : vector<8x2xf32> to vector<2xf32>
    %916 = vector.shape_cast %915 : vector<2xf32> to vector<1x2xf32>
    %cst_244 = arith.constant 1.250000e-01 : f32
    %917 = vector.broadcast %cst_244 : f32 to vector<1x2xf32>
    %918 = arith.mulf %916, %917 : vector<1x2xf32>
    %919 = vector.broadcast %918 : vector<1x2xf32> to vector<8x2xf32>
    %920 = arith.subf %911, %919 : vector<8x2xf32>
    %921 = arith.mulf %920, %920 : vector<8x2xf32>
    %cst_245 = arith.constant dense<0.000000e+00> : vector<2xf32>
    %922 = vector.multi_reduction <add>, %921, %cst_245 [0] : vector<8x2xf32> to vector<2xf32>
    %923 = vector.shape_cast %922 : vector<2xf32> to vector<1x2xf32>
    %cst_246 = arith.constant 1.250000e-01 : f32
    %924 = vector.broadcast %cst_246 : f32 to vector<1x2xf32>
    %925 = arith.mulf %923, %924 : vector<1x2xf32>
    %926 = math.sqrt %925 : vector<1x2xf32>
    %cst_247 = arith.constant 9.99999997E-7 : f32
    %927 = vector.broadcast %cst_247 : f32 to vector<1x2xf32>
    %928 = arith.addf %926, %927 : vector<1x2xf32>
    %929 = vector.broadcast %928 : vector<1x2xf32> to vector<8x2xf32>
    %930 = arith.divf %920, %929 : vector<8x2xf32>
    %931 = math.log %928 : vector<1x2xf32>
    %cst_248 = arith.constant 0.000000e+00 : f32
    %932 = vector.broadcast %cst_248 : f32 to vector<1x2xf32>
    %933 = arith.subf %932, %931 : vector<1x2xf32>
    %934 = arith.addf %804, %933 : vector<1x2xf32>
    %935 = vector.extract_strided_slice %930 {offsets = [0, 0], sizes = [8, 1], strides = [1, 1]} : vector<8x2xf32> to vector<8x1xf32>
    %936 = vector.extract_strided_slice %914 {offsets = [1, 0], sizes = [1, 2], strides = [1, 1]} : vector<8x128xf32> to vector<1x2xf32>
    %937 = vector.broadcast %935 : vector<8x1xf32> to vector<8x2xf32>
    %938 = vector.broadcast %936 : vector<1x2xf32> to vector<8x2xf32>
    %939 = arith.mulf %937, %938 : vector<8x2xf32>
    %940 = vector.extract_strided_slice %930 {offsets = [0, 1], sizes = [8, 1], strides = [1, 1]} : vector<8x2xf32> to vector<8x1xf32>
    %941 = vector.extract_strided_slice %914 {offsets = [2, 0], sizes = [1, 2], strides = [1, 1]} : vector<8x128xf32> to vector<1x2xf32>
    %942 = vector.broadcast %940 : vector<8x1xf32> to vector<8x2xf32>
    %943 = vector.broadcast %941 : vector<1x2xf32> to vector<8x2xf32>
    %944 = arith.mulf %942, %943 : vector<8x2xf32>
    %945 = arith.addf %939, %944 : vector<8x2xf32>
    %946 = vector.extract_strided_slice %945 {offsets = [0, 0], sizes = [8, 1], strides = [1, 1]} : vector<8x2xf32> to vector<8x1xf32>
    %947 = vector.extract_strided_slice %945 {offsets = [0, 1], sizes = [8, 1], strides = [1, 1]} : vector<8x2xf32> to vector<8x1xf32>
    %948 = vector.extract_strided_slice %914 {offsets = [0, 0], sizes = [1, 128], strides = [1, 1]} : vector<8x128xf32> to vector<1x128xf32>
    %949 = vector.broadcast %947 : vector<8x1xf32> to vector<8x128xf32>
    %950 = vector.broadcast %948 : vector<1x128xf32> to vector<8x128xf32>
    %951 = arith.mulf %949, %950 : vector<8x128xf32>
    %cst_249 = arith.constant dense<0.000000e+00> : vector<128xf32>
    %952 = vector.multi_reduction <add>, %951, %cst_249 [0] : vector<8x128xf32> to vector<128xf32>
    %953 = vector.shape_cast %952 : vector<128xf32> to vector<1x128xf32>
    %954 = arith.mulf %951, %951 : vector<8x128xf32>
    %cst_250 = arith.constant dense<0.000000e+00> : vector<128xf32>
    %955 = vector.multi_reduction <add>, %954, %cst_250 [0] : vector<8x128xf32> to vector<128xf32>
    %956 = vector.shape_cast %955 : vector<128xf32> to vector<1x128xf32>
    %cst_251 = arith.constant 1.250000e-01 : f32
    %957 = vector.broadcast %cst_251 : f32 to vector<1x128xf32>
    %958 = arith.mulf %953, %957 : vector<1x128xf32>
    %cst_252 = arith.constant 1.250000e-01 : f32
    %959 = vector.broadcast %cst_252 : f32 to vector<1x128xf32>
    %960 = arith.mulf %956, %959 : vector<1x128xf32>
    %961 = arith.mulf %958, %958 : vector<1x128xf32>
    %962 = arith.subf %960, %961 : vector<1x128xf32>
    %cst_253 = arith.constant 0.000000e+00 : f32
    %963 = vector.broadcast %cst_253 : f32 to vector<1x128xf32>
    %964 = arith.maximumf %962, %963 : vector<1x128xf32>
    %cst_254 = arith.constant 9.99999996E-13 : f32
    %965 = vector.broadcast %cst_254 : f32 to vector<1x128xf32>
    %966 = arith.addf %964, %965 : vector<1x128xf32>
    %967 = math.rsqrt %966 : vector<1x128xf32>
    %968 = vector.broadcast %958 : vector<1x128xf32> to vector<8x128xf32>
    %969 = arith.subf %951, %968 : vector<8x128xf32>
    %970 = vector.broadcast %967 : vector<1x128xf32> to vector<8x128xf32>
    %971 = arith.mulf %969, %970 : vector<8x128xf32>
    %cst_255 = arith.constant 0.000000e+00 : f32
    %972 = vector.broadcast %cst_255 : f32 to vector<8x128xf32>
    %973 = arith.maximumf %971, %972 : vector<8x128xf32>
    %974 = arith.truncf %973 : vector<8x128xf32> to vector<8x128xbf16>
    %c7_256 = arith.constant 7 : index
    %c0_257 = arith.constant 0 : index
    %c0_258 = arith.constant 0 : index
    %975 = vector.load %arg2[%c7_256, %c0_257, %c0_258] : memref<10x128x128xbf16, #tpu.memory_space<vmem>>, vector<1x128x128xbf16>
    %976 = vector.shape_cast %975 : vector<1x128x128xbf16> to vector<128x128xbf16>
    %cst_259 = arith.constant dense<0.000000e+00> : vector<8x128xf32>
    %977 = tpu.matmul %974, %976, %cst_259 {dimension_numbers = #tpu.dot_dimension_numbers<[1], [0], [0], [1], [0, 0, 1, 1], [], []>} : vector<8x128xbf16>, vector<128x128xbf16>, vector<8x128xf32> -> vector<8x128xf32>
    %cst_260 = arith.constant dense<0.000000e+00> : vector<128xf32>
    %978 = vector.multi_reduction <add>, %977, %cst_260 [0] : vector<8x128xf32> to vector<128xf32>
    %979 = vector.shape_cast %978 : vector<128xf32> to vector<1x128xf32>
    %980 = arith.mulf %977, %977 : vector<8x128xf32>
    %cst_261 = arith.constant dense<0.000000e+00> : vector<128xf32>
    %981 = vector.multi_reduction <add>, %980, %cst_261 [0] : vector<8x128xf32> to vector<128xf32>
    %982 = vector.shape_cast %981 : vector<128xf32> to vector<1x128xf32>
    %cst_262 = arith.constant 1.250000e-01 : f32
    %983 = vector.broadcast %cst_262 : f32 to vector<1x128xf32>
    %984 = arith.mulf %979, %983 : vector<1x128xf32>
    %cst_263 = arith.constant 1.250000e-01 : f32
    %985 = vector.broadcast %cst_263 : f32 to vector<1x128xf32>
    %986 = arith.mulf %982, %985 : vector<1x128xf32>
    %987 = arith.mulf %984, %984 : vector<1x128xf32>
    %988 = arith.subf %986, %987 : vector<1x128xf32>
    %cst_264 = arith.constant 0.000000e+00 : f32
    %989 = vector.broadcast %cst_264 : f32 to vector<1x128xf32>
    %990 = arith.maximumf %988, %989 : vector<1x128xf32>
    %cst_265 = arith.constant 9.99999996E-13 : f32
    %991 = vector.broadcast %cst_265 : f32 to vector<1x128xf32>
    %992 = arith.addf %990, %991 : vector<1x128xf32>
    %993 = math.rsqrt %992 : vector<1x128xf32>
    %994 = vector.broadcast %984 : vector<1x128xf32> to vector<8x128xf32>
    %995 = arith.subf %977, %994 : vector<8x128xf32>
    %996 = vector.broadcast %993 : vector<1x128xf32> to vector<8x128xf32>
    %997 = arith.mulf %995, %996 : vector<8x128xf32>
    %cst_266 = arith.constant 0.000000e+00 : f32
    %998 = vector.broadcast %cst_266 : f32 to vector<8x128xf32>
    %999 = arith.maximumf %997, %998 : vector<8x128xf32>
    %1000 = vector.extract_strided_slice %914 {offsets = [3, 0], sizes = [1, 128], strides = [1, 1]} : vector<8x128xf32> to vector<1x128xf32>
    %1001 = vector.broadcast %1000 : vector<1x128xf32> to vector<8x128xf32>
    %1002 = arith.mulf %999, %1001 : vector<8x128xf32>
    %cst_267 = arith.constant dense<0.000000e+00> : vector<8xf32>
    %1003 = vector.multi_reduction <add>, %1002, %cst_267 [1] : vector<8x128xf32> to vector<8xf32>
    %1004 = vector.shape_cast %1003 : vector<8xf32> to vector<8x1xf32>
    %1005 = vector.extract_strided_slice %914 {offsets = [4, 0], sizes = [1, 128], strides = [1, 1]} : vector<8x128xf32> to vector<1x128xf32>
    %1006 = vector.broadcast %1005 : vector<1x128xf32> to vector<8x128xf32>
    %1007 = arith.mulf %999, %1006 : vector<8x128xf32>
    %cst_268 = arith.constant dense<0.000000e+00> : vector<8xf32>
    %1008 = vector.multi_reduction <add>, %1007, %cst_268 [1] : vector<8x128xf32> to vector<8xf32>
    %1009 = vector.shape_cast %1008 : vector<8xf32> to vector<8x1xf32>
    %1010 = vector.extract_strided_slice %914 {offsets = [5, 0], sizes = [1, 1], strides = [1, 1]} : vector<8x128xf32> to vector<1x1xf32>
    %1011 = vector.broadcast %1010 : vector<1x1xf32> to vector<8x1xf32>
    %1012 = arith.addf %1004, %1011 : vector<8x1xf32>
    %1013 = vector.extract_strided_slice %914 {offsets = [6, 0], sizes = [1, 1], strides = [1, 1]} : vector<8x128xf32> to vector<1x1xf32>
    %1014 = vector.broadcast %1013 : vector<1x1xf32> to vector<8x1xf32>
    %1015 = arith.mulf %1012, %1014 : vector<8x1xf32>
    %1016 = vector.extract_strided_slice %914 {offsets = [5, 1], sizes = [1, 1], strides = [1, 1]} : vector<8x128xf32> to vector<1x1xf32>
    %1017 = vector.broadcast %1016 : vector<1x1xf32> to vector<8x1xf32>
    %1018 = arith.addf %1009, %1017 : vector<8x1xf32>
    %1019 = vector.extract_strided_slice %914 {offsets = [6, 1], sizes = [1, 1], strides = [1, 1]} : vector<8x128xf32> to vector<1x1xf32>
    %1020 = vector.broadcast %1019 : vector<1x1xf32> to vector<8x1xf32>
    %1021 = arith.mulf %1018, %1020 : vector<8x1xf32>
    %cst_269 = arith.constant 2.000000e+00 : f32
    %1022 = vector.broadcast %cst_269 : f32 to vector<8x1xf32>
    %1023 = arith.addf %1021, %1022 : vector<8x1xf32>
    %cst_270 = arith.constant 0.000000e+00 : f32
    %1024 = vector.broadcast %cst_270 : f32 to vector<8x1xf32>
    %1025 = arith.subf %1024, %1023 : vector<8x1xf32>
    %cst_271 = arith.constant 0.000000e+00 : f32
    %1026 = vector.broadcast %cst_271 : f32 to vector<8x1xf32>
    %1027 = arith.maximumf %1025, %1026 : vector<8x1xf32>
    %1028 = math.absf %1023 : vector<8x1xf32>
    %cst_272 = arith.constant 0.000000e+00 : f32
    %1029 = vector.broadcast %cst_272 : f32 to vector<8x1xf32>
    %1030 = arith.subf %1029, %1028 : vector<8x1xf32>
    %1031 = math.exp %1030 : vector<8x1xf32>
    %cst_273 = arith.constant 1.000000e+00 : f32
    %1032 = vector.broadcast %cst_273 : f32 to vector<8x1xf32>
    %1033 = arith.addf %1032, %1031 : vector<8x1xf32>
    %1034 = math.log %1033 : vector<8x1xf32>
    %1035 = arith.addf %1027, %1034 : vector<8x1xf32>
    %cst_274 = arith.constant 0.000000e+00 : f32
    %1036 = vector.broadcast %cst_274 : f32 to vector<8x1xf32>
    %1037 = arith.subf %1036, %1035 : vector<8x1xf32>
    %1038 = math.exp %1037 : vector<8x1xf32>
    %1039 = arith.mulf %1038, %946 : vector<8x1xf32>
    %1040 = arith.addf %1039, %1015 : vector<8x1xf32>
    %1041 = tpu.concatenate %1040, %947 in 1 : vector<8x1xf32>, vector<8x1xf32> -> vector<8x2xf32>
    %1042 = arith.addf %912, %1037 : vector<8x1xf32>
    %c8 = arith.constant 8 : index
    %c0_275 = arith.constant 0 : index
    %c0_276 = arith.constant 0 : index
    %1043 = vector.load %arg1[%c8, %c0_275, %c0_276] : memref<10x8x128xf32, #tpu.memory_space<vmem>>, vector<1x8x128xf32>
    %1044 = vector.shape_cast %1043 : vector<1x8x128xf32> to vector<8x128xf32>
    %cst_277 = arith.constant dense<0.000000e+00> : vector<2xf32>
    %1045 = vector.multi_reduction <add>, %1041, %cst_277 [0] : vector<8x2xf32> to vector<2xf32>
    %1046 = vector.shape_cast %1045 : vector<2xf32> to vector<1x2xf32>
    %cst_278 = arith.constant 1.250000e-01 : f32
    %1047 = vector.broadcast %cst_278 : f32 to vector<1x2xf32>
    %1048 = arith.mulf %1046, %1047 : vector<1x2xf32>
    %1049 = vector.broadcast %1048 : vector<1x2xf32> to vector<8x2xf32>
    %1050 = arith.subf %1041, %1049 : vector<8x2xf32>
    %1051 = arith.mulf %1050, %1050 : vector<8x2xf32>
    %cst_279 = arith.constant dense<0.000000e+00> : vector<2xf32>
    %1052 = vector.multi_reduction <add>, %1051, %cst_279 [0] : vector<8x2xf32> to vector<2xf32>
    %1053 = vector.shape_cast %1052 : vector<2xf32> to vector<1x2xf32>
    %cst_280 = arith.constant 1.250000e-01 : f32
    %1054 = vector.broadcast %cst_280 : f32 to vector<1x2xf32>
    %1055 = arith.mulf %1053, %1054 : vector<1x2xf32>
    %1056 = math.sqrt %1055 : vector<1x2xf32>
    %cst_281 = arith.constant 9.99999997E-7 : f32
    %1057 = vector.broadcast %cst_281 : f32 to vector<1x2xf32>
    %1058 = arith.addf %1056, %1057 : vector<1x2xf32>
    %1059 = vector.broadcast %1058 : vector<1x2xf32> to vector<8x2xf32>
    %1060 = arith.divf %1050, %1059 : vector<8x2xf32>
    %1061 = math.log %1058 : vector<1x2xf32>
    %cst_282 = arith.constant 0.000000e+00 : f32
    %1062 = vector.broadcast %cst_282 : f32 to vector<1x2xf32>
    %1063 = arith.subf %1062, %1061 : vector<1x2xf32>
    %1064 = arith.addf %934, %1063 : vector<1x2xf32>
    %1065 = vector.extract_strided_slice %1060 {offsets = [0, 0], sizes = [8, 1], strides = [1, 1]} : vector<8x2xf32> to vector<8x1xf32>
    %1066 = vector.extract_strided_slice %1044 {offsets = [1, 0], sizes = [1, 2], strides = [1, 1]} : vector<8x128xf32> to vector<1x2xf32>
    %1067 = vector.broadcast %1065 : vector<8x1xf32> to vector<8x2xf32>
    %1068 = vector.broadcast %1066 : vector<1x2xf32> to vector<8x2xf32>
    %1069 = arith.mulf %1067, %1068 : vector<8x2xf32>
    %1070 = vector.extract_strided_slice %1060 {offsets = [0, 1], sizes = [8, 1], strides = [1, 1]} : vector<8x2xf32> to vector<8x1xf32>
    %1071 = vector.extract_strided_slice %1044 {offsets = [2, 0], sizes = [1, 2], strides = [1, 1]} : vector<8x128xf32> to vector<1x2xf32>
    %1072 = vector.broadcast %1070 : vector<8x1xf32> to vector<8x2xf32>
    %1073 = vector.broadcast %1071 : vector<1x2xf32> to vector<8x2xf32>
    %1074 = arith.mulf %1072, %1073 : vector<8x2xf32>
    %1075 = arith.addf %1069, %1074 : vector<8x2xf32>
    %1076 = vector.extract_strided_slice %1075 {offsets = [0, 0], sizes = [8, 1], strides = [1, 1]} : vector<8x2xf32> to vector<8x1xf32>
    %1077 = vector.extract_strided_slice %1075 {offsets = [0, 1], sizes = [8, 1], strides = [1, 1]} : vector<8x2xf32> to vector<8x1xf32>
    %1078 = vector.extract_strided_slice %1044 {offsets = [0, 0], sizes = [1, 128], strides = [1, 1]} : vector<8x128xf32> to vector<1x128xf32>
    %1079 = vector.broadcast %1077 : vector<8x1xf32> to vector<8x128xf32>
    %1080 = vector.broadcast %1078 : vector<1x128xf32> to vector<8x128xf32>
    %1081 = arith.mulf %1079, %1080 : vector<8x128xf32>
    %cst_283 = arith.constant dense<0.000000e+00> : vector<128xf32>
    %1082 = vector.multi_reduction <add>, %1081, %cst_283 [0] : vector<8x128xf32> to vector<128xf32>
    %1083 = vector.shape_cast %1082 : vector<128xf32> to vector<1x128xf32>
    %1084 = arith.mulf %1081, %1081 : vector<8x128xf32>
    %cst_284 = arith.constant dense<0.000000e+00> : vector<128xf32>
    %1085 = vector.multi_reduction <add>, %1084, %cst_284 [0] : vector<8x128xf32> to vector<128xf32>
    %1086 = vector.shape_cast %1085 : vector<128xf32> to vector<1x128xf32>
    %cst_285 = arith.constant 1.250000e-01 : f32
    %1087 = vector.broadcast %cst_285 : f32 to vector<1x128xf32>
    %1088 = arith.mulf %1083, %1087 : vector<1x128xf32>
    %cst_286 = arith.constant 1.250000e-01 : f32
    %1089 = vector.broadcast %cst_286 : f32 to vector<1x128xf32>
    %1090 = arith.mulf %1086, %1089 : vector<1x128xf32>
    %1091 = arith.mulf %1088, %1088 : vector<1x128xf32>
    %1092 = arith.subf %1090, %1091 : vector<1x128xf32>
    %cst_287 = arith.constant 0.000000e+00 : f32
    %1093 = vector.broadcast %cst_287 : f32 to vector<1x128xf32>
    %1094 = arith.maximumf %1092, %1093 : vector<1x128xf32>
    %cst_288 = arith.constant 9.99999996E-13 : f32
    %1095 = vector.broadcast %cst_288 : f32 to vector<1x128xf32>
    %1096 = arith.addf %1094, %1095 : vector<1x128xf32>
    %1097 = math.rsqrt %1096 : vector<1x128xf32>
    %1098 = vector.broadcast %1088 : vector<1x128xf32> to vector<8x128xf32>
    %1099 = arith.subf %1081, %1098 : vector<8x128xf32>
    %1100 = vector.broadcast %1097 : vector<1x128xf32> to vector<8x128xf32>
    %1101 = arith.mulf %1099, %1100 : vector<8x128xf32>
    %cst_289 = arith.constant 0.000000e+00 : f32
    %1102 = vector.broadcast %cst_289 : f32 to vector<8x128xf32>
    %1103 = arith.maximumf %1101, %1102 : vector<8x128xf32>
    %1104 = arith.truncf %1103 : vector<8x128xf32> to vector<8x128xbf16>
    %c8_290 = arith.constant 8 : index
    %c0_291 = arith.constant 0 : index
    %c0_292 = arith.constant 0 : index
    %1105 = vector.load %arg2[%c8_290, %c0_291, %c0_292] : memref<10x128x128xbf16, #tpu.memory_space<vmem>>, vector<1x128x128xbf16>
    %1106 = vector.shape_cast %1105 : vector<1x128x128xbf16> to vector<128x128xbf16>
    %cst_293 = arith.constant dense<0.000000e+00> : vector<8x128xf32>
    %1107 = tpu.matmul %1104, %1106, %cst_293 {dimension_numbers = #tpu.dot_dimension_numbers<[1], [0], [0], [1], [0, 0, 1, 1], [], []>} : vector<8x128xbf16>, vector<128x128xbf16>, vector<8x128xf32> -> vector<8x128xf32>
    %cst_294 = arith.constant dense<0.000000e+00> : vector<128xf32>
    %1108 = vector.multi_reduction <add>, %1107, %cst_294 [0] : vector<8x128xf32> to vector<128xf32>
    %1109 = vector.shape_cast %1108 : vector<128xf32> to vector<1x128xf32>
    %1110 = arith.mulf %1107, %1107 : vector<8x128xf32>
    %cst_295 = arith.constant dense<0.000000e+00> : vector<128xf32>
    %1111 = vector.multi_reduction <add>, %1110, %cst_295 [0] : vector<8x128xf32> to vector<128xf32>
    %1112 = vector.shape_cast %1111 : vector<128xf32> to vector<1x128xf32>
    %cst_296 = arith.constant 1.250000e-01 : f32
    %1113 = vector.broadcast %cst_296 : f32 to vector<1x128xf32>
    %1114 = arith.mulf %1109, %1113 : vector<1x128xf32>
    %cst_297 = arith.constant 1.250000e-01 : f32
    %1115 = vector.broadcast %cst_297 : f32 to vector<1x128xf32>
    %1116 = arith.mulf %1112, %1115 : vector<1x128xf32>
    %1117 = arith.mulf %1114, %1114 : vector<1x128xf32>
    %1118 = arith.subf %1116, %1117 : vector<1x128xf32>
    %cst_298 = arith.constant 0.000000e+00 : f32
    %1119 = vector.broadcast %cst_298 : f32 to vector<1x128xf32>
    %1120 = arith.maximumf %1118, %1119 : vector<1x128xf32>
    %cst_299 = arith.constant 9.99999996E-13 : f32
    %1121 = vector.broadcast %cst_299 : f32 to vector<1x128xf32>
    %1122 = arith.addf %1120, %1121 : vector<1x128xf32>
    %1123 = math.rsqrt %1122 : vector<1x128xf32>
    %1124 = vector.broadcast %1114 : vector<1x128xf32> to vector<8x128xf32>
    %1125 = arith.subf %1107, %1124 : vector<8x128xf32>
    %1126 = vector.broadcast %1123 : vector<1x128xf32> to vector<8x128xf32>
    %1127 = arith.mulf %1125, %1126 : vector<8x128xf32>
    %cst_300 = arith.constant 0.000000e+00 : f32
    %1128 = vector.broadcast %cst_300 : f32 to vector<8x128xf32>
    %1129 = arith.maximumf %1127, %1128 : vector<8x128xf32>
    %1130 = vector.extract_strided_slice %1044 {offsets = [3, 0], sizes = [1, 128], strides = [1, 1]} : vector<8x128xf32> to vector<1x128xf32>
    %1131 = vector.broadcast %1130 : vector<1x128xf32> to vector<8x128xf32>
    %1132 = arith.mulf %1129, %1131 : vector<8x128xf32>
    %cst_301 = arith.constant dense<0.000000e+00> : vector<8xf32>
    %1133 = vector.multi_reduction <add>, %1132, %cst_301 [1] : vector<8x128xf32> to vector<8xf32>
    %1134 = vector.shape_cast %1133 : vector<8xf32> to vector<8x1xf32>
    %1135 = vector.extract_strided_slice %1044 {offsets = [4, 0], sizes = [1, 128], strides = [1, 1]} : vector<8x128xf32> to vector<1x128xf32>
    %1136 = vector.broadcast %1135 : vector<1x128xf32> to vector<8x128xf32>
    %1137 = arith.mulf %1129, %1136 : vector<8x128xf32>
    %cst_302 = arith.constant dense<0.000000e+00> : vector<8xf32>
    %1138 = vector.multi_reduction <add>, %1137, %cst_302 [1] : vector<8x128xf32> to vector<8xf32>
    %1139 = vector.shape_cast %1138 : vector<8xf32> to vector<8x1xf32>
    %1140 = vector.extract_strided_slice %1044 {offsets = [5, 0], sizes = [1, 1], strides = [1, 1]} : vector<8x128xf32> to vector<1x1xf32>
    %1141 = vector.broadcast %1140 : vector<1x1xf32> to vector<8x1xf32>
    %1142 = arith.addf %1134, %1141 : vector<8x1xf32>
    %1143 = vector.extract_strided_slice %1044 {offsets = [6, 0], sizes = [1, 1], strides = [1, 1]} : vector<8x128xf32> to vector<1x1xf32>
    %1144 = vector.broadcast %1143 : vector<1x1xf32> to vector<8x1xf32>
    %1145 = arith.mulf %1142, %1144 : vector<8x1xf32>
    %1146 = vector.extract_strided_slice %1044 {offsets = [5, 1], sizes = [1, 1], strides = [1, 1]} : vector<8x128xf32> to vector<1x1xf32>
    %1147 = vector.broadcast %1146 : vector<1x1xf32> to vector<8x1xf32>
    %1148 = arith.addf %1139, %1147 : vector<8x1xf32>
    %1149 = vector.extract_strided_slice %1044 {offsets = [6, 1], sizes = [1, 1], strides = [1, 1]} : vector<8x128xf32> to vector<1x1xf32>
    %1150 = vector.broadcast %1149 : vector<1x1xf32> to vector<8x1xf32>
    %1151 = arith.mulf %1148, %1150 : vector<8x1xf32>
    %cst_303 = arith.constant 2.000000e+00 : f32
    %1152 = vector.broadcast %cst_303 : f32 to vector<8x1xf32>
    %1153 = arith.addf %1151, %1152 : vector<8x1xf32>
    %cst_304 = arith.constant 0.000000e+00 : f32
    %1154 = vector.broadcast %cst_304 : f32 to vector<8x1xf32>
    %1155 = arith.subf %1154, %1153 : vector<8x1xf32>
    %cst_305 = arith.constant 0.000000e+00 : f32
    %1156 = vector.broadcast %cst_305 : f32 to vector<8x1xf32>
    %1157 = arith.maximumf %1155, %1156 : vector<8x1xf32>
    %1158 = math.absf %1153 : vector<8x1xf32>
    %cst_306 = arith.constant 0.000000e+00 : f32
    %1159 = vector.broadcast %cst_306 : f32 to vector<8x1xf32>
    %1160 = arith.subf %1159, %1158 : vector<8x1xf32>
    %1161 = math.exp %1160 : vector<8x1xf32>
    %cst_307 = arith.constant 1.000000e+00 : f32
    %1162 = vector.broadcast %cst_307 : f32 to vector<8x1xf32>
    %1163 = arith.addf %1162, %1161 : vector<8x1xf32>
    %1164 = math.log %1163 : vector<8x1xf32>
    %1165 = arith.addf %1157, %1164 : vector<8x1xf32>
    %cst_308 = arith.constant 0.000000e+00 : f32
    %1166 = vector.broadcast %cst_308 : f32 to vector<8x1xf32>
    %1167 = arith.subf %1166, %1165 : vector<8x1xf32>
    %1168 = math.exp %1167 : vector<8x1xf32>
    %1169 = arith.mulf %1168, %1076 : vector<8x1xf32>
    %1170 = arith.addf %1169, %1145 : vector<8x1xf32>
    %1171 = tpu.concatenate %1170, %1077 in 1 : vector<8x1xf32>, vector<8x1xf32> -> vector<8x2xf32>
    %1172 = arith.addf %1042, %1167 : vector<8x1xf32>
    %c9 = arith.constant 9 : index
    %c0_309 = arith.constant 0 : index
    %c0_310 = arith.constant 0 : index
    %1173 = vector.load %arg1[%c9, %c0_309, %c0_310] : memref<10x8x128xf32, #tpu.memory_space<vmem>>, vector<1x8x128xf32>
    %1174 = vector.shape_cast %1173 : vector<1x8x128xf32> to vector<8x128xf32>
    %cst_311 = arith.constant dense<0.000000e+00> : vector<2xf32>
    %1175 = vector.multi_reduction <add>, %1171, %cst_311 [0] : vector<8x2xf32> to vector<2xf32>
    %1176 = vector.shape_cast %1175 : vector<2xf32> to vector<1x2xf32>
    %cst_312 = arith.constant 1.250000e-01 : f32
    %1177 = vector.broadcast %cst_312 : f32 to vector<1x2xf32>
    %1178 = arith.mulf %1176, %1177 : vector<1x2xf32>
    %1179 = vector.broadcast %1178 : vector<1x2xf32> to vector<8x2xf32>
    %1180 = arith.subf %1171, %1179 : vector<8x2xf32>
    %1181 = arith.mulf %1180, %1180 : vector<8x2xf32>
    %cst_313 = arith.constant dense<0.000000e+00> : vector<2xf32>
    %1182 = vector.multi_reduction <add>, %1181, %cst_313 [0] : vector<8x2xf32> to vector<2xf32>
    %1183 = vector.shape_cast %1182 : vector<2xf32> to vector<1x2xf32>
    %cst_314 = arith.constant 1.250000e-01 : f32
    %1184 = vector.broadcast %cst_314 : f32 to vector<1x2xf32>
    %1185 = arith.mulf %1183, %1184 : vector<1x2xf32>
    %1186 = math.sqrt %1185 : vector<1x2xf32>
    %cst_315 = arith.constant 9.99999997E-7 : f32
    %1187 = vector.broadcast %cst_315 : f32 to vector<1x2xf32>
    %1188 = arith.addf %1186, %1187 : vector<1x2xf32>
    %1189 = vector.broadcast %1188 : vector<1x2xf32> to vector<8x2xf32>
    %1190 = arith.divf %1180, %1189 : vector<8x2xf32>
    %1191 = math.log %1188 : vector<1x2xf32>
    %cst_316 = arith.constant 0.000000e+00 : f32
    %1192 = vector.broadcast %cst_316 : f32 to vector<1x2xf32>
    %1193 = arith.subf %1192, %1191 : vector<1x2xf32>
    %1194 = arith.addf %1064, %1193 : vector<1x2xf32>
    %1195 = vector.extract_strided_slice %1190 {offsets = [0, 0], sizes = [8, 1], strides = [1, 1]} : vector<8x2xf32> to vector<8x1xf32>
    %1196 = vector.extract_strided_slice %1174 {offsets = [1, 0], sizes = [1, 2], strides = [1, 1]} : vector<8x128xf32> to vector<1x2xf32>
    %1197 = vector.broadcast %1195 : vector<8x1xf32> to vector<8x2xf32>
    %1198 = vector.broadcast %1196 : vector<1x2xf32> to vector<8x2xf32>
    %1199 = arith.mulf %1197, %1198 : vector<8x2xf32>
    %1200 = vector.extract_strided_slice %1190 {offsets = [0, 1], sizes = [8, 1], strides = [1, 1]} : vector<8x2xf32> to vector<8x1xf32>
    %1201 = vector.extract_strided_slice %1174 {offsets = [2, 0], sizes = [1, 2], strides = [1, 1]} : vector<8x128xf32> to vector<1x2xf32>
    %1202 = vector.broadcast %1200 : vector<8x1xf32> to vector<8x2xf32>
    %1203 = vector.broadcast %1201 : vector<1x2xf32> to vector<8x2xf32>
    %1204 = arith.mulf %1202, %1203 : vector<8x2xf32>
    %1205 = arith.addf %1199, %1204 : vector<8x2xf32>
    %1206 = vector.extract_strided_slice %1205 {offsets = [0, 0], sizes = [8, 1], strides = [1, 1]} : vector<8x2xf32> to vector<8x1xf32>
    %1207 = vector.extract_strided_slice %1205 {offsets = [0, 1], sizes = [8, 1], strides = [1, 1]} : vector<8x2xf32> to vector<8x1xf32>
    %1208 = vector.extract_strided_slice %1174 {offsets = [0, 0], sizes = [1, 128], strides = [1, 1]} : vector<8x128xf32> to vector<1x128xf32>
    %1209 = vector.broadcast %1207 : vector<8x1xf32> to vector<8x128xf32>
    %1210 = vector.broadcast %1208 : vector<1x128xf32> to vector<8x128xf32>
    %1211 = arith.mulf %1209, %1210 : vector<8x128xf32>
    %cst_317 = arith.constant dense<0.000000e+00> : vector<128xf32>
    %1212 = vector.multi_reduction <add>, %1211, %cst_317 [0] : vector<8x128xf32> to vector<128xf32>
    %1213 = vector.shape_cast %1212 : vector<128xf32> to vector<1x128xf32>
    %1214 = arith.mulf %1211, %1211 : vector<8x128xf32>
    %cst_318 = arith.constant dense<0.000000e+00> : vector<128xf32>
    %1215 = vector.multi_reduction <add>, %1214, %cst_318 [0] : vector<8x128xf32> to vector<128xf32>
    %1216 = vector.shape_cast %1215 : vector<128xf32> to vector<1x128xf32>
    %cst_319 = arith.constant 1.250000e-01 : f32
    %1217 = vector.broadcast %cst_319 : f32 to vector<1x128xf32>
    %1218 = arith.mulf %1213, %1217 : vector<1x128xf32>
    %cst_320 = arith.constant 1.250000e-01 : f32
    %1219 = vector.broadcast %cst_320 : f32 to vector<1x128xf32>
    %1220 = arith.mulf %1216, %1219 : vector<1x128xf32>
    %1221 = arith.mulf %1218, %1218 : vector<1x128xf32>
    %1222 = arith.subf %1220, %1221 : vector<1x128xf32>
    %cst_321 = arith.constant 0.000000e+00 : f32
    %1223 = vector.broadcast %cst_321 : f32 to vector<1x128xf32>
    %1224 = arith.maximumf %1222, %1223 : vector<1x128xf32>
    %cst_322 = arith.constant 9.99999996E-13 : f32
    %1225 = vector.broadcast %cst_322 : f32 to vector<1x128xf32>
    %1226 = arith.addf %1224, %1225 : vector<1x128xf32>
    %1227 = math.rsqrt %1226 : vector<1x128xf32>
    %1228 = vector.broadcast %1218 : vector<1x128xf32> to vector<8x128xf32>
    %1229 = arith.subf %1211, %1228 : vector<8x128xf32>
    %1230 = vector.broadcast %1227 : vector<1x128xf32> to vector<8x128xf32>
    %1231 = arith.mulf %1229, %1230 : vector<8x128xf32>
    %cst_323 = arith.constant 0.000000e+00 : f32
    %1232 = vector.broadcast %cst_323 : f32 to vector<8x128xf32>
    %1233 = arith.maximumf %1231, %1232 : vector<8x128xf32>
    %1234 = arith.truncf %1233 : vector<8x128xf32> to vector<8x128xbf16>
    %c9_324 = arith.constant 9 : index
    %c0_325 = arith.constant 0 : index
    %c0_326 = arith.constant 0 : index
    %1235 = vector.load %arg2[%c9_324, %c0_325, %c0_326] : memref<10x128x128xbf16, #tpu.memory_space<vmem>>, vector<1x128x128xbf16>
    %1236 = vector.shape_cast %1235 : vector<1x128x128xbf16> to vector<128x128xbf16>
    %cst_327 = arith.constant dense<0.000000e+00> : vector<8x128xf32>
    %1237 = tpu.matmul %1234, %1236, %cst_327 {dimension_numbers = #tpu.dot_dimension_numbers<[1], [0], [0], [1], [0, 0, 1, 1], [], []>} : vector<8x128xbf16>, vector<128x128xbf16>, vector<8x128xf32> -> vector<8x128xf32>
    %cst_328 = arith.constant dense<0.000000e+00> : vector<128xf32>
    %1238 = vector.multi_reduction <add>, %1237, %cst_328 [0] : vector<8x128xf32> to vector<128xf32>
    %1239 = vector.shape_cast %1238 : vector<128xf32> to vector<1x128xf32>
    %1240 = arith.mulf %1237, %1237 : vector<8x128xf32>
    %cst_329 = arith.constant dense<0.000000e+00> : vector<128xf32>
    %1241 = vector.multi_reduction <add>, %1240, %cst_329 [0] : vector<8x128xf32> to vector<128xf32>
    %1242 = vector.shape_cast %1241 : vector<128xf32> to vector<1x128xf32>
    %cst_330 = arith.constant 1.250000e-01 : f32
    %1243 = vector.broadcast %cst_330 : f32 to vector<1x128xf32>
    %1244 = arith.mulf %1239, %1243 : vector<1x128xf32>
    %cst_331 = arith.constant 1.250000e-01 : f32
    %1245 = vector.broadcast %cst_331 : f32 to vector<1x128xf32>
    %1246 = arith.mulf %1242, %1245 : vector<1x128xf32>
    %1247 = arith.mulf %1244, %1244 : vector<1x128xf32>
    %1248 = arith.subf %1246, %1247 : vector<1x128xf32>
    %cst_332 = arith.constant 0.000000e+00 : f32
    %1249 = vector.broadcast %cst_332 : f32 to vector<1x128xf32>
    %1250 = arith.maximumf %1248, %1249 : vector<1x128xf32>
    %cst_333 = arith.constant 9.99999996E-13 : f32
    %1251 = vector.broadcast %cst_333 : f32 to vector<1x128xf32>
    %1252 = arith.addf %1250, %1251 : vector<1x128xf32>
    %1253 = math.rsqrt %1252 : vector<1x128xf32>
    %1254 = vector.broadcast %1244 : vector<1x128xf32> to vector<8x128xf32>
    %1255 = arith.subf %1237, %1254 : vector<8x128xf32>
    %1256 = vector.broadcast %1253 : vector<1x128xf32> to vector<8x128xf32>
    %1257 = arith.mulf %1255, %1256 : vector<8x128xf32>
    %cst_334 = arith.constant 0.000000e+00 : f32
    %1258 = vector.broadcast %cst_334 : f32 to vector<8x128xf32>
    %1259 = arith.maximumf %1257, %1258 : vector<8x128xf32>
    %1260 = vector.extract_strided_slice %1174 {offsets = [3, 0], sizes = [1, 128], strides = [1, 1]} : vector<8x128xf32> to vector<1x128xf32>
    %1261 = vector.broadcast %1260 : vector<1x128xf32> to vector<8x128xf32>
    %1262 = arith.mulf %1259, %1261 : vector<8x128xf32>
    %cst_335 = arith.constant dense<0.000000e+00> : vector<8xf32>
    %1263 = vector.multi_reduction <add>, %1262, %cst_335 [1] : vector<8x128xf32> to vector<8xf32>
    %1264 = vector.shape_cast %1263 : vector<8xf32> to vector<8x1xf32>
    %1265 = vector.extract_strided_slice %1174 {offsets = [4, 0], sizes = [1, 128], strides = [1, 1]} : vector<8x128xf32> to vector<1x128xf32>
    %1266 = vector.broadcast %1265 : vector<1x128xf32> to vector<8x128xf32>
    %1267 = arith.mulf %1259, %1266 : vector<8x128xf32>
    %cst_336 = arith.constant dense<0.000000e+00> : vector<8xf32>
    %1268 = vector.multi_reduction <add>, %1267, %cst_336 [1] : vector<8x128xf32> to vector<8xf32>
    %1269 = vector.shape_cast %1268 : vector<8xf32> to vector<8x1xf32>
    %1270 = vector.extract_strided_slice %1174 {offsets = [5, 0], sizes = [1, 1], strides = [1, 1]} : vector<8x128xf32> to vector<1x1xf32>
    %1271 = vector.broadcast %1270 : vector<1x1xf32> to vector<8x1xf32>
    %1272 = arith.addf %1264, %1271 : vector<8x1xf32>
    %1273 = vector.extract_strided_slice %1174 {offsets = [6, 0], sizes = [1, 1], strides = [1, 1]} : vector<8x128xf32> to vector<1x1xf32>
    %1274 = vector.broadcast %1273 : vector<1x1xf32> to vector<8x1xf32>
    %1275 = arith.mulf %1272, %1274 : vector<8x1xf32>
    %1276 = vector.extract_strided_slice %1174 {offsets = [5, 1], sizes = [1, 1], strides = [1, 1]} : vector<8x128xf32> to vector<1x1xf32>
    %1277 = vector.broadcast %1276 : vector<1x1xf32> to vector<8x1xf32>
    %1278 = arith.addf %1269, %1277 : vector<8x1xf32>
    %1279 = vector.extract_strided_slice %1174 {offsets = [6, 1], sizes = [1, 1], strides = [1, 1]} : vector<8x128xf32> to vector<1x1xf32>
    %1280 = vector.broadcast %1279 : vector<1x1xf32> to vector<8x1xf32>
    %1281 = arith.mulf %1278, %1280 : vector<8x1xf32>
    %cst_337 = arith.constant 2.000000e+00 : f32
    %1282 = vector.broadcast %cst_337 : f32 to vector<8x1xf32>
    %1283 = arith.addf %1281, %1282 : vector<8x1xf32>
    %cst_338 = arith.constant 0.000000e+00 : f32
    %1284 = vector.broadcast %cst_338 : f32 to vector<8x1xf32>
    %1285 = arith.subf %1284, %1283 : vector<8x1xf32>
    %cst_339 = arith.constant 0.000000e+00 : f32
    %1286 = vector.broadcast %cst_339 : f32 to vector<8x1xf32>
    %1287 = arith.maximumf %1285, %1286 : vector<8x1xf32>
    %1288 = math.absf %1283 : vector<8x1xf32>
    %cst_340 = arith.constant 0.000000e+00 : f32
    %1289 = vector.broadcast %cst_340 : f32 to vector<8x1xf32>
    %1290 = arith.subf %1289, %1288 : vector<8x1xf32>
    %1291 = math.exp %1290 : vector<8x1xf32>
    %cst_341 = arith.constant 1.000000e+00 : f32
    %1292 = vector.broadcast %cst_341 : f32 to vector<8x1xf32>
    %1293 = arith.addf %1292, %1291 : vector<8x1xf32>
    %1294 = math.log %1293 : vector<8x1xf32>
    %1295 = arith.addf %1287, %1294 : vector<8x1xf32>
    %cst_342 = arith.constant 0.000000e+00 : f32
    %1296 = vector.broadcast %cst_342 : f32 to vector<8x1xf32>
    %1297 = arith.subf %1296, %1295 : vector<8x1xf32>
    %1298 = math.exp %1297 : vector<8x1xf32>
    %1299 = arith.mulf %1298, %1206 : vector<8x1xf32>
    %1300 = arith.addf %1299, %1275 : vector<8x1xf32>
    %1301 = tpu.concatenate %1300, %1207 in 1 : vector<8x1xf32>, vector<8x1xf32> -> vector<8x2xf32>
    %1302 = arith.addf %1172, %1297 : vector<8x1xf32>
    %c0_343 = arith.constant 0 : index
    %c0_344 = arith.constant 0 : index
    %1303 = vector.load %arg4[%c0_343, %c0_344] : memref<8x2xf32, #tpu.memory_space<vmem>>, vector<8x2xf32>
    tpu.vector_store %arg4[%c0_343, %c0_344], %1301 {strides = array<i32>} : memref<8x2xf32, #tpu.memory_space<vmem>>, vector<8x2xf32>,
    %1304 = vector.shape_cast %1194 : vector<1x2xf32> to vector<1x1x2xf32>
    %cst_345 = arith.constant dense<0.000000e+00> : vector<1xf32>
    %1305 = vector.multi_reduction <add>, %1304, %cst_345 [1, 2] : vector<1x1x2xf32> to vector<1xf32>
    %1306 = vector.shape_cast %1305 : vector<1xf32> to vector<1x1x1xf32>
    %1307 = vector.extract %1306[0, 0, 0] : f32 from vector<1x1x1xf32>
    %1308 = vector.broadcast %1307 : f32 to vector<8x1xf32>
    %1309 = arith.addf %1302, %1308 : vector<8x1xf32>
    %c0_346 = arith.constant 0 : index
    %c0_347 = arith.constant 0 : index
    %1310 = memref.load %arg3[%c0_346, %c0_347] : memref<1x1xf32, #tpu.memory_space<smem>>
    %1311 = vector.broadcast %1310 : f32 to vector<8x1xf32>
    %1312 = arith.addf %1309, %1311 : vector<8x1xf32>
    %c0_348 = arith.constant 0 : index
    %c0_349 = arith.constant 0 : index
    %1313 = vector.load %arg5[%c0_348, %c0_349] : memref<8x1xf32, #tpu.memory_space<vmem>>, vector<8x1xf32>
    tpu.vector_store %arg5[%c0_348, %c0_349], %1312 {strides = array<i32>} : memref<8x1xf32, #tpu.memory_space<vmem>>, vector<8x1xf32>,
    return
  }
}

</mosaic_0001>

<llo_original>
// kernel: flow_level_forward.1
$region0: #{flow_level_forward.1}
  #allocation0 [shape = 'u32[]', space=smem, size = 0x4, offset = 0x4, fixed_abs, tag = 'smem constant byte address 0x4 - core index']
  #allocation1 [shape = 'u32[144,128]{1,0:T(1,128)}', space=vmem, size = 0x12000, scoped, tag = 'internal scratch']
  #allocation2 [shape = 'f32[1,1]{1,0:T(1,128)S(6)}', space=smem, size = 0x200, scoped, tag = 'scoped memory for flow_level_forward.1']
  %s0 = inlined_call_operand.vmem [shape: f32[8,2], index: 0, kind: input, shape index: {}]
  %s1 = inlined_call_operand.hbm [shape: f32[10,8,128], index: 1, kind: input, shape index: {}]
  %s2 = inlined_call_operand.hbm [shape: bf16[10,128,128], index: 2, kind: input, shape index: {}]
  %s3 = inlined_call_operand.<no memory space> [shape: f32[1,1], index: 3, kind: input, shape index: {}]
  %s4 = inlined_call_operand.vmem [shape: f32[8,2], index: 4, kind: output, shape index: {0}]
  %s5 = inlined_call_operand.vmem [shape: f32[8,1], index: 5, kind: output, shape index: {1}]
  %6 = xla_tuple %s4, %s5
  %s7 = sld [smem:[#allocation0]]
  $region42: #{flow_level_forward.1} parent=0
    _
  %s9 = ssub.s32 1, %s7
  %s10 = scalar_select 0, %s9, %s7
  %11 = sst [smem:[#allocation2]] %s3
  $region1: #{flow_level_forward.1} parent=0
    #allocation3 [shape = 'u8[40960]{0}', space=vmem, size = 0xa000, scoped, tag = 'input window, operand 1, single buffered']
    #allocation4 [shape = 's32[1]{0}', space=sflag, size = 0x4, scoped, tag = 'scoped memory for flow_level_forward.1']
    #allocation5 [shape = 'u8[327680]{0}', space=vmem, size = 0x50000, scoped, tag = 'input window, operand 2, single buffered']
    #allocation6 [shape = 's32[1]{0}', space=sflag, size = 0x4, scoped, tag = 'scoped memory for flow_level_forward.1']
    %12 = vsyncpa [#allocation4], 0
    %13 = vsyncpa [#allocation6], 0
    // Predicated region
    $region2: #{flow_level_forward.1} parent=1 // pred_check
      _
    $region3: #{flow_level_forward.1} parent=1 // pred_check_branch
      %15 = sbr.rel (0) target = $region5
    $region4: #{flow_level_forward.1} parent=1 // pred_region
      _
    $region5: #{flow_level_forward.1} parent=1 // pred_fallthru
      _
    // Predicated region
    $region6: #{flow_level_forward.1} parent=1 // pred_check
      _
    $region7: #{flow_level_forward.1} parent=1 // pred_check_branch
      %17 = sbr.rel (0) target = $region9
    $region8: #{flow_level_forward.1} parent=1 // pred_region
      %s19 = ssub.s32 1280, 1280
      %20 = vsyncadd [#allocation4], %s19
      %s21 = sshll.u32 [#allocation3], 4
      %s22 = int_to_ptr.vmem [resolvable:$true] %s21
      %27 = dma.hbm_to_vmem [thread:$0]  %s1, 1280, %s22, [#allocation4], 128, 128, 8
    $region9: #{flow_level_forward.1} parent=1 // pred_fallthru
      _
    // Predicated region
    $region10: #{flow_level_forward.1} parent=1 // pred_check
      _
    $region11: #{flow_level_forward.1} parent=1 // pred_check_branch
      %29 = sbr.rel (0) target = $region13
    $region12: #{flow_level_forward.1} parent=1 // pred_region
      %s31 = ssub.s32 10240, 10240
      %32 = vsyncadd [#allocation6], %s31
      %s33 = sshll.u32 [#allocation5], 4
      %s34 = int_to_ptr.vmem [resolvable:$true] %s33
      %39 = dma.hbm_to_vmem [thread:$0]  %s2, 10240, %s34, [#allocation6], 64, 64, 4
    $region13: #{flow_level_forward.1} parent=1 // pred_fallthru
      _
    // Predicated region
    $region14: #{flow_level_forward.1} parent=1 // pred_check
      _
    $region15: #{flow_level_forward.1} parent=1 // pred_check_branch
      %41 = sbr.rel (0) target = $region17
    $region16: #{flow_level_forward.1} parent=1 // pred_region
      _
    $region17: #{flow_level_forward.1} parent=1 // pred_fallthru
      _
    // Predicated region
    $region18: #{flow_level_forward.1} parent=1 // pred_check
      _
    $region19: #{flow_level_forward.1} parent=1 // pred_check_branch
      %43 = sbr.rel (0) target = $region21
    $region20: #{flow_level_forward.1} parent=1 // pred_region
      %44 = dma.done [#allocation4], 1280
    $region21: #{flow_level_forward.1} parent=1 // pred_fallthru
      _
    // Predicated region
    $region22: #{flow_level_forward.1} parent=1 // pred_check
      _
    $region23: #{flow_level_forward.1} parent=1 // pred_check_branch
      %46 = sbr.rel (0) target = $region25
    $region24: #{flow_level_forward.1} parent=1 // pred_region
      %47 = dma.done [#allocation6], 10240
    $region25: #{flow_level_forward.1} parent=1 // pred_fallthru
      _
    %v49 = vld [vmem:[%s0] sm:$0xff]
    %v50 = vld [vmem:[#allocation3] sm:$0xff]
    %vm51 = vcmask 15360
    %v52 = vsel %vm51, %v49, 0.0
    %v53 = vrot.slane %v52, 4
    %v54 = vadd.f32 %v52, %v53
    %v55 = vrot.slane %v54, 2
    %v56 = vadd.f32 %v54, %v55
    %v57 = vrot.slane %v56, 1
    %v58 = vadd.f32 %v56, %v57
    %v59 = vmul.f32 %v58, 0.125
    %v60 = vsub.f32 %v49, %v59
    %v61 = vmul.f32 %v60, %v60
    %v62 = vsel %vm51, %v61, 0.0
    %v63 = vrot.slane %v62, 4
    %v64 = vadd.f32 %v62, %v63
    %v65 = vrot.slane %v64, 2
    %v66 = vadd.f32 %v64, %v65
    %v67 = vrot.slane %v66, 1
    %v68 = vadd.f32 %v66, %v67
    %v69 = vmul.f32 %v68, 0.125
    %v70 = vrsqrt.pop %v69
    %v71 = vmul.f32 %v69, %v70
    %vm72 = vcmp.eq.f32.partialorder %v69, inf
    %v73 = vsel %vm72, %v69, %v71
    %vm74 = vcmp.eq.f32.partialorder %v69, 0.0
    %v75 = vand.u32 %v69, 2147483648
    %v76 = vsel %vm74, %v75, %v73
    %v77 = vadd.f32 %v76, 1e-06
    %v78 = vrcp.pop %v77
    %v79 = vmul.f32 %v60, %v78
    %v80 = vlog2.pop %v77
    %v81 = vmul.f32 %v80, 0.6931472
    %v82 = vsub.f32 0.0, %v81
    %v83 = vadd.f32 %v82, 0.0
    %85 = vset.pattern.permute.xlu0 0
    %86 = vperm.xlu0 %85, %v79
    %v87 = vpop.permute.xlu0 %86
    %v89 = vlaneseq
    %v90 = vshrl.u32 %v89, 7
    %v91 = vsub.s32 1, %v90
    %v92 = vrot.slane %v50, %v91
    %v93 = vmul.f32 %v87, %v92
    %94 = vset.pattern.permute.xlu0 1
    %95 = vperm.xlu0 %94, %v79
    %v96 = vpop.permute.xlu0 %95
    %v98 = vlaneseq
    %v99 = vshrl.u32 %v98, 7
    %v100 = vsub.s32 2, %v99
    %v101 = vrot.slane %v50, %v100
    %v102 = vmul.f32 %v96, %v101
    %v103 = vadd.f32 %v93, %v102
    %105 = vset.pattern.permute.xlu0 1
    %106 = vperm.xlu0 %105, %v103
    %v107 = vpop.permute.xlu0 %106
    %v109 = vlaneseq
    %v110 = vshrl.u32 %v109, 7
    %v111 = vsub.s32 0, %v110
    %v112 = vrot.slane %v50, %v111
    %v113 = vmul.f32 %v107, %v112
    %v114 = vrot.slane %v113, 4
    %v115 = vadd.f32 %v113, %v114
    %v116 = vrot.slane %v115, 2
    %v117 = vadd.f32 %v115, %v116
    %v118 = vrot.slane %v117, 1
    %v119 = vadd.f32 %v117, %v118
    %v120 = vmul.f32 %v113, %v113
    %v121 = vrot.slane %v120, 4
    %v122 = vadd.f32 %v120, %v121
    %v123 = vrot.slane %v122, 2
    %v124 = vadd.f32 %v122, %v123
    %v125 = vrot.slane %v124, 1
    %v126 = vadd.f32 %v124, %v125
    %v127 = vmul.f32 %v119, 0.125
    %v128 = vmul.f32 %v126, 0.125
    %v129 = vmul.f32 %v127, %v127
    %v130 = vsub.f32 %v128, %v129
    %v131 = vmax.f32 %v130, 0.0
    %v132 = vadd.f32 %v131, 1e-12
    %v133 = vrsqrt.pop %v132
    %v134 = vsub.f32 %v113, %v127
    %v135 = vmul.f32 %v134, %v133
    %v136 = vmax.f32 %v135, 0.0
    %v137 = vpack.c.bf16 %v136, %v136
    %v138 = vld [vmem:[#allocation5] sm:$0xf]
    %v139 = vld [vmem:[#allocation5 + $0x4] sm:$0xf]
    %v140 = vld [vmem:[#allocation5 + $0x8] sm:$0xf]
    %v141 = vld [vmem:[#allocation5 + $0xc] sm:$0xf]
    %v142 = vld [vmem:[#allocation5 + $0x10] sm:$0xf]
    %v143 = vld [vmem:[#allocation5 + $0x14] sm:$0xf]
    %v144 = vld [vmem:[#allocation5 + $0x18] sm:$0xf]
    %v145 = vld [vmem:[#allocation5 + $0x1c] sm:$0xf]
    %v146 = vld [vmem:[#allocation5 + $0x20] sm:$0xf]
    %v147 = vld [vmem:[#allocation5 + $0x24] sm:$0xf]
    %v148 = vld [vmem:[#allocation5 + $0x28] sm:$0xf]
    %v149 = vld [vmem:[#allocation5 + $0x2c] sm:$0xf]
    %v150 = vld [vmem:[#allocation5 + $0x30] sm:$0xf]
    %v151 = vld [vmem:[#allocation5 + $0x34] sm:$0xf]
    %v152 = vld [vmem:[#allocation5 + $0x38] sm:$0xf]
    %v153 = vld [vmem:[#allocation5 + $0x3c] sm:$0xf]
    %v170 = vunpack.c.l.b16 %v138
    %v171 = vunpack.c.l.b16 %v139
    %v172 = vunpack.c.l.b16 %v140
    %v173 = vunpack.c.l.b16 %v141
    %v174 = vunpack.c.l.b16 %v142
    %v175 = vunpack.c.l.b16 %v143
    %v176 = vunpack.c.l.b16 %v144
    %v177 = vunpack.c.l.b16 %v145
    %v178 = vunpack.c.l.b16 %v146
    %v179 = vunpack.c.l.b16 %v147
    %v180 = vunpack.c.l.b16 %v148
    %v181 = vunpack.c.l.b16 %v149
    %v182 = vunpack.c.l.b16 %v150
    %v183 = vunpack.c.l.b16 %v151
    %v184 = vunpack.c.l.b16 %v152
    %v185 = vunpack.c.l.b16 %v153
    %v186 = vpack.c.b16 %v171, %v170
    %v187 = vpack.c.b16 %v173, %v172
    %v188 = vpack.c.b16 %v175, %v174
    %v189 = vpack.c.b16 %v177, %v176
    %v190 = vpack.c.b16 %v179, %v178
    %v191 = vpack.c.b16 %v181, %v180
    %v192 = vpack.c.b16 %v183, %v182
    %v193 = vpack.c.b16 %v185, %v184
    %202 = vmatprep.subr.bf16.mxu0 0
    %203 = vmatpush1.bf16.msra.mxu0 %v186
    %204 = vmatprep.subr.bf16.mxu0 0
    %205 = vmatpush1.bf16.msra.mxu0 %v187
    %206 = vmatprep.subr.bf16.mxu0 0
    %207 = vmatpush1.bf16.msra.mxu0 %v188
    %208 = vmatprep.subr.bf16.mxu0 0
    %209 = vmatpush1.bf16.msra.mxu0 %v189
    %210 = vmatprep.subr.bf16.mxu0 0
    %211 = vmatpush1.bf16.msra.mxu0 %v190
    %212 = vmatprep.subr.bf16.mxu0 0
    %213 = vmatpush1.bf16.msra.mxu0 %v191
    %214 = vmatprep.subr.bf16.mxu0 0
    %215 = vmatpush1.bf16.msra.mxu0 %v192
    %216 = vmatprep.subr.bf16.mxu0 0
    %217 = vmatpush1.bf16.msra.mxu0 %v193
    %218 = vmatprep.subr.bf16.mxu0 0
    %219 = vmatpush1.bf16.msra.mxu0 0
    %220 = vmatprep.subr.bf16.mxu0 0
    %221 = vmatpush1.bf16.msra.mxu0 0
    %222 = vmatprep.subr.bf16.mxu0 0
    %223 = vmatpush1.bf16.msra.mxu0 0
    %224 = vmatprep.subr.bf16.mxu0 0
    %225 = vmatpush1.bf16.msra.mxu0 0
    %226 = vmatprep.subr.bf16.mxu0 0
    %227 = vmatpush1.bf16.msra.mxu0 0
    %228 = vmatprep.subr.bf16.mxu0 0
    %229 = vmatpush1.bf16.msra.mxu0 0
    %230 = vmatprep.subr.bf16.mxu0 0
    %231 = vmatpush1.bf16.msra.mxu0 0
    %232 = vmatprep.subr.bf16.mxu0 0
    %233 = vmatpush1.bf16.msra.mxu0 0
    %234 = vmatprep.mubr.bf16.mxu0 0
    %235 = vmatmul.mubr.bf16.gmra.mrb[0].mxu0 %v137
    %v236 = vpop.f32.mrb[0].mxu0
    %v237 = vadd.f32 0.0, %v236
    %v238 = vpop.f32.mrb[0].mxu0
    %v239 = vpop.f32.mrb[0].mxu0
    %v240 = vpop.f32.mrb[0].mxu0
    %241 = vdwg.mxu0
    %v242 = vrot.slane %v237, 4
    %v243 = vadd.f32 %v237, %v242
    %v244 = vrot.slane %v243, 2
    %v245 = vadd.f32 %v243, %v244
    %v246 = vrot.slane %v245, 1
    %v247 = vadd.f32 %v245, %v246
    %v248 = vmul.f32 %v237, %v237
    %v249 = vrot.slane %v248, 4
    %v250 = vadd.f32 %v248, %v249
    %v251 = vrot.slane %v250, 2
    %v252 = vadd.f32 %v250, %v251
    %v253 = vrot.slane %v252, 1
    %v254 = vadd.f32 %v252, %v253
    %v255 = vmul.f32 %v247, 0.125
    %v256 = vmul.f32 %v254, 0.125
    %v257 = vmul.f32 %v255, %v255
    %v258 = vsub.f32 %v256, %v257
    %v259 = vmax.f32 %v258, 0.0
    %v260 = vadd.f32 %v259, 1e-12
    %v261 = vrsqrt.pop %v260
    %v262 = vsub.f32 %v237, %v255
    %v263 = vmul.f32 %v262, %v261
    %v264 = vmax.f32 %v263, 0.0
    %v265 = vlaneseq
    %v266 = vshrl.u32 %v265, 7
    %v267 = vsub.s32 3, %v266
    %v268 = vrot.slane %v50, %v267
    %v269 = vmul.f32 %v264, %v268
    %270 = vadd.xlane.f32.xlu0 %v269
    %v271 = vpop.xlane.xlu0 %270
    %v272 = vlaneseq
    %v273 = vshrl.u32 %v272, 7
    %v274 = vsub.s32 4, %v273
    %v275 = vrot.slane %v50, %v274
    %v276 = vmul.f32 %v264, %v275
    %277 = vadd.xlane.f32.xlu0 %v276
    %v278 = vpop.xlane.xlu0 %277
    %v279 = vlaneseq
    %v280 = vshrl.u32 %v279, 7
    %v281 = vsub.s32 5, %v280
    %v282 = vrot.slane %v50, %v281
    %v283 = vadd.f32 %v271, %v282
    %v284 = vlaneseq
    %v285 = vshrl.u32 %v284, 7
    %v286 = vsub.s32 6, %v285
    %v287 = vrot.slane %v50, %v286
    %v288 = vmul.f32 %v283, %v287
    %v289 = vadd.f32 %v278, %v282
    %v290 = vmul.f32 %v289, %v287
    %v291 = vadd.f32 %v290, 2.0
    %v292 = vsub.f32 0.0, %v291
    %v293 = vmax.f32 %v292, 0.0
    %v294 = vand.u32 2147483647, %v291
    %v295 = vsub.f32 0.0, %v294
    %v296 = vmul.f32 %v295, 1.442695
    %v297 = vpow.pop %v296
    %v298 = vadd.f32 %v297, 1.0
    %v299 = vlog2.pop %v298
    %v300 = vmul.f32 %v299, 0.6931472
    %v301 = vadd.f32 %v293, %v300
    %v302 = vsub.f32 0.0, %v301
    %v303 = vmul.f32 %v302, 1.442695
    %v304 = vpow.pop %v303
    %305 = vrot.lane.b32.xlu0 %v103, 1
    %v306 = vpop.permute.xlu0 %305
    %v308 = vmul.f32 %v304, %v306
    %310 = vrot.lane.b32.xlu0 %v288, 1
    %v311 = vpop.permute.xlu0 %310
    %v313 = vadd.f32 %v308, %v311
    %315 = vrot.lane.b32.xlu0 %v313, 127
    %v316 = vpop.permute.xlu0 %315
    %vm318 = vcmask 7168
    %v319 = vsel %vm318, %v316, %v103
    %v320 = vadd.f32 %v302, 0.0
    %s321 = scalar_lea.vmem [#allocation3], 8
    %v322 = vld [vmem:[%s321] sm:$0xff]
    %v323 = vsel %vm51, %v319, 0.0
    %v324 = vrot.slane %v323, 4
    %v325 = vadd.f32 %v323, %v324
    %v326 = vrot.slane %v325, 2
    %v327 = vadd.f32 %v325, %v326
    %v328 = vrot.slane %v327, 1
    %v329 = vadd.f32 %v327, %v328
    %v330 = vmul.f32 %v329, 0.125
    %v331 = vsub.f32 %v319, %v330
    %v332 = vmul.f32 %v331, %v331
    %v333 = vsel %vm51, %v332, 0.0
    %v334 = vrot.slane %v333, 4
    %v335 = vadd.f32 %v333, %v334
    %v336 = vrot.slane %v335, 2
    %v337 = vadd.f32 %v335, %v336
    %v338 = vrot.slane %v337, 1
    %v339 = vadd.f32 %v337, %v338
    %v340 = vmul.f32 %v339, 0.125
    %v341 = vrsqrt.pop %v340
    %v342 = vmul.f32 %v340, %v341
    %vm343 = vcmp.eq.f32.partialorder %v340, inf
    %v344 = vsel %vm343, %v340, %v342
    %vm345 = vcmp.eq.f32.partialorder %v340, 0.0
    %v346 = vand.u32 %v340, 2147483648
    %v347 = vsel %vm345, %v346, %v344
    %v348 = vadd.f32 %v347, 1e-06
    %v349 = vrcp.pop %v348
    %v350 = vmul.f32 %v331, %v349
    %v351 = vlog2.pop %v348
    %v352 = vmul.f32 %v351, 0.6931472
    %v353 = vsub.f32 0.0, %v352
    %v354 = vadd.f32 %v83, %v353
    %356 = vset.pattern.permute.xlu0 0
    %357 = vperm.xlu0 %356, %v350
    %v358 = vpop.permute.xlu0 %357
    %v360 = vlaneseq
    %v361 = vshrl.u32 %v360, 7
    %v362 = vsub.s32 1, %v361
    %v363 = vrot.slane %v322, %v362
    %v364 = vmul.f32 %v358, %v363
    %365 = vset.pattern.permute.xlu0 1
    %366 = vperm.xlu0 %365, %v350
    %v367 = vpop.permute.xlu0 %366
    %v369 = vlaneseq
    %v370 = vshrl.u32 %v369, 7
    %v371 = vsub.s32 2, %v370
    %v372 = vrot.slane %v322, %v371
    %v373 = vmul.f32 %v367, %v372
    %v374 = vadd.f32 %v364, %v373
    %376 = vset.pattern.permute.xlu0 1
    %377 = vperm.xlu0 %376, %v374
    %v378 = vpop.permute.xlu0 %377
    %v380 = vlaneseq
    %v381 = vshrl.u32 %v380, 7
    %v382 = vsub.s32 0, %v381
    %v383 = vrot.slane %v322, %v382
    %v384 = vmul.f32 %v378, %v383
    %v385 = vrot.slane %v384, 4
    %v386 = vadd.f32 %v384, %v385
    %v387 = vrot.slane %v386, 2
    %v388 = vadd.f32 %v386, %v387
    %v389 = vrot.slane %v388, 1
    %v390 = vadd.f32 %v388, %v389
    %v391 = vmul.f32 %v384, %v384
    %v392 = vrot.slane %v391, 4
    %v393 = vadd.f32 %v391, %v392
    %v394 = vrot.slane %v393, 2
    %v395 = vadd.f32 %v393, %v394
    %v396 = vrot.slane %v395, 1
    %v397 = vadd.f32 %v395, %v396
    %v398 = vmul.f32 %v390, 0.125
    %v399 = vmul.f32 %v397, 0.125
    %v400 = vmul.f32 %v398, %v398
    %v401 = vsub.f32 %v399, %v400
    %v402 = vmax.f32 %v401, 0.0
    %v403 = vadd.f32 %v402, 1e-12
    %v404 = vrsqrt.pop %v403
    %v405 = vsub.f32 %v384, %v398
    %v406 = vmul.f32 %v405, %v404
    %v407 = vmax.f32 %v406, 0.0
    %v408 = vpack.c.bf16 %v407, %v407
    %s409 = scalar_lea.vmem [#allocation5], 64
    %v410 = vld [vmem:[%s409] sm:$0xf]
    %v411 = vld [vmem:[%s409 + $0x4] sm:$0xf]
    %v412 = vld [vmem:[%s409 + $0x8] sm:$0xf]
    %v413 = vld [vmem:[%s409 + $0xc] sm:$0xf]
    %v414 = vld [vmem:[%s409 + $0x10] sm:$0xf]
    %v415 = vld [vmem:[%s409 + $0x14] sm:$0xf]
    %v416 = vld [vmem:[%s409 + $0x18] sm:$0xf]
    %v417 = vld [vmem:[%s409 + $0x1c] sm:$0xf]
    %v418 = vld [vmem:[%s409 + $0x20] sm:$0xf]
    %v419 = vld [vmem:[%s409 + $0x24] sm:$0xf]
    %v420 = vld [vmem:[%s409 + $0x28] sm:$0xf]
    %v421 = vld [vmem:[%s409 + $0x2c] sm:$0xf]
    %v422 = vld [vmem:[%s409 + $0x30] sm:$0xf]
    %v423 = vld [vmem:[%s409 + $0x34] sm:$0xf]
    %v424 = vld [vmem:[%s409 + $0x38] sm:$0xf]
    %v425 = vld [vmem:[%s409 + $0x3c] sm:$0xf]
    %v442 = vunpack.c.l.b16 %v410
    %v443 = vunpack.c.l.b16 %v411
    %v444 = vunpack.c.l.b16 %v412
    %v445 = vunpack.c.l.b16 %v413
    %v446 = vunpack.c.l.b16 %v414
    %v447 = vunpack.c.l.b16 %v415
    %v448 = vunpack.c.l.b16 %v416
    %v449 = vunpack.c.l.b16 %v417
    %v450 = vunpack.c.l.b16 %v418
    %v451 = vunpack.c.l.b16 %v419
    %v452 = vunpack.c.l.b16 %v420
    %v453 = vunpack.c.l.b16 %v421
    %v454 = vunpack.c.l.b16 %v422
    %v455 = vunpack.c.l.b16 %v423
    %v456 = vunpack.c.l.b16 %v424
    %v457 = vunpack.c.l.b16 %v425
    %v458 = vpack.c.b16 %v443, %v442
    %v459 = vpack.c.b16 %v445, %v444
    %v460 = vpack.c.b16 %v447, %v446
    %v461 = vpack.c.b16 %v449, %v448
    %v462 = vpack.c.b16 %v451, %v450
    %v463 = vpack.c.b16 %v453, %v452
    %v464 = vpack.c.b16 %v455, %v454
    %v465 = vpack.c.b16 %v457, %v456
    %474 = vmatprep.subr.bf16.mxu0 0
    %475 = vmatpush1.bf16.msra.mxu0 %v458
    %476 = vmatprep.subr.bf16.mxu0 0
    %477 = vmatpush1.bf16.msra.mxu0 %v459
    %478 = vmatprep.subr.bf16.mxu0 0
    %479 = vmatpush1.bf16.msra.mxu0 %v460
    %480 = vmatprep.subr.bf16.mxu0 0
    %481 = vmatpush1.bf16.msra.mxu0 %v461
    %482 = vmatprep.subr.bf16.mxu0 0
    %483 = vmatpush1.bf16.msra.mxu0 %v462
    %484 = vmatprep.subr.bf16.mxu0 0
    %485 = vmatpush1.bf16.msra.mxu0 %v463
    %486 = vmatprep.subr.bf16.mxu0 0
    %487 = vmatpush1.bf16.msra.mxu0 %v464
    %488 = vmatprep.subr.bf16.mxu0 0
    %489 = vmatpush1.bf16.msra.mxu0 %v465
    %490 = vmatprep.subr.bf16.mxu0 0
    %491 = vmatpush1.bf16.msra.mxu0 0
    %492 = vmatprep.subr.bf16.mxu0 0
    %493 = vmatpush1.bf16.msra.mxu0 0
    %494 = vmatprep.subr.bf16.mxu0 0
    %495 = vmatpush1.bf16.msra.mxu0 0
    %496 = vmatprep.subr.bf16.mxu0 0
    %497 = vmatpush1.bf16.msra.mxu0 0
    %498 = vmatprep.subr.bf16.mxu0 0
    %499 = vmatpush1.bf16.msra.mxu0 0
    %500 = vmatprep.subr.bf16.mxu0 0
    %501 = vmatpush1.bf16.msra.mxu0 0
    %502 = vmatprep.subr.bf16.mxu0 0
    %503 = vmatpush1.bf16.msra.mxu0 0
    %504 = vmatprep.subr.bf16.mxu0 0
    %505 = vmatpush1.bf16.msra.mxu0 0
    %506 = vmatprep.mubr.bf16.mxu0 0
    %507 = vmatmul.mubr.bf16.gmra.mrb[0].mxu0 %v408
    %v508 = vpop.f32.mrb[0].mxu0
    %v509 = vadd.f32 0.0, %v508
    %v510 = vpop.f32.mrb[0].mxu0
    %v511 = vpop.f32.mrb[0].mxu0
    %v512 = vpop.f32.mrb[0].mxu0
    %513 = vdwg.mxu0
    %v514 = vrot.slane %v509, 4
    %v515 = vadd.f32 %v509, %v514
    %v516 = vrot.slane %v515, 2
    %v517 = vadd.f32 %v515, %v516
    %v518 = vrot.slane %v517, 1
    %v519 = vadd.f32 %v517, %v518
    %v520 = vmul.f32 %v509, %v509
    %v521 = vrot.slane %v520, 4
    %v522 = vadd.f32 %v520, %v521
    %v523 = vrot.slane %v522, 2
    %v524 = vadd.f32 %v522, %v523
    %v525 = vrot.slane %v524, 1
    %v526 = vadd.f32 %v524, %v525
    %v527 = vmul.f32 %v519, 0.125
    %v528 = vmul.f32 %v526, 0.125
    %v529 = vmul.f32 %v527, %v527
    %v530 = vsub.f32 %v528, %v529
    %v531 = vmax.f32 %v530, 0.0
    %v532 = vadd.f32 %v531, 1e-12
    %v533 = vrsqrt.pop %v532
    %v534 = vsub.f32 %v509, %v527
    %v535 = vmul.f32 %v534, %v533
    %v536 = vmax.f32 %v535, 0.0
    %v537 = vlaneseq
    %v538 = vshrl.u32 %v537, 7
    %v539 = vsub.s32 3, %v538
    %v540 = vrot.slane %v322, %v539
    %v541 = vmul.f32 %v536, %v540
    %542 = vadd.xlane.f32.xlu0 %v541
    %v543 = vpop.xlane.xlu0 %542
    %v544 = vlaneseq
    %v545 = vshrl.u32 %v544, 7
    %v546 = vsub.s32 4, %v545
    %v547 = vrot.slane %v322, %v546
    %v548 = vmul.f32 %v536, %v547
    %549 = vadd.xlane.f32.xlu0 %v548
    %v550 = vpop.xlane.xlu0 %549
    %v551 = vlaneseq
    %v552 = vshrl.u32 %v551, 7
    %v553 = vsub.s32 5, %v552
    %v554 = vrot.slane %v322, %v553
    %v555 = vadd.f32 %v543, %v554
    %v556 = vlaneseq
    %v557 = vshrl.u32 %v556, 7
    %v558 = vsub.s32 6, %v557
    %v559 = vrot.slane %v322, %v558
    %v560 = vmul.f32 %v555, %v559
    %v561 = vadd.f32 %v550, %v554
    %v562 = vmul.f32 %v561, %v559
    %v563 = vadd.f32 %v562, 2.0
    %v564 = vsub.f32 0.0, %v563
    %v565 = vmax.f32 %v564, 0.0
    %v566 = vand.u32 2147483647, %v563
    %v567 = vsub.f32 0.0, %v566
    %v568 = vmul.f32 %v567, 1.442695
    %v569 = vpow.pop %v568
    %v570 = vadd.f32 %v569, 1.0
    %v571 = vlog2.pop %v570
    %v572 = vmul.f32 %v571, 0.6931472
    %v573 = vadd.f32 %v565, %v572
    %v574 = vsub.f32 0.0, %v573
    %v575 = vmul.f32 %v574, 1.442695
    %v576 = vpow.pop %v575
    %577 = vrot.lane.b32.xlu0 %v374, 1
    %v578 = vpop.permute.xlu0 %577
    %v580 = vmul.f32 %v576, %v578
    %582 = vrot.lane.b32.xlu0 %v560, 1
    %v583 = vpop.permute.xlu0 %582
    %v585 = vadd.f32 %v580, %v583
    %587 = vrot.lane.b32.xlu0 %v585, 127
    %v588 = vpop.permute.xlu0 %587
    %v590 = vsel %vm318, %v588, %v374
    %v591 = vadd.f32 %v320, %v574
    %s592 = scalar_lea.vmem [#allocation3], 16
    %v593 = vld [vmem:[%s592] sm:$0xff]
    %v594 = vsel %vm51, %v590, 0.0
    %v595 = vrot.slane %v594, 4
    %v596 = vadd.f32 %v594, %v595
    %v597 = vrot.slane %v596, 2
    %v598 = vadd.f32 %v596, %v597
    %v599 = vrot.slane %v598, 1
    %v600 = vadd.f32 %v598, %v599
    %v601 = vmul.f32 %v600, 0.125
    %v602 = vsub.f32 %v590, %v601
    %v603 = vmul.f32 %v602, %v602
    %v604 = vsel %vm51, %v603, 0.0
    %v605 = vrot.slane %v604, 4
    %v606 = vadd.f32 %v604, %v605
    %v607 = vrot.slane %v606, 2
    %v608 = vadd.f32 %v606, %v607
    %v609 = vrot.slane %v608, 1
    %v610 = vadd.f32 %v608, %v609
    %v611 = vmul.f32 %v610, 0.125
    %v612 = vrsqrt.pop %v611
    %v613 = vmul.f32 %v611, %v612
    %vm614 = vcmp.eq.f32.partialorder %v611, inf
    %v615 = vsel %vm614, %v611, %v613
    %vm616 = vcmp.eq.f32.partialorder %v611, 0.0
    %v617 = vand.u32 %v611, 2147483648
    %v618 = vsel %vm616, %v617, %v615
    %v619 = vadd.f32 %v618, 1e-06
    %v620 = vrcp.pop %v619
    %v621 = vmul.f32 %v602, %v620
    %v622 = vlog2.pop %v619
    %v623 = vmul.f32 %v622, 0.6931472
    %v624 = vsub.f32 0.0, %v623
    %v625 = vadd.f32 %v354, %v624
    %627 = vset.pattern.permute.xlu0 0
    %628 = vperm.xlu0 %627, %v621
    %v629 = vpop.permute.xlu0 %628
    %v631 = vlaneseq
    %v632 = vshrl.u32 %v631, 7
    %v633 = vsub.s32 1, %v632
    %v634 = vrot.slane %v593, %v633
    %v635 = vmul.f32 %v629, %v634
    %636 = vset.pattern.permute.xlu0 1
    %637 = vperm.xlu0 %636, %v621
    %v638 = vpop.permute.xlu0 %637
    %v640 = vlaneseq
    %v641 = vshrl.u32 %v640, 7
    %v642 = vsub.s32 2, %v641
    %v643 = vrot.slane %v593, %v642
    %v644 = vmul.f32 %v638, %v643
    %v645 = vadd.f32 %v635, %v644
    %647 = vset.pattern.permute.xlu0 1
    %648 = vperm.xlu0 %647, %v645
    %v649 = vpop.permute.xlu0 %648
    %v651 = vlaneseq
    %v652 = vshrl.u32 %v651, 7
    %v653 = vsub.s32 0, %v652
    %v654 = vrot.slane %v593, %v653
    %v655 = vmul.f32 %v649, %v654
    %v656 = vrot.slane %v655, 4
    %v657 = vadd.f32 %v655, %v656
    %v658 = vrot.slane %v657, 2
    %v659 = vadd.f32 %v657, %v658
    %v660 = vrot.slane %v659, 1
    %v661 = vadd.f32 %v659, %v660
    %v662 = vmul.f32 %v655, %v655
    %v663 = vrot.slane %v662, 4
    %v664 = vadd.f32 %v662, %v663
    %v665 = vrot.slane %v664, 2
    %v666 = vadd.f32 %v664, %v665
    %v667 = vrot.slane %v666, 1
    %v668 = vadd.f32 %v666, %v667
    %v669 = vmul.f32 %v661, 0.125
    %v670 = vmul.f32 %v668, 0.125
    %v671 = vmul.f32 %v669, %v669
    %v672 = vsub.f32 %v670, %v671
    %v673 = vmax.f32 %v672, 0.0
    %v674 = vadd.f32 %v673, 1e-12
    %v675 = vrsqrt.pop %v674
    %v676 = vsub.f32 %v655, %v669
    %v677 = vmul.f32 %v676, %v675
    %v678 = vmax.f32 %v677, 0.0
    %v679 = vpack.c.bf16 %v678, %v678
    %s680 = scalar_lea.vmem [#allocation5], 128
    %v681 = vld [vmem:[%s680] sm:$0xf]
    %v682 = vld [vmem:[%s680 + $0x4] sm:$0xf]
    %v683 = vld [vmem:[%s680 + $0x8] sm:$0xf]
    %v684 = vld [vmem:[%s680 + $0xc] sm:$0xf]
    %v685 = vld [vmem:[%s680 + $0x10] sm:$0xf]
    %v686 = vld [vmem:[%s680 + $0x14] sm:$0xf]
    %v687 = vld [vmem:[%s680 + $0x18] sm:$0xf]
    %v688 = vld [vmem:[%s680 + $0x1c] sm:$0xf]
    %v689 = vld [vmem:[%s680 + $0x20] sm:$0xf]
    %v690 = vld [vmem:[%s680 + $0x24] sm:$0xf]
    %v691 = vld [vmem:[%s680 + $0x28] sm:$0xf]
    %v692 = vld [vmem:[%s680 + $0x2c] sm:$0xf]
    %v693 = vld [vmem:[%s680 + $0x30] sm:$0xf]
    %v694 = vld [vmem:[%s680 + $0x34] sm:$0xf]
    %v695 = vld [vmem:[%s680 + $0x38] sm:$0xf]
    %v696 = vld [vmem:[%s680 + $0x3c] sm:$0xf]
    %v713 = vunpack.c.l.b16 %v681
    %v714 = vunpack.c.l.b16 %v682
    %v715 = vunpack.c.l.b16 %v683
    %v716 = vunpack.c.l.b16 %v684
    %v717 = vunpack.c.l.b16 %v685
    %v718 = vunpack.c.l.b16 %v686
    %v719 = vunpack.c.l.b16 %v687
    %v720 = vunpack.c.l.b16 %v688
    %v721 = vunpack.c.l.b16 %v689
    %v722 = vunpack.c.l.b16 %v690
    %v723 = vunpack.c.l.b16 %v691
    %v724 = vunpack.c.l.b16 %v692
    %v725 = vunpack.c.l.b16 %v693
    %v726 = vunpack.c.l.b16 %v694
    %v727 = vunpack.c.l.b16 %v695
    %v728 = vunpack.c.l.b16 %v696
    %v729 = vpack.c.b16 %v714, %v713
    %v730 = vpack.c.b16 %v716, %v715
    %v731 = vpack.c.b16 %v718, %v717
    %v732 = vpack.c.b16 %v720, %v719
    %v733 = vpack.c.b16 %v722, %v721
    %v734 = vpack.c.b16 %v724, %v723
    %v735 = vpack.c.b16 %v726, %v725
    %v736 = vpack.c.b16 %v728, %v727
    %745 = vmatprep.subr.bf16.mxu0 0
    %746 = vmatpush1.bf16.msra.mxu0 %v729
    %747 = vmatprep.subr.bf16.mxu0 0
    %748 = vmatpush1.bf16.msra.mxu0 %v730
    %749 = vmatprep.subr.bf16.mxu0 0
    %750 = vmatpush1.bf16.msra.mxu0 %v731
    %751 = vmatprep.subr.bf16.mxu0 0
    %752 = vmatpush1.bf16.msra.mxu0 %v732
    %753 = vmatprep.subr.bf16.mxu0 0
    %754 = vmatpush1.bf16.msra.mxu0 %v733
    %755 = vmatprep.subr.bf16.mxu0 0
    %756 = vmatpush1.bf16.msra.mxu0 %v734
    %757 = vmatprep.subr.bf16.mxu0 0
    %758 = vmatpush1.bf16.msra.mxu0 %v735
    %759 = vmatprep.subr.bf16.mxu0 0
    %760 = vmatpush1.bf16.msra.mxu0 %v736
    %761 = vmatprep.subr.bf16.mxu0 0
    %762 = vmatpush1.bf16.msra.mxu0 0
    %763 = vmatprep.subr.bf16.mxu0 0
    %764 = vmatpush1.bf16.msra.mxu0 0
    %765 = vmatprep.subr.bf16.mxu0 0
    %766 = vmatpush1.bf16.msra.mxu0 0
    %767 = vmatprep.subr.bf16.mxu0 0
    %768 = vmatpush1.bf16.msra.mxu0 0
    %769 = vmatprep.subr.bf16.mxu0 0
    %770 = vmatpush1.bf16.msra.mxu0 0
    %771 = vmatprep.subr.bf16.mxu0 0
    %772 = vmatpush1.bf16.msra.mxu0 0
    %773 = vmatprep.subr.bf16.mxu0 0
    %774 = vmatpush1.bf16.msra.mxu0 0
    %775 = vmatprep.subr.bf16.mxu0 0
    %776 = vmatpush1.bf16.msra.mxu0 0
    %777 = vmatprep.mubr.bf16.mxu0 0
    %778 = vmatmul.mubr.bf16.gmra.mrb[0].mxu0 %v679
    %v779 = vpop.f32.mrb[0].mxu0
    %v780 = vadd.f32 0.0, %v779
    %v781 = vpop.f32.mrb[0].mxu0
    %v782 = vpop.f32.mrb[0].mxu0
    %v783 = vpop.f32.mrb[0].mxu0
    %784 = vdwg.mxu0
    %v785 = vrot.slane %v780, 4
    %v786 = vadd.f32 %v780, %v785
    %v787 = vrot.slane %v786, 2
    %v788 = vadd.f32 %v786, %v787
    %v789 = vrot.slane %v788, 1
    %v790 = vadd.f32 %v788, %v789
    %v791 = vmul.f32 %v780, %v780
    %v792 = vrot.slane %v791, 4
    %v793 = vadd.f32 %v791, %v792
    %v794 = vrot.slane %v793, 2
    %v795 = vadd.f32 %v793, %v794
    %v796 = vrot.slane %v795, 1
    %v797 = vadd.f32 %v795, %v796
    %v798 = vmul.f32 %v790, 0.125
    %v799 = vmul.f32 %v797, 0.125
    %v800 = vmul.f32 %v798, %v798
    %v801 = vsub.f32 %v799, %v800
    %v802 = vmax.f32 %v801, 0.0
    %v803 = vadd.f32 %v802, 1e-12
    %v804 = vrsqrt.pop %v803
    %v805 = vsub.f32 %v780, %v798
    %v806 = vmul.f32 %v805, %v804
    %v807 = vmax.f32 %v806, 0.0
    %v808 = vlaneseq
    %v809 = vshrl.u32 %v808, 7
    %v810 = vsub.s32 3, %v809
    %v811 = vrot.slane %v593, %v810
    %v812 = vmul.f32 %v807, %v811
    %813 = vadd.xlane.f32.xlu0 %v812
    %v814 = vpop.xlane.xlu0 %813
    %v815 = vlaneseq
    %v816 = vshrl.u32 %v815, 7
    %v817 = vsub.s32 4, %v816
    %v818 = vrot.slane %v593, %v817
    %v819 = vmul.f32 %v807, %v818
    %820 = vadd.xlane.f32.xlu0 %v819
    %v821 = vpop.xlane.xlu0 %820
    %v822 = vlaneseq
    %v823 = vshrl.u32 %v822, 7
    %v824 = vsub.s32 5, %v823
    %v825 = vrot.slane %v593, %v824
    %v826 = vadd.f32 %v814, %v825
    %v827 = vlaneseq
    %v828 = vshrl.u32 %v827, 7
    %v829 = vsub.s32 6, %v828
    %v830 = vrot.slane %v593, %v829
    %v831 = vmul.f32 %v826, %v830
    %v832 = vadd.f32 %v821, %v825
    %v833 = vmul.f32 %v832, %v830
    %v834 = vadd.f32 %v833, 2.0
    %v835 = vsub.f32 0.0, %v834
    %v836 = vmax.f32 %v835, 0.0
    %v837 = vand.u32 2147483647, %v834
    %v838 = vsub.f32 0.0, %v837
    %v839 = vmul.f32 %v838, 1.442695
    %v840 = vpow.pop %v839
    %v841 = vadd.f32 %v840, 1.0
    %v842 = vlog2.pop %v841
    %v843 = vmul.f32 %v842, 0.6931472
    %v844 = vadd.f32 %v836, %v843
    %v845 = vsub.f32 0.0, %v844
    %v846 = vmul.f32 %v845, 1.442695
    %v847 = vpow.pop %v846
    %848 = vrot.lane.b32.xlu0 %v645, 1
    %v849 = vpop.permute.xlu0 %848
    %v851 = vmul.f32 %v847, %v849
    %853 = vrot.lane.b32.xlu0 %v831, 1
    %v854 = vpop.permute.xlu0 %853
    %v856 = vadd.f32 %v851, %v854
    %858 = vrot.lane.b32.xlu0 %v856, 127
    %v859 = vpop.permute.xlu0 %858
    %v861 = vsel %vm318, %v859, %v645
    %v862 = vadd.f32 %v591, %v845
    %s863 = scalar_lea.vmem [#allocation3], 24
    %v864 = vld [vmem:[%s863] sm:$0xff]
    %v865 = vsel %vm51, %v861, 0.0
    %v866 = vrot.slane %v865, 4
    %v867 = vadd.f32 %v865, %v866
    %v868 = vrot.slane %v867, 2
    %v869 = vadd.f32 %v867, %v868
    %v870 = vrot.slane %v869, 1
    %v871 = vadd.f32 %v869, %v870
    %v872 = vmul.f32 %v871, 0.125
    %v873 = vsub.f32 %v861, %v872
    %v874 = vmul.f32 %v873, %v873
    %v875 = vsel %vm51, %v874, 0.0
    %v876 = vrot.slane %v875, 4
    %v877 = vadd.f32 %v875, %v876
    %v878 = vrot.slane %v877, 2
    %v879 = vadd.f32 %v877, %v878
    %v880 = vrot.slane %v879, 1
    %v881 = vadd.f32 %v879, %v880
    %v882 = vmul.f32 %v881, 0.125
    %v883 = vrsqrt.pop %v882
    %v884 = vmul.f32 %v882, %v883
    %vm885 = vcmp.eq.f32.partialorder %v882, inf
    %v886 = vsel %vm885, %v882, %v884
    %vm887 = vcmp.eq.f32.partialorder %v882, 0.0
    %v888 = vand.u32 %v882, 2147483648
    %v889 = vsel %vm887, %v888, %v886
    %v890 = vadd.f32 %v889, 1e-06
    %v891 = vrcp.pop %v890
    %v892 = vmul.f32 %v873, %v891
    %v893 = vlog2.pop %v890
    %v894 = vmul.f32 %v893, 0.6931472
    %v895 = vsub.f32 0.0, %v894
    %v896 = vadd.f32 %v625, %v895
    %898 = vset.pattern.permute.xlu0 0
    %899 = vperm.xlu0 %898, %v892
    %v900 = vpop.permute.xlu0 %899
    %v902 = vlaneseq
    %v903 = vshrl.u32 %v902, 7
    %v904 = vsub.s32 1, %v903
    %v905 = vrot.slane %v864, %v904
    %v906 = vmul.f32 %v900, %v905
    %907 = vset.pattern.permute.xlu0 1
    %908 = vperm.xlu0 %907, %v892
    %v909 = vpop.permute.xlu0 %908
    %v911 = vlaneseq
    %v912 = vshrl.u32 %v911, 7
    %v913 = vsub.s32 2, %v912
    %v914 = vrot.slane %v864, %v913
    %v915 = vmul.f32 %v909, %v914
    %v916 = vadd.f32 %v906, %v915
    %918 = vset.pattern.permute.xlu0 1
    %919 = vperm.xlu0 %918, %v916
    %v920 = vpop.permute.xlu0 %919
    %v922 = vlaneseq
    %v923 = vshrl.u32 %v922, 7
    %v924 = vsub.s32 0, %v923
    %v925 = vrot.slane %v864, %v924
    %v926 = vmul.f32 %v920, %v925
    %v927 = vrot.slane %v926, 4
    %v928 = vadd.f32 %v926, %v927
    %v929 = vrot.slane %v928, 2
    %v930 = vadd.f32 %v928, %v929
    %v931 = vrot.slane %v930, 1
    %v932 = vadd.f32 %v930, %v931
    %v933 = vmul.f32 %v926, %v926
    %v934 = vrot.slane %v933, 4
    %v935 = vadd.f32 %v933, %v934
    %v936 = vrot.slane %v935, 2
    %v937 = vadd.f32 %v935, %v936
    %v938 = vrot.slane %v937, 1
    %v939 = vadd.f32 %v937, %v938
    %v940 = vmul.f32 %v932, 0.125
    %v941 = vmul.f32 %v939, 0.125
    %v942 = vmul.f32 %v940, %v940
    %v943 = vsub.f32 %v941, %v942
    %v944 = vmax.f32 %v943, 0.0
    %v945 = vadd.f32 %v944, 1e-12
    %v946 = vrsqrt.pop %v945
    %v947 = vsub.f32 %v926, %v940
    %v948 = vmul.f32 %v947, %v946
    %v949 = vmax.f32 %v948, 0.0
    %v950 = vpack.c.bf16 %v949, %v949
    %s951 = scalar_lea.vmem [#allocation5], 192
    %v952 = vld [vmem:[%s951] sm:$0xf]
    %v953 = vld [vmem:[%s951 + $0x4] sm:$0xf]
    %v954 = vld [vmem:[%s951 + $0x8] sm:$0xf]
    %v955 = vld [vmem:[%s951 + $0xc] sm:$0xf]
    %v956 = vld [vmem:[%s951 + $0x10] sm:$0xf]
    %v957 = vld [vmem:[%s951 + $0x14] sm:$0xf]
    %v958 = vld [vmem:[%s951 + $0x18] sm:$0xf]
    %v959 = vld [vmem:[%s951 + $0x1c] sm:$0xf]
    %v960 = vld [vmem:[%s951 + $0x20] sm:$0xf]
    %v961 = vld [vmem:[%s951 + $0x24] sm:$0xf]
    %v962 = vld [vmem:[%s951 + $0x28] sm:$0xf]
    %v963 = vld [vmem:[%s951 + $0x2c] sm:$0xf]
    %v964 = vld [vmem:[%s951 + $0x30] sm:$0xf]
    %v965 = vld [vmem:[%s951 + $0x34] sm:$0xf]
    %v966 = vld [vmem:[%s951 + $0x38] sm:$0xf]
    %v967 = vld [vmem:[%s951 + $0x3c] sm:$0xf]
    %v984 = vunpack.c.l.b16 %v952
    %v985 = vunpack.c.l.b16 %v953
    %v986 = vunpack.c.l.b16 %v954
    %v987 = vunpack.c.l.b16 %v955
    %v988 = vunpack.c.l.b16 %v956
    %v989 = vunpack.c.l.b16 %v957
    %v990 = vunpack.c.l.b16 %v958
    %v991 = vunpack.c.l.b16 %v959
    %v992 = vunpack.c.l.b16 %v960
    %v993 = vunpack.c.l.b16 %v961
    %v994 = vunpack.c.l.b16 %v962
    %v995 = vunpack.c.l.b16 %v963
    %v996 = vunpack.c.l.b16 %v964
    %v997 = vunpack.c.l.b16 %v965
    %v998 = vunpack.c.l.b16 %v966
    %v999 = vunpack.c.l.b16 %v967
    %v1000 = vpack.c.b16 %v985, %v984
    %v1001 = vpack.c.b16 %v987, %v986
    %v1002 = vpack.c.b16 %v989, %v988
    %v1003 = vpack.c.b16 %v991, %v990
    %v1004 = vpack.c.b16 %v993, %v992
    %v1005 = vpack.c.b16 %v995, %v994
    %v1006 = vpack.c.b16 %v997, %v996
    %v1007 = vpack.c.b16 %v999, %v998
    %1016 = vmatprep.subr.bf16.mxu0 0
    %1017 = vmatpush1.bf16.msra.mxu0 %v1000
    %1018 = vmatprep.subr.bf16.mxu0 0
    %1019 = vmatpush1.bf16.msra.mxu0 %v1001
    %1020 = vmatprep.subr.bf16.mxu0 0
    %1021 = vmatpush1.bf16.msra.mxu0 %v1002
    %1022 = vmatprep.subr.bf16.mxu0 0
    %1023 = vmatpush1.bf16.msra.mxu0 %v1003
    %1024 = vmatprep.subr.bf16.mxu0 0
    %1025 = vmatpush1.bf16.msra.mxu0 %v1004
    %1026 = vmatprep.subr.bf16.mxu0 0
    %1027 = vmatpush1.bf16.msra.mxu0 %v1005
    %1028 = vmatprep.subr.bf16.mxu0 0
    %1029 = vmatpush1.bf16.msra.mxu0 %v1006
    %1030 = vmatprep.subr.bf16.mxu0 0
    %1031 = vmatpush1.bf16.msra.mxu0 %v1007
    %1032 = vmatprep.subr.bf16.mxu0 0
    %1033 = vmatpush1.bf16.msra.mxu0 0
    %1034 = vmatprep.subr.bf16.mxu0 0
    %1035 = vmatpush1.bf16.msra.mxu0 0
    %1036 = vmatprep.subr.bf16.mxu0 0
    %1037 = vmatpush1.bf16.msra.mxu0 0
    %1038 = vmatprep.subr.bf16.mxu0 0
    %1039 = vmatpush1.bf16.msra.mxu0 0
    %1040 = vmatprep.subr.bf16.mxu0 0
    %1041 = vmatpush1.bf16.msra.mxu0 0
    %1042 = vmatprep.subr.bf16.mxu0 0
    %1043 = vmatpush1.bf16.msra.mxu0 0
    %1044 = vmatprep.subr.bf16.mxu0 0
    %1045 = vmatpush1.bf16.msra.mxu0 0
    %1046 = vmatprep.subr.bf16.mxu0 0
    %1047 = vmatpush1.bf16.msra.mxu0 0
    %1048 = vmatprep.mubr.bf16.mxu0 0
    %1049 = vmatmul.mubr.bf16.gmra.mrb[0].mxu0 %v950
    %v1050 = vpop.f32.mrb[0].mxu0
    %v1051 = vadd.f32 0.0, %v1050
    %v1052 = vpop.f32.mrb[0].mxu0
    %v1053 = vpop.f32.mrb[0].mxu0
    %v1054 = vpop.f32.mrb[0].mxu0
    %1055 = vdwg.mxu0
    %v1056 = vrot.slane %v1051, 4
    %v1057 = vadd.f32 %v1051, %v1056
    %v1058 = vrot.slane %v1057, 2
    %v1059 = vadd.f32 %v1057, %v1058
    %v1060 = vrot.slane %v1059, 1
    %v1061 = vadd.f32 %v1059, %v1060
    %v1062 = vmul.f32 %v1051, %v1051
    %v1063 = vrot.slane %v1062, 4
    %v1064 = vadd.f32 %v1062, %v1063
    %v1065 = vrot.slane %v1064, 2
    %v1066 = vadd.f32 %v1064, %v1065
    %v1067 = vrot.slane %v1066, 1
    %v1068 = vadd.f32 %v1066, %v1067
    %v1069 = vmul.f32 %v1061, 0.125
    %v1070 = vmul.f32 %v1068, 0.125
    %v1071 = vmul.f32 %v1069, %v1069
    %v1072 = vsub.f32 %v1070, %v1071
    %v1073 = vmax.f32 %v1072, 0.0
    %v1074 = vadd.f32 %v1073, 1e-12
    %v1075 = vrsqrt.pop %v1074
    %v1076 = vsub.f32 %v1051, %v1069
    %v1077 = vmul.f32 %v1076, %v1075
    %v1078 = vmax.f32 %v1077, 0.0
    %v1079 = vlaneseq
    %v1080 = vshrl.u32 %v1079, 7
    %v1081 = vsub.s32 3, %v1080
    %v1082 = vrot.slane %v864, %v1081
    %v1083 = vmul.f32 %v1078, %v1082
    %1084 = vadd.xlane.f32.xlu0 %v1083
    %v1085 = vpop.xlane.xlu0 %1084
    %v1086 = vlaneseq
    %v1087 = vshrl.u32 %v1086, 7
    %v1088 = vsub.s32 4, %v1087
    %v1089 = vrot.slane %v864, %v1088
    %v1090 = vmul.f32 %v1078, %v1089
    %1091 = vadd.xlane.f32.xlu0 %v1090
    %v1092 = vpop.xlane.xlu0 %1091
    %v1093 = vlaneseq
    %v1094 = vshrl.u32 %v1093, 7
    %v1095 = vsub.s32 5, %v1094
    %v1096 = vrot.slane %v864, %v1095
    %v1097 = vadd.f32 %v1085, %v1096
    %v1098 = vlaneseq
    %v1099 = vshrl.u32 %v1098, 7
    %v1100 = vsub.s32 6, %v1099
    %v1101 = vrot.slane %v864, %v1100
    %v1102 = vmul.f32 %v1097, %v1101
    %v1103 = vadd.f32 %v1092, %v1096
    %v1104 = vmul.f32 %v1103, %v1101
    %v1105 = vadd.f32 %v1104, 2.0
    %v1106 = vsub.f32 0.0, %v1105
    %v1107 = vmax.f32 %v1106, 0.0
    %v1108 = vand.u32 2147483647, %v1105
    %v1109 = vsub.f32 0.0, %v1108
    %v1110 = vmul.f32 %v1109, 1.442695
    %v1111 = vpow.pop %v1110
    %v1112 = vadd.f32 %v1111, 1.0
    %v1113 = vlog2.pop %v1112
    %v1114 = vmul.f32 %v1113, 0.6931472
    %v1115 = vadd.f32 %v1107, %v1114
    %v1116 = vsub.f32 0.0, %v1115
    %v1117 = vmul.f32 %v1116, 1.442695
    %v1118 = vpow.pop %v1117
    %1119 = vrot.lane.b32.xlu0 %v916, 1
    %v1120 = vpop.permute.xlu0 %1119
    %v1122 = vmul.f32 %v1118, %v1120
    %1124 = vrot.lane.b32.xlu0 %v1102, 1
    %v1125 = vpop.permute.xlu0 %1124
    %v1127 = vadd.f32 %v1122, %v1125
    %1129 = vrot.lane.b32.xlu0 %v1127, 127
    %v1130 = vpop.permute.xlu0 %1129
    %v1132 = vsel %vm318, %v1130, %v916
    %v1133 = vadd.f32 %v862, %v1116
    %s1134 = scalar_lea.vmem [#allocation3], 32
    %v1135 = vld [vmem:[%s1134] sm:$0xff]
    %v1136 = vsel %vm51, %v1132, 0.0
    %v1137 = vrot.slane %v1136, 4
    %v1138 = vadd.f32 %v1136, %v1137
    %v1139 = vrot.slane %v1138, 2
    %v1140 = vadd.f32 %v1138, %v1139
    %v1141 = vrot.slane %v1140, 1
    %v1142 = vadd.f32 %v1140, %v1141
    %v1143 = vmul.f32 %v1142, 0.125
    %v1144 = vsub.f32 %v1132, %v1143
    %v1145 = vmul.f32 %v1144, %v1144
    %v1146 = vsel %vm51, %v1145, 0.0
    %v1147 = vrot.slane %v1146, 4
    %v1148 = vadd.f32 %v1146, %v1147
    %v1149 = vrot.slane %v1148, 2
    %v1150 = vadd.f32 %v1148, %v1149
    %v1151 = vrot.slane %v1150, 1
    %v1152 = vadd.f32 %v1150, %v1151
    %v1153 = vmul.f32 %v1152, 0.125
    %v1154 = vrsqrt.pop %v1153
    %v1155 = vmul.f32 %v1153, %v1154
    %vm1156 = vcmp.eq.f32.partialorder %v1153, inf
    %v1157 = vsel %vm1156, %v1153, %v1155
    %vm1158 = vcmp.eq.f32.partialorder %v1153, 0.0
    %v1159 = vand.u32 %v1153, 2147483648
    %v1160 = vsel %vm1158, %v1159, %v1157
    %v1161 = vadd.f32 %v1160, 1e-06
    %v1162 = vrcp.pop %v1161
    %v1163 = vmul.f32 %v1144, %v1162
    %v1164 = vlog2.pop %v1161
    %v1165 = vmul.f32 %v1164, 0.6931472
    %v1166 = vsub.f32 0.0, %v1165
    %v1167 = vadd.f32 %v896, %v1166
    %1169 = vset.pattern.permute.xlu0 0
    %1170 = vperm.xlu0 %1169, %v1163
    %v1171 = vpop.permute.xlu0 %1170
    %v1173 = vlaneseq
    %v1174 = vshrl.u32 %v1173, 7
    %v1175 = vsub.s32 1, %v1174
    %v1176 = vrot.slane %v1135, %v1175
    %v1177 = vmul.f32 %v1171, %v1176
    %1178 = vset.pattern.permute.xlu0 1
    %1179 = vperm.xlu0 %1178, %v1163
    %v1180 = vpop.permute.xlu0 %1179
    %v1182 = vlaneseq
    %v1183 = vshrl.u32 %v1182, 7
    %v1184 = vsub.s32 2, %v1183
    %v1185 = vrot.slane %v1135, %v1184
    %v1186 = vmul.f32 %v1180, %v1185
    %v1187 = vadd.f32 %v1177, %v1186
    %1189 = vset.pattern.permute.xlu0 1
    %1190 = vperm.xlu0 %1189, %v1187
    %v1191 = vpop.permute.xlu0 %1190
    %v1193 = vlaneseq
    %v1194 = vshrl.u32 %v1193, 7
    %v1195 = vsub.s32 0, %v1194
    %v1196 = vrot.slane %v1135, %v1195
    %v1197 = vmul.f32 %v1191, %v1196
    %v1198 = vrot.slane %v1197, 4
    %v1199 = vadd.f32 %v1197, %v1198
    %v1200 = vrot.slane %v1199, 2
    %v1201 = vadd.f32 %v1199, %v1200
    %v1202 = vrot.slane %v1201, 1
    %v1203 = vadd.f32 %v1201, %v1202
    %v1204 = vmul.f32 %v1197, %v1197
    %v1205 = vrot.slane %v1204, 4
    %v1206 = vadd.f32 %v1204, %v1205
    %v1207 = vrot.slane %v1206, 2
    %v1208 = vadd.f32 %v1206, %v1207
    %v1209 = vrot.slane %v1208, 1
    %v1210 = vadd.f32 %v1208, %v1209
    %v1211 = vmul.f32 %v1203, 0.125
    %v1212 = vmul.f32 %v1210, 0.125
    %v1213 = vmul.f32 %v1211, %v1211
    %v1214 = vsub.f32 %v1212, %v1213
    %v1215 = vmax.f32 %v1214, 0.0
    %v1216 = vadd.f32 %v1215, 1e-12
    %v1217 = vrsqrt.pop %v1216
    %v1218 = vsub.f32 %v1197, %v1211
    %v1219 = vmul.f32 %v1218, %v1217
    %v1220 = vmax.f32 %v1219, 0.0
    %v1221 = vpack.c.bf16 %v1220, %v1220
    %s1222 = scalar_lea.vmem [#allocation5], 256
    %v1223 = vld [vmem:[%s1222] sm:$0xf]
    %v1224 = vld [vmem:[%s1222 + $0x4] sm:$0xf]
    %v1225 = vld [vmem:[%s1222 + $0x8] sm:$0xf]
    %v1226 = vld [vmem:[%s1222 + $0xc] sm:$0xf]
    %v1227 = vld [vmem:[%s1222 + $0x10] sm:$0xf]
    %v1228 = vld [vmem:[%s1222 + $0x14] sm:$0xf]
    %v1229 = vld [vmem:[%s1222 + $0x18] sm:$0xf]
    %v1230 = vld [vmem:[%s1222 + $0x1c] sm:$0xf]
    %v1231 = vld [vmem:[%s1222 + $0x20] sm:$0xf]
    %v1232 = vld [vmem:[%s1222 + $0x24] sm:$0xf]
    %v1233 = vld [vmem:[%s1222 + $0x28] sm:$0xf]
    %v1234 = vld [vmem:[%s1222 + $0x2c] sm:$0xf]
    %v1235 = vld [vmem:[%s1222 + $0x30] sm:$0xf]
    %v1236 = vld [vmem:[%s1222 + $0x34] sm:$0xf]
    %v1237 = vld [vmem:[%s1222 + $0x38] sm:$0xf]
    %v1238 = vld [vmem:[%s1222 + $0x3c] sm:$0xf]
    %v1255 = vunpack.c.l.b16 %v1223
    %v1256 = vunpack.c.l.b16 %v1224
    %v1257 = vunpack.c.l.b16 %v1225
    %v1258 = vunpack.c.l.b16 %v1226
    %v1259 = vunpack.c.l.b16 %v1227
    %v1260 = vunpack.c.l.b16 %v1228
    %v1261 = vunpack.c.l.b16 %v1229
    %v1262 = vunpack.c.l.b16 %v1230
    %v1263 = vunpack.c.l.b16 %v1231
    %v1264 = vunpack.c.l.b16 %v1232
    %v1265 = vunpack.c.l.b16 %v1233
    %v1266 = vunpack.c.l.b16 %v1234
    %v1267 = vunpack.c.l.b16 %v1235
    %v1268 = vunpack.c.l.b16 %v1236
    %v1269 = vunpack.c.l.b16 %v1237
    %v1270 = vunpack.c.l.b16 %v1238
    %v1271 = vpack.c.b16 %v1256, %v1255
    %v1272 = vpack.c.b16 %v1258, %v1257
    %v1273 = vpack.c.b16 %v1260, %v1259
    %v1274 = vpack.c.b16 %v1262, %v1261
    %v1275 = vpack.c.b16 %v1264, %v1263
    %v1276 = vpack.c.b16 %v1266, %v1265
    %v1277 = vpack.c.b16 %v1268, %v1267
    %v1278 = vpack.c.b16 %v1270, %v1269
    %1287 = vmatprep.subr.bf16.mxu0 0
    %1288 = vmatpush1.bf16.msra.mxu0 %v1271
    %1289 = vmatprep.subr.bf16.mxu0 0
    %1290 = vmatpush1.bf16.msra.mxu0 %v1272
    %1291 = vmatprep.subr.bf16.mxu0 0
    %1292 = vmatpush1.bf16.msra.mxu0 %v1273
    %1293 = vmatprep.subr.bf16.mxu0 0
    %1294 = vmatpush1.bf16.msra.mxu0 %v1274
    %1295 = vmatprep.subr.bf16.mxu0 0
    %1296 = vmatpush1.bf16.msra.mxu0 %v1275
    %1297 = vmatprep.subr.bf16.mxu0 0
    %1298 = vmatpush1.bf16.msra.mxu0 %v1276
    %1299 = vmatprep.subr.bf16.mxu0 0
    %1300 = vmatpush1.bf16.msra.mxu0 %v1277
    %1301 = vmatprep.subr.bf16.mxu0 0
    %1302 = vmatpush1.bf16.msra.mxu0 %v1278
    %1303 = vmatprep.subr.bf16.mxu0 0
    %1304 = vmatpush1.bf16.msra.mxu0 0
    %1305 = vmatprep.subr.bf16.mxu0 0
    %1306 = vmatpush1.bf16.msra.mxu0 0
    %1307 = vmatprep.subr.bf16.mxu0 0
    %1308 = vmatpush1.bf16.msra.mxu0 0
    %1309 = vmatprep.subr.bf16.mxu0 0
    %1310 = vmatpush1.bf16.msra.mxu0 0
    %1311 = vmatprep.subr.bf16.mxu0 0
    %1312 = vmatpush1.bf16.msra.mxu0 0
    %1313 = vmatprep.subr.bf16.mxu0 0
    %1314 = vmatpush1.bf16.msra.mxu0 0
    %1315 = vmatprep.subr.bf16.mxu0 0
    %1316 = vmatpush1.bf16.msra.mxu0 0
    %1317 = vmatprep.subr.bf16.mxu0 0
    %1318 = vmatpush1.bf16.msra.mxu0 0
    %1319 = vmatprep.mubr.bf16.mxu0 0
    %1320 = vmatmul.mubr.bf16.gmra.mrb[0].mxu0 %v1221
    %v1321 = vpop.f32.mrb[0].mxu0
    %v1322 = vadd.f32 0.0, %v1321
    %v1323 = vpop.f32.mrb[0].mxu0
    %v1324 = vpop.f32.mrb[0].mxu0
    %v1325 = vpop.f32.mrb[0].mxu0
    %1326 = vdwg.mxu0
    %v1327 = vrot.slane %v1322, 4
    %v1328 = vadd.f32 %v1322, %v1327
    %v1329 = vrot.slane %v1328, 2
    %v1330 = vadd.f32 %v1328, %v1329
    %v1331 = vrot.slane %v1330, 1
    %v1332 = vadd.f32 %v1330, %v1331
    %v1333 = vmul.f32 %v1322, %v1322
    %v1334 = vrot.slane %v1333, 4
    %v1335 = vadd.f32 %v1333, %v1334
    %v1336 = vrot.slane %v1335, 2
    %v1337 = vadd.f32 %v1335, %v1336
    %v1338 = vrot.slane %v1337, 1
    %v1339 = vadd.f32 %v1337, %v1338
    %v1340 = vmul.f32 %v1332, 0.125
    %v1341 = vmul.f32 %v1339, 0.125
    %v1342 = vmul.f32 %v1340, %v1340
    %v1343 = vsub.f32 %v1341, %v1342
    %v1344 = vmax.f32 %v1343, 0.0
    %v1345 = vadd.f32 %v1344, 1e-12
    %v1346 = vrsqrt.pop %v1345
    %v1347 = vsub.f32 %v1322, %v1340
    %v1348 = vmul.f32 %v1347, %v1346
    %v1349 = vmax.f32 %v1348, 0.0
    %v1350 = vlaneseq
    %v1351 = vshrl.u32 %v1350, 7
    %v1352 = vsub.s32 3, %v1351
    %v1353 = vrot.slane %v1135, %v1352
    %v1354 = vmul.f32 %v1349, %v1353
    %1355 = vadd.xlane.f32.xlu0 %v1354
    %v1356 = vpop.xlane.xlu0 %1355
    %v1357 = vlaneseq
    %v1358 = vshrl.u32 %v1357, 7
    %v1359 = vsub.s32 4, %v1358
    %v1360 = vrot.slane %v1135, %v1359
    %v1361 = vmul.f32 %v1349, %v1360
    %1362 = vadd.xlane.f32.xlu0 %v1361
    %v1363 = vpop.xlane.xlu0 %1362
    %v1364 = vlaneseq
    %v1365 = vshrl.u32 %v1364, 7
    %v1366 = vsub.s32 5, %v1365
    %v1367 = vrot.slane %v1135, %v1366
    %v1368 = vadd.f32 %v1356, %v1367
    %v1369 = vlaneseq
    %v1370 = vshrl.u32 %v1369, 7
    %v1371 = vsub.s32 6, %v1370
    %v1372 = vrot.slane %v1135, %v1371
    %v1373 = vmul.f32 %v1368, %v1372
    %v1374 = vadd.f32 %v1363, %v1367
    %v1375 = vmul.f32 %v1374, %v1372
    %v1376 = vadd.f32 %v1375, 2.0
    %v1377 = vsub.f32 0.0, %v1376
    %v1378 = vmax.f32 %v1377, 0.0
    %v1379 = vand.u32 2147483647, %v1376
    %v1380 = vsub.f32 0.0, %v1379
    %v1381 = vmul.f32 %v1380, 1.442695
    %v1382 = vpow.pop %v1381
    %v1383 = vadd.f32 %v1382, 1.0
    %v1384 = vlog2.pop %v1383
    %v1385 = vmul.f32 %v1384, 0.6931472
    %v1386 = vadd.f32 %v1378, %v1385
    %v1387 = vsub.f32 0.0, %v1386
    %v1388 = vmul.f32 %v1387, 1.442695
    %v1389 = vpow.pop %v1388
    %1390 = vrot.lane.b32.xlu0 %v1187, 1
    %v1391 = vpop.permute.xlu0 %1390
    %v1393 = vmul.f32 %v1389, %v1391
    %1395 = vrot.lane.b32.xlu0 %v1373, 1
    %v1396 = vpop.permute.xlu0 %1395
    %v1398 = vadd.f32 %v1393, %v1396
    %1400 = vrot.lane.b32.xlu0 %v1398, 127
    %v1401 = vpop.permute.xlu0 %1400
    %v1403 = vsel %vm318, %v1401, %v1187
    %v1404 = vadd.f32 %v1133, %v1387
    %s1405 = scalar_lea.vmem [#allocation3], 40
    %v1406 = vld [vmem:[%s1405] sm:$0xff]
    %v1407 = vsel %vm51, %v1403, 0.0
    %v1408 = vrot.slane %v1407, 4
    %v1409 = vadd.f32 %v1407, %v1408
    %v1410 = vrot.slane %v1409, 2
    %v1411 = vadd.f32 %v1409, %v1410
    %v1412 = vrot.slane %v1411, 1
    %v1413 = vadd.f32 %v1411, %v1412
    %v1414 = vmul.f32 %v1413, 0.125
    %v1415 = vsub.f32 %v1403, %v1414
    %v1416 = vmul.f32 %v1415, %v1415
    %v1417 = vsel %vm51, %v1416, 0.0
    %v1418 = vrot.slane %v1417, 4
    %v1419 = vadd.f32 %v1417, %v1418
    %v1420 = vrot.slane %v1419, 2
    %v1421 = vadd.f32 %v1419, %v1420
    %v1422 = vrot.slane %v1421, 1
    %v1423 = vadd.f32 %v1421, %v1422
    %v1424 = vmul.f32 %v1423, 0.125
    %v1425 = vrsqrt.pop %v1424
    %v1426 = vmul.f32 %v1424, %v1425
    %vm1427 = vcmp.eq.f32.partialorder %v1424, inf
    %v1428 = vsel %vm1427, %v1424, %v1426
    %vm1429 = vcmp.eq.f32.partialorder %v1424, 0.0
    %v1430 = vand.u32 %v1424, 2147483648
    %v1431 = vsel %vm1429, %v1430, %v1428
    %v1432 = vadd.f32 %v1431, 1e-06
    %v1433 = vrcp.pop %v1432
    %v1434 = vmul.f32 %v1415, %v1433
    %v1435 = vlog2.pop %v1432
    %v1436 = vmul.f32 %v1435, 0.6931472
    %v1437 = vsub.f32 0.0, %v1436
    %v1438 = vadd.f32 %v1167, %v1437
    %1440 = vset.pattern.permute.xlu0 0
    %1441 = vperm.xlu0 %1440, %v1434
    %v1442 = vpop.permute.xlu0 %1441
    %v1444 = vlaneseq
    %v1445 = vshrl.u32 %v1444, 7
    %v1446 = vsub.s32 1, %v1445
    %v1447 = vrot.slane %v1406, %v1446
    %v1448 = vmul.f32 %v1442, %v1447
    %1449 = vset.pattern.permute.xlu0 1
    %1450 = vperm.xlu0 %1449, %v1434
    %v1451 = vpop.permute.xlu0 %1450
    %v1453 = vlaneseq
    %v1454 = vshrl.u32 %v1453, 7
    %v1455 = vsub.s32 2, %v1454
    %v1456 = vrot.slane %v1406, %v1455
    %v1457 = vmul.f32 %v1451, %v1456
    %v1458 = vadd.f32 %v1448, %v1457
    %1460 = vset.pattern.permute.xlu0 1
    %1461 = vperm.xlu0 %1460, %v1458
    %v1462 = vpop.permute.xlu0 %1461
    %v1464 = vlaneseq
    %v1465 = vshrl.u32 %v1464, 7
    %v1466 = vsub.s32 0, %v1465
    %v1467 = vrot.slane %v1406, %v1466
    %v1468 = vmul.f32 %v1462, %v1467
    %v1469 = vrot.slane %v1468, 4
    %v1470 = vadd.f32 %v1468, %v1469
    %v1471 = vrot.slane %v1470, 2
    %v1472 = vadd.f32 %v1470, %v1471
    %v1473 = vrot.slane %v1472, 1
    %v1474 = vadd.f32 %v1472, %v1473
    %v1475 = vmul.f32 %v1468, %v1468
    %v1476 = vrot.slane %v1475, 4
    %v1477 = vadd.f32 %v1475, %v1476
    %v1478 = vrot.slane %v1477, 2
    %v1479 = vadd.f32 %v1477, %v1478
    %v1480 = vrot.slane %v1479, 1
    %v1481 = vadd.f32 %v1479, %v1480
    %v1482 = vmul.f32 %v1474, 0.125
    %v1483 = vmul.f32 %v1481, 0.125
    %v1484 = vmul.f32 %v1482, %v1482
    %v1485 = vsub.f32 %v1483, %v1484
    %v1486 = vmax.f32 %v1485, 0.0
    %v1487 = vadd.f32 %v1486, 1e-12
    %v1488 = vrsqrt.pop %v1487
    %v1489 = vsub.f32 %v1468, %v1482
    %v1490 = vmul.f32 %v1489, %v1488
    %v1491 = vmax.f32 %v1490, 0.0
    %v1492 = vpack.c.bf16 %v1491, %v1491
    %s1493 = scalar_lea.vmem [#allocation5], 320
    %v1494 = vld [vmem:[%s1493] sm:$0xf]
    %v1495 = vld [vmem:[%s1493 + $0x4] sm:$0xf]
    %v1496 = vld [vmem:[%s1493 + $0x8] sm:$0xf]
    %v1497 = vld [vmem:[%s1493 + $0xc] sm:$0xf]
    %v1498 = vld [vmem:[%s1493 + $0x10] sm:$0xf]
    %v1499 = vld [vmem:[%s1493 + $0x14] sm:$0xf]
    %v1500 = vld [vmem:[%s1493 + $0x18] sm:$0xf]
    %v1501 = vld [vmem:[%s1493 + $0x1c] sm:$0xf]
    %v1502 = vld [vmem:[%s1493 + $0x20] sm:$0xf]
    %v1503 = vld [vmem:[%s1493 + $0x24] sm:$0xf]
    %v1504 = vld [vmem:[%s1493 + $0x28] sm:$0xf]
    %v1505 = vld [vmem:[%s1493 + $0x2c] sm:$0xf]
    %v1506 = vld [vmem:[%s1493 + $0x30] sm:$0xf]
    %v1507 = vld [vmem:[%s1493 + $0x34] sm:$0xf]
    %v1508 = vld [vmem:[%s1493 + $0x38] sm:$0xf]
    %v1509 = vld [vmem:[%s1493 + $0x3c] sm:$0xf]
    %v1526 = vunpack.c.l.b16 %v1494
    %v1527 = vunpack.c.l.b16 %v1495
    %v1528 = vunpack.c.l.b16 %v1496
    %v1529 = vunpack.c.l.b16 %v1497
    %v1530 = vunpack.c.l.b16 %v1498
    %v1531 = vunpack.c.l.b16 %v1499
    %v1532 = vunpack.c.l.b16 %v1500
    %v1533 = vunpack.c.l.b16 %v1501
    %v1534 = vunpack.c.l.b16 %v1502
    %v1535 = vunpack.c.l.b16 %v1503
    %v1536 = vunpack.c.l.b16 %v1504
    %v1537 = vunpack.c.l.b16 %v1505
    %v1538 = vunpack.c.l.b16 %v1506
    %v1539 = vunpack.c.l.b16 %v1507
    %v1540 = vunpack.c.l.b16 %v1508
    %v1541 = vunpack.c.l.b16 %v1509
    %v1542 = vpack.c.b16 %v1527, %v1526
    %v1543 = vpack.c.b16 %v1529, %v1528
    %v1544 = vpack.c.b16 %v1531, %v1530
    %v1545 = vpack.c.b16 %v1533, %v1532
    %v1546 = vpack.c.b16 %v1535, %v1534
    %v1547 = vpack.c.b16 %v1537, %v1536
    %v1548 = vpack.c.b16 %v1539, %v1538
    %v1549 = vpack.c.b16 %v1541, %v1540
    %1558 = vmatprep.subr.bf16.mxu0 0
    %1559 = vmatpush1.bf16.msra.mxu0 %v1542
    %1560 = vmatprep.subr.bf16.mxu0 0
    %1561 = vmatpush1.bf16.msra.mxu0 %v1543
    %1562 = vmatprep.subr.bf16.mxu0 0
    %1563 = vmatpush1.bf16.msra.mxu0 %v1544
    %1564 = vmatprep.subr.bf16.mxu0 0
    %1565 = vmatpush1.bf16.msra.mxu0 %v1545
    %1566 = vmatprep.subr.bf16.mxu0 0
    %1567 = vmatpush1.bf16.msra.mxu0 %v1546
    %1568 = vmatprep.subr.bf16.mxu0 0
    %1569 = vmatpush1.bf16.msra.mxu0 %v1547
    %1570 = vmatprep.subr.bf16.mxu0 0
    %1571 = vmatpush1.bf16.msra.mxu0 %v1548
    %1572 = vmatprep.subr.bf16.mxu0 0
    %1573 = vmatpush1.bf16.msra.mxu0 %v1549
    %1574 = vmatprep.subr.bf16.mxu0 0
    %1575 = vmatpush1.bf16.msra.mxu0 0
    %1576 = vmatprep.subr.bf16.mxu0 0
    %1577 = vmatpush1.bf16.msra.mxu0 0
    %1578 = vmatprep.subr.bf16.mxu0 0
    %1579 = vmatpush1.bf16.msra.mxu0 0
    %1580 = vmatprep.subr.bf16.mxu0 0
    %1581 = vmatpush1.bf16.msra.mxu0 0
    %1582 = vmatprep.subr.bf16.mxu0 0
    %1583 = vmatpush1.bf16.msra.mxu0 0
    %1584 = vmatprep.subr.bf16.mxu0 0
    %1585 = vmatpush1.bf16.msra.mxu0 0
    %1586 = vmatprep.subr.bf16.mxu0 0
    %1587 = vmatpush1.bf16.msra.mxu0 0
    %1588 = vmatprep.subr.bf16.mxu0 0
    %1589 = vmatpush1.bf16.msra.mxu0 0
    %1590 = vmatprep.mubr.bf16.mxu0 0
    %1591 = vmatmul.mubr.bf16.gmra.mrb[0].mxu0 %v1492
    %v1592 = vpop.f32.mrb[0].mxu0
    %v1593 = vadd.f32 0.0, %v1592
    %v1594 = vpop.f32.mrb[0].mxu0
    %v1595 = vpop.f32.mrb[0].mxu0
    %v1596 = vpop.f32.mrb[0].mxu0
    %1597 = vdwg.mxu0
    %v1598 = vrot.slane %v1593, 4
    %v1599 = vadd.f32 %v1593, %v1598
    %v1600 = vrot.slane %v1599, 2
    %v1601 = vadd.f32 %v1599, %v1600
    %v1602 = vrot.slane %v1601, 1
    %v1603 = vadd.f32 %v1601, %v1602
    %v1604 = vmul.f32 %v1593, %v1593
    %v1605 = vrot.slane %v1604, 4
    %v1606 = vadd.f32 %v1604, %v1605
    %v1607 = vrot.slane %v1606, 2
    %v1608 = vadd.f32 %v1606, %v1607
    %v1609 = vrot.slane %v1608, 1
    %v1610 = vadd.f32 %v1608, %v1609
    %v1611 = vmul.f32 %v1603, 0.125
    %v1612 = vmul.f32 %v1610, 0.125
    %v1613 = vmul.f32 %v1611, %v1611
    %v1614 = vsub.f32 %v1612, %v1613
    %v1615 = vmax.f32 %v1614, 0.0
    %v1616 = vadd.f32 %v1615, 1e-12
    %v1617 = vrsqrt.pop %v1616
    %v1618 = vsub.f32 %v1593, %v1611
    %v1619 = vmul.f32 %v1618, %v1617
    %v1620 = vmax.f32 %v1619, 0.0
    %v1621 = vlaneseq
    %v1622 = vshrl.u32 %v1621, 7
    %v1623 = vsub.s32 3, %v1622
    %v1624 = vrot.slane %v1406, %v1623
    %v1625 = vmul.f32 %v1620, %v1624
    %1626 = vadd.xlane.f32.xlu0 %v1625
    %v1627 = vpop.xlane.xlu0 %1626
    %v1628 = vlaneseq
    %v1629 = vshrl.u32 %v1628, 7
    %v1630 = vsub.s32 4, %v1629
    %v1631 = vrot.slane %v1406, %v1630
    %v1632 = vmul.f32 %v1620, %v1631
    %1633 = vadd.xlane.f32.xlu0 %v1632
    %v1634 = vpop.xlane.xlu0 %1633
    %v1635 = vlaneseq
    %v1636 = vshrl.u32 %v1635, 7
    %v1637 = vsub.s32 5, %v1636
    %v1638 = vrot.slane %v1406, %v1637
    %v1639 = vadd.f32 %v1627, %v1638
    %v1640 = vlaneseq
    %v1641 = vshrl.u32 %v1640, 7
    %v1642 = vsub.s32 6, %v1641
    %v1643 = vrot.slane %v1406, %v1642
    %v1644 = vmul.f32 %v1639, %v1643
    %v1645 = vadd.f32 %v1634, %v1638
    %v1646 = vmul.f32 %v1645, %v1643
    %v1647 = vadd.f32 %v1646, 2.0
    %v1648 = vsub.f32 0.0, %v1647
    %v1649 = vmax.f32 %v1648, 0.0
    %v1650 = vand.u32 2147483647, %v1647
    %v1651 = vsub.f32 0.0, %v1650
    %v1652 = vmul.f32 %v1651, 1.442695
    %v1653 = vpow.pop %v1652
    %v1654 = vadd.f32 %v1653, 1.0
    %v1655 = vlog2.pop %v1654
    %v1656 = vmul.f32 %v1655, 0.6931472
    %v1657 = vadd.f32 %v1649, %v1656
    %v1658 = vsub.f32 0.0, %v1657
    %v1659 = vmul.f32 %v1658, 1.442695
    %v1660 = vpow.pop %v1659
    %1661 = vrot.lane.b32.xlu0 %v1458, 1
    %v1662 = vpop.permute.xlu0 %1661
    %v1664 = vmul.f32 %v1660, %v1662
    %1666 = vrot.lane.b32.xlu0 %v1644, 1
    %v1667 = vpop.permute.xlu0 %1666
    %v1669 = vadd.f32 %v1664, %v1667
    %1671 = vrot.lane.b32.xlu0 %v1669, 127
    %v1672 = vpop.permute.xlu0 %1671
    %v1674 = vsel %vm318, %v1672, %v1458
    %v1675 = vadd.f32 %v1404, %v1658
    %s1676 = scalar_lea.vmem [#allocation3], 48
    %v1677 = vld [vmem:[%s1676] sm:$0xff]
    %v1678 = vsel %vm51, %v1674, 0.0
    %v1679 = vrot.slane %v1678, 4
    %v1680 = vadd.f32 %v1678, %v1679
    %v1681 = vrot.slane %v1680, 2
    %v1682 = vadd.f32 %v1680, %v1681
    %v1683 = vrot.slane %v1682, 1
    %v1684 = vadd.f32 %v1682, %v1683
    %v1685 = vmul.f32 %v1684, 0.125
    %v1686 = vsub.f32 %v1674, %v1685
    %v1687 = vmul.f32 %v1686, %v1686
    %v1688 = vsel %vm51, %v1687, 0.0
    %v1689 = vrot.slane %v1688, 4
    %v1690 = vadd.f32 %v1688, %v1689
    %v1691 = vrot.slane %v1690, 2
    %v1692 = vadd.f32 %v1690, %v1691
    %v1693 = vrot.slane %v1692, 1
    %v1694 = vadd.f32 %v1692, %v1693
    %v1695 = vmul.f32 %v1694, 0.125
    %v1696 = vrsqrt.pop %v1695
    %v1697 = vmul.f32 %v1695, %v1696
    %vm1698 = vcmp.eq.f32.partialorder %v1695, inf
    %v1699 = vsel %vm1698, %v1695, %v1697
    %vm1700 = vcmp.eq.f32.partialorder %v1695, 0.0
    %v1701 = vand.u32 %v1695, 2147483648
    %v1702 = vsel %vm1700, %v1701, %v1699
    %v1703 = vadd.f32 %v1702, 1e-06
    %v1704 = vrcp.pop %v1703
    %v1705 = vmul.f32 %v1686, %v1704
    %v1706 = vlog2.pop %v1703
    %v1707 = vmul.f32 %v1706, 0.6931472
    %v1708 = vsub.f32 0.0, %v1707
    %v1709 = vadd.f32 %v1438, %v1708
    %1711 = vset.pattern.permute.xlu0 0
    %1712 = vperm.xlu0 %1711, %v1705
    %v1713 = vpop.permute.xlu0 %1712
    %v1715 = vlaneseq
    %v1716 = vshrl.u32 %v1715, 7
    %v1717 = vsub.s32 1, %v1716
    %v1718 = vrot.slane %v1677, %v1717
    %v1719 = vmul.f32 %v1713, %v1718
    %1720 = vset.pattern.permute.xlu0 1
    %1721 = vperm.xlu0 %1720, %v1705
    %v1722 = vpop.permute.xlu0 %1721
    %v1724 = vlaneseq
    %v1725 = vshrl.u32 %v1724, 7
    %v1726 = vsub.s32 2, %v1725
    %v1727 = vrot.slane %v1677, %v1726
    %v1728 = vmul.f32 %v1722, %v1727
    %v1729 = vadd.f32 %v1719, %v1728
    %1731 = vset.pattern.permute.xlu0 1
    %1732 = vperm.xlu0 %1731, %v1729
    %v1733 = vpop.permute.xlu0 %1732
    %v1735 = vlaneseq
    %v1736 = vshrl.u32 %v1735, 7
    %v1737 = vsub.s32 0, %v1736
    %v1738 = vrot.slane %v1677, %v1737
    %v1739 = vmul.f32 %v1733, %v1738
    %v1740 = vrot.slane %v1739, 4
    %v1741 = vadd.f32 %v1739, %v1740
    %v1742 = vrot.slane %v1741, 2
    %v1743 = vadd.f32 %v1741, %v1742
    %v1744 = vrot.slane %v1743, 1
    %v1745 = vadd.f32 %v1743, %v1744
    %v1746 = vmul.f32 %v1739, %v1739
    %v1747 = vrot.slane %v1746, 4
    %v1748 = vadd.f32 %v1746, %v1747
    %v1749 = vrot.slane %v1748, 2
    %v1750 = vadd.f32 %v1748, %v1749
    %v1751 = vrot.slane %v1750, 1
    %v1752 = vadd.f32 %v1750, %v1751
    %v1753 = vmul.f32 %v1745, 0.125
    %v1754 = vmul.f32 %v1752, 0.125
    %v1755 = vmul.f32 %v1753, %v1753
    %v1756 = vsub.f32 %v1754, %v1755
    %v1757 = vmax.f32 %v1756, 0.0
    %v1758 = vadd.f32 %v1757, 1e-12
    %v1759 = vrsqrt.pop %v1758
    %v1760 = vsub.f32 %v1739, %v1753
    %v1761 = vmul.f32 %v1760, %v1759
    %v1762 = vmax.f32 %v1761, 0.0
    %v1763 = vpack.c.bf16 %v1762, %v1762
    %s1764 = scalar_lea.vmem [#allocation5], 384
    %v1765 = vld [vmem:[%s1764] sm:$0xf]
    %v1766 = vld [vmem:[%s1764 + $0x4] sm:$0xf]
    %v1767 = vld [vmem:[%s1764 + $0x8] sm:$0xf]
    %v1768 = vld [vmem:[%s1764 + $0xc] sm:$0xf]
    %v1769 = vld [vmem:[%s1764 + $0x10] sm:$0xf]
    %v1770 = vld [vmem:[%s1764 + $0x14] sm:$0xf]
    %v1771 = vld [vmem:[%s1764 + $0x18] sm:$0xf]
    %v1772 = vld [vmem:[%s1764 + $0x1c] sm:$0xf]
    %v1773 = vld [vmem:[%s1764 + $0x20] sm:$0xf]
    %v1774 = vld [vmem:[%s1764 + $0x24] sm:$0xf]
    %v1775 = vld [vmem:[%s1764 + $0x28] sm:$0xf]
    %v1776 = vld [vmem:[%s1764 + $0x2c] sm:$0xf]
    %v1777 = vld [vmem:[%s1764 + $0x30] sm:$0xf]
    %v1778 = vld [vmem:[%s1764 + $0x34] sm:$0xf]
    %v1779 = vld [vmem:[%s1764 + $0x38] sm:$0xf]
    %v1780 = vld [vmem:[%s1764 + $0x3c] sm:$0xf]
    %v1797 = vunpack.c.l.b16 %v1765
    %v1798 = vunpack.c.l.b16 %v1766
    %v1799 = vunpack.c.l.b16 %v1767
    %v1800 = vunpack.c.l.b16 %v1768
    %v1801 = vunpack.c.l.b16 %v1769
    %v1802 = vunpack.c.l.b16 %v1770
    %v1803 = vunpack.c.l.b16 %v1771
    %v1804 = vunpack.c.l.b16 %v1772
    %v1805 = vunpack.c.l.b16 %v1773
    %v1806 = vunpack.c.l.b16 %v1774
    %v1807 = vunpack.c.l.b16 %v1775
    %v1808 = vunpack.c.l.b16 %v1776
    %v1809 = vunpack.c.l.b16 %v1777
    %v1810 = vunpack.c.l.b16 %v1778
    %v1811 = vunpack.c.l.b16 %v1779
    %v1812 = vunpack.c.l.b16 %v1780
    %v1813 = vpack.c.b16 %v1798, %v1797
    %v1814 = vpack.c.b16 %v1800, %v1799
    %v1815 = vpack.c.b16 %v1802, %v1801
    %v1816 = vpack.c.b16 %v1804, %v1803
    %v1817 = vpack.c.b16 %v1806, %v1805
    %v1818 = vpack.c.b16 %v1808, %v1807
    %v1819 = vpack.c.b16 %v1810, %v1809
    %v1820 = vpack.c.b16 %v1812, %v1811
    %1829 = vmatprep.subr.bf16.mxu0 0
    %1830 = vmatpush1.bf16.msra.mxu0 %v1813
    %1831 = vmatprep.subr.bf16.mxu0 0
    %1832 = vmatpush1.bf16.msra.mxu0 %v1814
    %1833 = vmatprep.subr.bf16.mxu0 0
    %1834 = vmatpush1.bf16.msra.mxu0 %v1815
    %1835 = vmatprep.subr.bf16.mxu0 0
    %1836 = vmatpush1.bf16.msra.mxu0 %v1816
    %1837 = vmatprep.subr.bf16.mxu0 0
    %1838 = vmatpush1.bf16.msra.mxu0 %v1817
    %1839 = vmatprep.subr.bf16.mxu0 0
    %1840 = vmatpush1.bf16.msra.mxu0 %v1818
    %1841 = vmatprep.subr.bf16.mxu0 0
    %1842 = vmatpush1.bf16.msra.mxu0 %v1819
    %1843 = vmatprep.subr.bf16.mxu0 0
    %1844 = vmatpush1.bf16.msra.mxu0 %v1820
    %1845 = vmatprep.subr.bf16.mxu0 0
    %1846 = vmatpush1.bf16.msra.mxu0 0
    %1847 = vmatprep.subr.bf16.mxu0 0
    %1848 = vmatpush1.bf16.msra.mxu0 0
    %1849 = vmatprep.subr.bf16.mxu0 0
    %1850 = vmatpush1.bf16.msra.mxu0 0
    %1851 = vmatprep.subr.bf16.mxu0 0
    %1852 = vmatpush1.bf16.msra.mxu0 0
    %1853 = vmatprep.subr.bf16.mxu0 0
    %1854 = vmatpush1.bf16.msra.mxu0 0
    %1855 = vmatprep.subr.bf16.mxu0 0
    %1856 = vmatpush1.bf16.msra.mxu0 0
    %1857 = vmatprep.subr.bf16.mxu0 0
    %1858 = vmatpush1.bf16.msra.mxu0 0
    %1859 = vmatprep.subr.bf16.mxu0 0
    %1860 = vmatpush1.bf16.msra.mxu0 0
    %1861 = vmatprep.mubr.bf16.mxu0 0
    %1862 = vmatmul.mubr.bf16.gmra.mrb[0].mxu0 %v1763
    %v1863 = vpop.f32.mrb[0].mxu0
    %v1864 = vadd.f32 0.0, %v1863
    %v1865 = vpop.f32.mrb[0].mxu0
    %v1866 = vpop.f32.mrb[0].mxu0
    %v1867 = vpop.f32.mrb[0].mxu0
    %1868 = vdwg.mxu0
    %v1869 = vrot.slane %v1864, 4
    %v1870 = vadd.f32 %v1864, %v1869
    %v1871 = vrot.slane %v1870, 2
    %v1872 = vadd.f32 %v1870, %v1871
    %v1873 = vrot.slane %v1872, 1
    %v1874 = vadd.f32 %v1872, %v1873
    %v1875 = vmul.f32 %v1864, %v1864
    %v1876 = vrot.slane %v1875, 4
    %v1877 = vadd.f32 %v1875, %v1876
    %v1878 = vrot.slane %v1877, 2
    %v1879 = vadd.f32 %v1877, %v1878
    %v1880 = vrot.slane %v1879, 1
    %v1881 = vadd.f32 %v1879, %v1880
    %v1882 = vmul.f32 %v1874, 0.125
    %v1883 = vmul.f32 %v1881, 0.125
    %v1884 = vmul.f32 %v1882, %v1882
    %v1885 = vsub.f32 %v1883, %v1884
    %v1886 = vmax.f32 %v1885, 0.0
    %v1887 = vadd.f32 %v1886, 1e-12
    %v1888 = vrsqrt.pop %v1887
    %v1889 = vsub.f32 %v1864, %v1882
    %v1890 = vmul.f32 %v1889, %v1888
    %v1891 = vmax.f32 %v1890, 0.0
    %v1892 = vlaneseq
    %v1893 = vshrl.u32 %v1892, 7
    %v1894 = vsub.s32 3, %v1893
    %v1895 = vrot.slane %v1677, %v1894
    %v1896 = vmul.f32 %v1891, %v1895
    %1897 = vadd.xlane.f32.xlu0 %v1896
    %v1898 = vpop.xlane.xlu0 %1897
    %v1899 = vlaneseq
    %v1900 = vshrl.u32 %v1899, 7
    %v1901 = vsub.s32 4, %v1900
    %v1902 = vrot.slane %v1677, %v1901
    %v1903 = vmul.f32 %v1891, %v1902
    %1904 = vadd.xlane.f32.xlu0 %v1903
    %v1905 = vpop.xlane.xlu0 %1904
    %v1906 = vlaneseq
    %v1907 = vshrl.u32 %v1906, 7
    %v1908 = vsub.s32 5, %v1907
    %v1909 = vrot.slane %v1677, %v1908
    %v1910 = vadd.f32 %v1898, %v1909
    %v1911 = vlaneseq
    %v1912 = vshrl.u32 %v1911, 7
    %v1913 = vsub.s32 6, %v1912
    %v1914 = vrot.slane %v1677, %v1913
    %v1915 = vmul.f32 %v1910, %v1914
    %v1916 = vadd.f32 %v1905, %v1909
    %v1917 = vmul.f32 %v1916, %v1914
    %v1918 = vadd.f32 %v1917, 2.0
    %v1919 = vsub.f32 0.0, %v1918
    %v1920 = vmax.f32 %v1919, 0.0
    %v1921 = vand.u32 2147483647, %v1918
    %v1922 = vsub.f32 0.0, %v1921
    %v1923 = vmul.f32 %v1922, 1.442695
    %v1924 = vpow.pop %v1923
    %v1925 = vadd.f32 %v1924, 1.0
    %v1926 = vlog2.pop %v1925
    %v1927 = vmul.f32 %v1926, 0.6931472
    %v1928 = vadd.f32 %v1920, %v1927
    %v1929 = vsub.f32 0.0, %v1928
    %v1930 = vmul.f32 %v1929, 1.442695
    %v1931 = vpow.pop %v1930
    %1932 = vrot.lane.b32.xlu0 %v1729, 1
    %v1933 = vpop.permute.xlu0 %1932
    %v1935 = vmul.f32 %v1931, %v1933
    %1937 = vrot.lane.b32.xlu0 %v1915, 1
    %v1938 = vpop.permute.xlu0 %1937
    %v1940 = vadd.f32 %v1935, %v1938
    %1942 = vrot.lane.b32.xlu0 %v1940, 127
    %v1943 = vpop.permute.xlu0 %1942
    %v1945 = vsel %vm318, %v1943, %v1729
    %v1946 = vadd.f32 %v1675, %v1929
    %s1947 = scalar_lea.vmem [#allocation3], 56
    %v1948 = vld [vmem:[%s1947] sm:$0xff]
    %v1949 = vsel %vm51, %v1945, 0.0
    %v1950 = vrot.slane %v1949, 4
    %v1951 = vadd.f32 %v1949, %v1950
    %v1952 = vrot.slane %v1951, 2
    %v1953 = vadd.f32 %v1951, %v1952
    %v1954 = vrot.slane %v1953, 1
    %v1955 = vadd.f32 %v1953, %v1954
    %v1956 = vmul.f32 %v1955, 0.125
    %v1957 = vsub.f32 %v1945, %v1956
    %v1958 = vmul.f32 %v1957, %v1957
    %v1959 = vsel %vm51, %v1958, 0.0
    %v1960 = vrot.slane %v1959, 4
    %v1961 = vadd.f32 %v1959, %v1960
    %v1962 = vrot.slane %v1961, 2
    %v1963 = vadd.f32 %v1961, %v1962
    %v1964 = vrot.slane %v1963, 1
    %v1965 = vadd.f32 %v1963, %v1964
    %v1966 = vmul.f32 %v1965, 0.125
    %v1967 = vrsqrt.pop %v1966
    %v1968 = vmul.f32 %v1966, %v1967
    %vm1969 = vcmp.eq.f32.partialorder %v1966, inf
    %v1970 = vsel %vm1969, %v1966, %v1968
    %vm1971 = vcmp.eq.f32.partialorder %v1966, 0.0
    %v1972 = vand.u32 %v1966, 2147483648
    %v1973 = vsel %vm1971, %v1972, %v1970
    %v1974 = vadd.f32 %v1973, 1e-06
    %v1975 = vrcp.pop %v1974
    %v1976 = vmul.f32 %v1957, %v1975
    %v1977 = vlog2.pop %v1974
    %v1978 = vmul.f32 %v1977, 0.6931472
    %v1979 = vsub.f32 0.0, %v1978
    %v1980 = vadd.f32 %v1709, %v1979
    %1982 = vset.pattern.permute.xlu0 0
    %1983 = vperm.xlu0 %1982, %v1976
    %v1984 = vpop.permute.xlu0 %1983
    %v1986 = vlaneseq
    %v1987 = vshrl.u32 %v1986, 7
    %v1988 = vsub.s32 1, %v1987
    %v1989 = vrot.slane %v1948, %v1988
    %v1990 = vmul.f32 %v1984, %v1989
    %1991 = vset.pattern.permute.xlu0 1
    %1992 = vperm.xlu0 %1991, %v1976
    %v1993 = vpop.permute.xlu0 %1992
    %v1995 = vlaneseq
    %v1996 = vshrl.u32 %v1995, 7
    %v1997 = vsub.s32 2, %v1996
    %v1998 = vrot.slane %v1948, %v1997
    %v1999 = vmul.f32 %v1993, %v1998
    %v2000 = vadd.f32 %v1990, %v1999
    %2002 = vset.pattern.permute.xlu0 1
    %2003 = vperm.xlu0 %2002, %v2000
    %v2004 = vpop.permute.xlu0 %2003
    %v2006 = vlaneseq
    %v2007 = vshrl.u32 %v2006, 7
    %v2008 = vsub.s32 0, %v2007
    %v2009 = vrot.slane %v1948, %v2008
    %v2010 = vmul.f32 %v2004, %v2009
    %v2011 = vrot.slane %v2010, 4
    %v2012 = vadd.f32 %v2010, %v2011
    %v2013 = vrot.slane %v2012, 2
    %v2014 = vadd.f32 %v2012, %v2013
    %v2015 = vrot.slane %v2014, 1
    %v2016 = vadd.f32 %v2014, %v2015
    %v2017 = vmul.f32 %v2010, %v2010
    %v2018 = vrot.slane %v2017, 4
    %v2019 = vadd.f32 %v2017, %v2018
    %v2020 = vrot.slane %v2019, 2
    %v2021 = vadd.f32 %v2019, %v2020
    %v2022 = vrot.slane %v2021, 1
    %v2023 = vadd.f32 %v2021, %v2022
    %v2024 = vmul.f32 %v2016, 0.125
    %v2025 = vmul.f32 %v2023, 0.125
    %v2026 = vmul.f32 %v2024, %v2024
    %v2027 = vsub.f32 %v2025, %v2026
    %v2028 = vmax.f32 %v2027, 0.0
    %v2029 = vadd.f32 %v2028, 1e-12
    %v2030 = vrsqrt.pop %v2029
    %v2031 = vsub.f32 %v2010, %v2024
    %v2032 = vmul.f32 %v2031, %v2030
    %v2033 = vmax.f32 %v2032, 0.0
    %v2034 = vpack.c.bf16 %v2033, %v2033
    %s2035 = scalar_lea.vmem [#allocation5], 448
    %v2036 = vld [vmem:[%s2035] sm:$0xf]
    %v2037 = vld [vmem:[%s2035 + $0x4] sm:$0xf]
    %v2038 = vld [vmem:[%s2035 + $0x8] sm:$0xf]
    %v2039 = vld [vmem:[%s2035 + $0xc] sm:$0xf]
    %v2040 = vld [vmem:[%s2035 + $0x10] sm:$0xf]
    %v2041 = vld [vmem:[%s2035 + $0x14] sm:$0xf]
    %v2042 = vld [vmem:[%s2035 + $0x18] sm:$0xf]
    %v2043 = vld [vmem:[%s2035 + $0x1c] sm:$0xf]
    %v2044 = vld [vmem:[%s2035 + $0x20] sm:$0xf]
    %v2045 = vld [vmem:[%s2035 + $0x24] sm:$0xf]
    %v2046 = vld [vmem:[%s2035 + $0x28] sm:$0xf]
    %v2047 = vld [vmem:[%s2035 + $0x2c] sm:$0xf]
    %v2048 = vld [vmem:[%s2035 + $0x30] sm:$0xf]
    %v2049 = vld [vmem:[%s2035 + $0x34] sm:$0xf]
    %v2050 = vld [vmem:[%s2035 + $0x38] sm:$0xf]
    %v2051 = vld [vmem:[%s2035 + $0x3c] sm:$0xf]
    %v2068 = vunpack.c.l.b16 %v2036
    %v2069 = vunpack.c.l.b16 %v2037
    %v2070 = vunpack.c.l.b16 %v2038
    %v2071 = vunpack.c.l.b16 %v2039
    %v2072 = vunpack.c.l.b16 %v2040
    %v2073 = vunpack.c.l.b16 %v2041
    %v2074 = vunpack.c.l.b16 %v2042
    %v2075 = vunpack.c.l.b16 %v2043
    %v2076 = vunpack.c.l.b16 %v2044
    %v2077 = vunpack.c.l.b16 %v2045
    %v2078 = vunpack.c.l.b16 %v2046
    %v2079 = vunpack.c.l.b16 %v2047
    %v2080 = vunpack.c.l.b16 %v2048
    %v2081 = vunpack.c.l.b16 %v2049
    %v2082 = vunpack.c.l.b16 %v2050
    %v2083 = vunpack.c.l.b16 %v2051
    %v2084 = vpack.c.b16 %v2069, %v2068
    %v2085 = vpack.c.b16 %v2071, %v2070
    %v2086 = vpack.c.b16 %v2073, %v2072
    %v2087 = vpack.c.b16 %v2075, %v2074
    %v2088 = vpack.c.b16 %v2077, %v2076
    %v2089 = vpack.c.b16 %v2079, %v2078
    %v2090 = vpack.c.b16 %v2081, %v2080
    %v2091 = vpack.c.b16 %v2083, %v2082
    %2100 = vmatprep.subr.bf16.mxu0 0
    %2101 = vmatpush1.bf16.msra.mxu0 %v2084
    %2102 = vmatprep.subr.bf16.mxu0 0
    %2103 = vmatpush1.bf16.msra.mxu0 %v2085
    %2104 = vmatprep.subr.bf16.mxu0 0
    %2105 = vmatpush1.bf16.msra.mxu0 %v2086
    %2106 = vmatprep.subr.bf16.mxu0 0
    %2107 = vmatpush1.bf16.msra.mxu0 %v2087
    %2108 = vmatprep.subr.bf16.mxu0 0
    %2109 = vmatpush1.bf16.msra.mxu0 %v2088
    %2110 = vmatprep.subr.bf16.mxu0 0
    %2111 = vmatpush1.bf16.msra.mxu0 %v2089
    %2112 = vmatprep.subr.bf16.mxu0 0
    %2113 = vmatpush1.bf16.msra.mxu0 %v2090
    %2114 = vmatprep.subr.bf16.mxu0 0
    %2115 = vmatpush1.bf16.msra.mxu0 %v2091
    %2116 = vmatprep.subr.bf16.mxu0 0
    %2117 = vmatpush1.bf16.msra.mxu0 0
    %2118 = vmatprep.subr.bf16.mxu0 0
    %2119 = vmatpush1.bf16.msra.mxu0 0
    %2120 = vmatprep.subr.bf16.mxu0 0
    %2121 = vmatpush1.bf16.msra.mxu0 0
    %2122 = vmatprep.subr.bf16.mxu0 0
    %2123 = vmatpush1.bf16.msra.mxu0 0
    %2124 = vmatprep.subr.bf16.mxu0 0
    %2125 = vmatpush1.bf16.msra.mxu0 0
    %2126 = vmatprep.subr.bf16.mxu0 0
    %2127 = vmatpush1.bf16.msra.mxu0 0
    %2128 = vmatprep.subr.bf16.mxu0 0
    %2129 = vmatpush1.bf16.msra.mxu0 0
    %2130 = vmatprep.subr.bf16.mxu0 0
    %2131 = vmatpush1.bf16.msra.mxu0 0
    %2132 = vmatprep.mubr.bf16.mxu0 0
    %2133 = vmatmul.mubr.bf16.gmra.mrb[0].mxu0 %v2034
    %v2134 = vpop.f32.mrb[0].mxu0
    %v2135 = vadd.f32 0.0, %v2134
    %v2136 = vpop.f32.mrb[0].mxu0
    %v2137 = vpop.f32.mrb[0].mxu0
    %v2138 = vpop.f32.mrb[0].mxu0
    %2139 = vdwg.mxu0
    %v2140 = vrot.slane %v2135, 4
    %v2141 = vadd.f32 %v2135, %v2140
    %v2142 = vrot.slane %v2141, 2
    %v2143 = vadd.f32 %v2141, %v2142
    %v2144 = vrot.slane %v2143, 1
    %v2145 = vadd.f32 %v2143, %v2144
    %v2146 = vmul.f32 %v2135, %v2135
    %v2147 = vrot.slane %v2146, 4
    %v2148 = vadd.f32 %v2146, %v2147
    %v2149 = vrot.slane %v2148, 2
    %v2150 = vadd.f32 %v2148, %v2149
    %v2151 = vrot.slane %v2150, 1
    %v2152 = vadd.f32 %v2150, %v2151
    %v2153 = vmul.f32 %v2145, 0.125
    %v2154 = vmul.f32 %v2152, 0.125
    %v2155 = vmul.f32 %v2153, %v2153
    %v2156 = vsub.f32 %v2154, %v2155
    %v2157 = vmax.f32 %v2156, 0.0
    %v2158 = vadd.f32 %v2157, 1e-12
    %v2159 = vrsqrt.pop %v2158
    %v2160 = vsub.f32 %v2135, %v2153
    %v2161 = vmul.f32 %v2160, %v2159
    %v2162 = vmax.f32 %v2161, 0.0
    %v2163 = vlaneseq
    %v2164 = vshrl.u32 %v2163, 7
    %v2165 = vsub.s32 3, %v2164
    %v2166 = vrot.slane %v1948, %v2165
    %v2167 = vmul.f32 %v2162, %v2166
    %2168 = vadd.xlane.f32.xlu0 %v2167
    %v2169 = vpop.xlane.xlu0 %2168
    %v2170 = vlaneseq
    %v2171 = vshrl.u32 %v2170, 7
    %v2172 = vsub.s32 4, %v2171
    %v2173 = vrot.slane %v1948, %v2172
    %v2174 = vmul.f32 %v2162, %v2173
    %2175 = vadd.xlane.f32.xlu0 %v2174
    %v2176 = vpop.xlane.xlu0 %2175
    %v2177 = vlaneseq
    %v2178 = vshrl.u32 %v2177, 7
    %v2179 = vsub.s32 5, %v2178
    %v2180 = vrot.slane %v1948, %v2179
    %v2181 = vadd.f32 %v2169, %v2180
    %v2182 = vlaneseq
    %v2183 = vshrl.u32 %v2182, 7
    %v2184 = vsub.s32 6, %v2183
    %v2185 = vrot.slane %v1948, %v2184
    %v2186 = vmul.f32 %v2181, %v2185
    %v2187 = vadd.f32 %v2176, %v2180
    %v2188 = vmul.f32 %v2187, %v2185
    %v2189 = vadd.f32 %v2188, 2.0
    %v2190 = vsub.f32 0.0, %v2189
    %v2191 = vmax.f32 %v2190, 0.0
    %v2192 = vand.u32 2147483647, %v2189
    %v2193 = vsub.f32 0.0, %v2192
    %v2194 = vmul.f32 %v2193, 1.442695
    %v2195 = vpow.pop %v2194
    %v2196 = vadd.f32 %v2195, 1.0
    %v2197 = vlog2.pop %v2196
    %v2198 = vmul.f32 %v2197, 0.6931472
    %v2199 = vadd.f32 %v2191, %v2198
    %v2200 = vsub.f32 0.0, %v2199
    %v2201 = vmul.f32 %v2200, 1.442695
    %v2202 = vpow.pop %v2201
    %2203 = vrot.lane.b32.xlu0 %v2000, 1
    %v2204 = vpop.permute.xlu0 %2203
    %v2206 = vmul.f32 %v2202, %v2204
    %2208 = vrot.lane.b32.xlu0 %v2186, 1
    %v2209 = vpop.permute.xlu0 %2208
    %v2211 = vadd.f32 %v2206, %v2209
    %2213 = vrot.lane.b32.xlu0 %v2211, 127
    %v2214 = vpop.permute.xlu0 %2213
    %v2216 = vsel %vm318, %v2214, %v2000
    %v2217 = vadd.f32 %v1946, %v2200
    %s2218 = scalar_lea.vmem [#allocation3], 64
    %v2219 = vld [vmem:[%s2218] sm:$0xff]
    %v2220 = vsel %vm51, %v2216, 0.0
    %v2221 = vrot.slane %v2220, 4
    %v2222 = vadd.f32 %v2220, %v2221
    %v2223 = vrot.slane %v2222, 2
    %v2224 = vadd.f32 %v2222, %v2223
    %v2225 = vrot.slane %v2224, 1
    %v2226 = vadd.f32 %v2224, %v2225
    %v2227 = vmul.f32 %v2226, 0.125
    %v2228 = vsub.f32 %v2216, %v2227
    %v2229 = vmul.f32 %v2228, %v2228
    %v2230 = vsel %vm51, %v2229, 0.0
    %v2231 = vrot.slane %v2230, 4
    %v2232 = vadd.f32 %v2230, %v2231
    %v2233 = vrot.slane %v2232, 2
    %v2234 = vadd.f32 %v2232, %v2233
    %v2235 = vrot.slane %v2234, 1
    %v2236 = vadd.f32 %v2234, %v2235
    %v2237 = vmul.f32 %v2236, 0.125
    %v2238 = vrsqrt.pop %v2237
    %v2239 = vmul.f32 %v2237, %v2238
    %vm2240 = vcmp.eq.f32.partialorder %v2237, inf
    %v2241 = vsel %vm2240, %v2237, %v2239
    %vm2242 = vcmp.eq.f32.partialorder %v2237, 0.0
    %v2243 = vand.u32 %v2237, 2147483648
    %v2244 = vsel %vm2242, %v2243, %v2241
    %v2245 = vadd.f32 %v2244, 1e-06
    %v2246 = vrcp.pop %v2245
    %v2247 = vmul.f32 %v2228, %v2246
    %v2248 = vlog2.pop %v2245
    %v2249 = vmul.f32 %v2248, 0.6931472
    %v2250 = vsub.f32 0.0, %v2249
    %v2251 = vadd.f32 %v1980, %v2250
    %2253 = vset.pattern.permute.xlu0 0
    %2254 = vperm.xlu0 %2253, %v2247
    %v2255 = vpop.permute.xlu0 %2254
    %v2257 = vlaneseq
    %v2258 = vshrl.u32 %v2257, 7
    %v2259 = vsub.s32 1, %v2258
    %v2260 = vrot.slane %v2219, %v2259
    %v2261 = vmul.f32 %v2255, %v2260
    %2262 = vset.pattern.permute.xlu0 1
    %2263 = vperm.xlu0 %2262, %v2247
    %v2264 = vpop.permute.xlu0 %2263
    %v2266 = vlaneseq
    %v2267 = vshrl.u32 %v2266, 7
    %v2268 = vsub.s32 2, %v2267
    %v2269 = vrot.slane %v2219, %v2268
    %v2270 = vmul.f32 %v2264, %v2269
    %v2271 = vadd.f32 %v2261, %v2270
    %2273 = vset.pattern.permute.xlu0 1
    %2274 = vperm.xlu0 %2273, %v2271
    %v2275 = vpop.permute.xlu0 %2274
    %v2277 = vlaneseq
    %v2278 = vshrl.u32 %v2277, 7
    %v2279 = vsub.s32 0, %v2278
    %v2280 = vrot.slane %v2219, %v2279
    %v2281 = vmul.f32 %v2275, %v2280
    %v2282 = vrot.slane %v2281, 4
    %v2283 = vadd.f32 %v2281, %v2282
    %v2284 = vrot.slane %v2283, 2
    %v2285 = vadd.f32 %v2283, %v2284
    %v2286 = vrot.slane %v2285, 1
    %v2287 = vadd.f32 %v2285, %v2286
    %v2288 = vmul.f32 %v2281, %v2281
    %v2289 = vrot.slane %v2288, 4
    %v2290 = vadd.f32 %v2288, %v2289
    %v2291 = vrot.slane %v2290, 2
    %v2292 = vadd.f32 %v2290, %v2291
    %v2293 = vrot.slane %v2292, 1
    %v2294 = vadd.f32 %v2292, %v2293
    %v2295 = vmul.f32 %v2287, 0.125
    %v2296 = vmul.f32 %v2294, 0.125
    %v2297 = vmul.f32 %v2295, %v2295
    %v2298 = vsub.f32 %v2296, %v2297
    %v2299 = vmax.f32 %v2298, 0.0
    %v2300 = vadd.f32 %v2299, 1e-12
    %v2301 = vrsqrt.pop %v2300
    %v2302 = vsub.f32 %v2281, %v2295
    %v2303 = vmul.f32 %v2302, %v2301
    %v2304 = vmax.f32 %v2303, 0.0
    %v2305 = vpack.c.bf16 %v2304, %v2304
    %s2306 = scalar_lea.vmem [#allocation5], 512
    %v2307 = vld [vmem:[%s2306] sm:$0xf]
    %v2308 = vld [vmem:[%s2306 + $0x4] sm:$0xf]
    %v2309 = vld [vmem:[%s2306 + $0x8] sm:$0xf]
    %v2310 = vld [vmem:[%s2306 + $0xc] sm:$0xf]
    %v2311 = vld [vmem:[%s2306 + $0x10] sm:$0xf]
    %v2312 = vld [vmem:[%s2306 + $0x14] sm:$0xf]
    %v2313 = vld [vmem:[%s2306 + $0x18] sm:$0xf]
    %v2314 = vld [vmem:[%s2306 + $0x1c] sm:$0xf]
    %v2315 = vld [vmem:[%s2306 + $0x20] sm:$0xf]
    %v2316 = vld [vmem:[%s2306 + $0x24] sm:$0xf]
    %v2317 = vld [vmem:[%s2306 + $0x28] sm:$0xf]
    %v2318 = vld [vmem:[%s2306 + $0x2c] sm:$0xf]
    %v2319 = vld [vmem:[%s2306 + $0x30] sm:$0xf]
    %v2320 = vld [vmem:[%s2306 + $0x34] sm:$0xf]
    %v2321 = vld [vmem:[%s2306 + $0x38] sm:$0xf]
    %v2322 = vld [vmem:[%s2306 + $0x3c] sm:$0xf]
    %v2339 = vunpack.c.l.b16 %v2307
    %v2340 = vunpack.c.l.b16 %v2308
    %v2341 = vunpack.c.l.b16 %v2309
    %v2342 = vunpack.c.l.b16 %v2310
    %v2343 = vunpack.c.l.b16 %v2311
    %v2344 = vunpack.c.l.b16 %v2312
    %v2345 = vunpack.c.l.b16 %v2313
    %v2346 = vunpack.c.l.b16 %v2314
    %v2347 = vunpack.c.l.b16 %v2315
    %v2348 = vunpack.c.l.b16 %v2316
    %v2349 = vunpack.c.l.b16 %v2317
    %v2350 = vunpack.c.l.b16 %v2318
    %v2351 = vunpack.c.l.b16 %v2319
    %v2352 = vunpack.c.l.b16 %v2320
    %v2353 = vunpack.c.l.b16 %v2321
    %v2354 = vunpack.c.l.b16 %v2322
    %v2355 = vpack.c.b16 %v2340, %v2339
    %v2356 = vpack.c.b16 %v2342, %v2341
    %v2357 = vpack.c.b16 %v2344, %v2343
    %v2358 = vpack.c.b16 %v2346, %v2345
    %v2359 = vpack.c.b16 %v2348, %v2347
    %v2360 = vpack.c.b16 %v2350, %v2349
    %v2361 = vpack.c.b16 %v2352, %v2351
    %v2362 = vpack.c.b16 %v2354, %v2353
    %2371 = vmatprep.subr.bf16.mxu0 0
    %2372 = vmatpush1.bf16.msra.mxu0 %v2355
    %2373 = vmatprep.subr.bf16.mxu0 0
    %2374 = vmatpush1.bf16.msra.mxu0 %v2356
    %2375 = vmatprep.subr.bf16.mxu0 0
    %2376 = vmatpush1.bf16.msra.mxu0 %v2357
    %2377 = vmatprep.subr.bf16.mxu0 0
    %2378 = vmatpush1.bf16.msra.mxu0 %v2358
    %2379 = vmatprep.subr.bf16.mxu0 0
    %2380 = vmatpush1.bf16.msra.mxu0 %v2359
    %2381 = vmatprep.subr.bf16.mxu0 0
    %2382 = vmatpush1.bf16.msra.mxu0 %v2360
    %2383 = vmatprep.subr.bf16.mxu0 0
    %2384 = vmatpush1.bf16.msra.mxu0 %v2361
    %2385 = vmatprep.subr.bf16.mxu0 0
    %2386 = vmatpush1.bf16.msra.mxu0 %v2362
    %2387 = vmatprep.subr.bf16.mxu0 0
    %2388 = vmatpush1.bf16.msra.mxu0 0
    %2389 = vmatprep.subr.bf16.mxu0 0
    %2390 = vmatpush1.bf16.msra.mxu0 0
    %2391 = vmatprep.subr.bf16.mxu0 0
    %2392 = vmatpush1.bf16.msra.mxu0 0
    %2393 = vmatprep.subr.bf16.mxu0 0
    %2394 = vmatpush1.bf16.msra.mxu0 0
    %2395 = vmatprep.subr.bf16.mxu0 0
    %2396 = vmatpush1.bf16.msra.mxu0 0
    %2397 = vmatprep.subr.bf16.mxu0 0
    %2398 = vmatpush1.bf16.msra.mxu0 0
    %2399 = vmatprep.subr.bf16.mxu0 0
    %2400 = vmatpush1.bf16.msra.mxu0 0
    %2401 = vmatprep.subr.bf16.mxu0 0
    %2402 = vmatpush1.bf16.msra.mxu0 0
    %2403 = vmatprep.mubr.bf16.mxu0 0
    %2404 = vmatmul.mubr.bf16.gmra.mrb[0].mxu0 %v2305
    %v2405 = vpop.f32.mrb[0].mxu0
    %v2406 = vadd.f32 0.0, %v2405
    %v2407 = vpop.f32.mrb[0].mxu0
    %v2408 = vpop.f32.mrb[0].mxu0
    %v2409 = vpop.f32.mrb[0].mxu0
    %2410 = vdwg.mxu0
    %v2411 = vrot.slane %v2406, 4
    %v2412 = vadd.f32 %v2406, %v2411
    %v2413 = vrot.slane %v2412, 2
    %v2414 = vadd.f32 %v2412, %v2413
    %v2415 = vrot.slane %v2414, 1
    %v2416 = vadd.f32 %v2414, %v2415
    %v2417 = vmul.f32 %v2406, %v2406
    %v2418 = vrot.slane %v2417, 4
    %v2419 = vadd.f32 %v2417, %v2418
    %v2420 = vrot.slane %v2419, 2
    %v2421 = vadd.f32 %v2419, %v2420
    %v2422 = vrot.slane %v2421, 1
    %v2423 = vadd.f32 %v2421, %v2422
    %v2424 = vmul.f32 %v2416, 0.125
    %v2425 = vmul.f32 %v2423, 0.125
    %v2426 = vmul.f32 %v2424, %v2424
    %v2427 = vsub.f32 %v2425, %v2426
    %v2428 = vmax.f32 %v2427, 0.0
    %v2429 = vadd.f32 %v2428, 1e-12
    %v2430 = vrsqrt.pop %v2429
    %v2431 = vsub.f32 %v2406, %v2424
    %v2432 = vmul.f32 %v2431, %v2430
    %v2433 = vmax.f32 %v2432, 0.0
    %v2434 = vlaneseq
    %v2435 = vshrl.u32 %v2434, 7
    %v2436 = vsub.s32 3, %v2435
    %v2437 = vrot.slane %v2219, %v2436
    %v2438 = vmul.f32 %v2433, %v2437
    %2439 = vadd.xlane.f32.xlu0 %v2438
    %v2440 = vpop.xlane.xlu0 %2439
    %v2441 = vlaneseq
    %v2442 = vshrl.u32 %v2441, 7
    %v2443 = vsub.s32 4, %v2442
    %v2444 = vrot.slane %v2219, %v2443
    %v2445 = vmul.f32 %v2433, %v2444
    %2446 = vadd.xlane.f32.xlu0 %v2445
    %v2447 = vpop.xlane.xlu0 %2446
    %v2448 = vlaneseq
    %v2449 = vshrl.u32 %v2448, 7
    %v2450 = vsub.s32 5, %v2449
    %v2451 = vrot.slane %v2219, %v2450
    %v2452 = vadd.f32 %v2440, %v2451
    %v2453 = vlaneseq
    %v2454 = vshrl.u32 %v2453, 7
    %v2455 = vsub.s32 6, %v2454
    %v2456 = vrot.slane %v2219, %v2455
    %v2457 = vmul.f32 %v2452, %v2456
    %v2458 = vadd.f32 %v2447, %v2451
    %v2459 = vmul.f32 %v2458, %v2456
    %v2460 = vadd.f32 %v2459, 2.0
    %v2461 = vsub.f32 0.0, %v2460
    %v2462 = vmax.f32 %v2461, 0.0
    %v2463 = vand.u32 2147483647, %v2460
    %v2464 = vsub.f32 0.0, %v2463
    %v2465 = vmul.f32 %v2464, 1.442695
    %v2466 = vpow.pop %v2465
    %v2467 = vadd.f32 %v2466, 1.0
    %v2468 = vlog2.pop %v2467
    %v2469 = vmul.f32 %v2468, 0.6931472
    %v2470 = vadd.f32 %v2462, %v2469
    %v2471 = vsub.f32 0.0, %v2470
    %v2472 = vmul.f32 %v2471, 1.442695
    %v2473 = vpow.pop %v2472
    %2474 = vrot.lane.b32.xlu0 %v2271, 1
    %v2475 = vpop.permute.xlu0 %2474
    %v2477 = vmul.f32 %v2473, %v2475
    %2479 = vrot.lane.b32.xlu0 %v2457, 1
    %v2480 = vpop.permute.xlu0 %2479
    %v2482 = vadd.f32 %v2477, %v2480
    %2484 = vrot.lane.b32.xlu0 %v2482, 127
    %v2485 = vpop.permute.xlu0 %2484
    %v2487 = vsel %vm318, %v2485, %v2271
    %v2488 = vadd.f32 %v2217, %v2471
    %s2489 = scalar_lea.vmem [#allocation3], 72
    %v2490 = vld [vmem:[%s2489] sm:$0xff]
    %v2491 = vsel %vm51, %v2487, 0.0
    %v2492 = vrot.slane %v2491, 4
    %v2493 = vadd.f32 %v2491, %v2492
    %v2494 = vrot.slane %v2493, 2
    %v2495 = vadd.f32 %v2493, %v2494
    %v2496 = vrot.slane %v2495, 1
    %v2497 = vadd.f32 %v2495, %v2496
    %v2498 = vmul.f32 %v2497, 0.125
    %v2499 = vsub.f32 %v2487, %v2498
    %v2500 = vmul.f32 %v2499, %v2499
    %v2501 = vsel %vm51, %v2500, 0.0
    %v2502 = vrot.slane %v2501, 4
    %v2503 = vadd.f32 %v2501, %v2502
    %v2504 = vrot.slane %v2503, 2
    %v2505 = vadd.f32 %v2503, %v2504
    %v2506 = vrot.slane %v2505, 1
    %v2507 = vadd.f32 %v2505, %v2506
    %v2508 = vmul.f32 %v2507, 0.125
    %v2509 = vrsqrt.pop %v2508
    %v2510 = vmul.f32 %v2508, %v2509
    %vm2511 = vcmp.eq.f32.partialorder %v2508, inf
    %v2512 = vsel %vm2511, %v2508, %v2510
    %vm2513 = vcmp.eq.f32.partialorder %v2508, 0.0
    %v2514 = vand.u32 %v2508, 2147483648
    %v2515 = vsel %vm2513, %v2514, %v2512
    %v2516 = vadd.f32 %v2515, 1e-06
    %v2517 = vrcp.pop %v2516
    %v2518 = vmul.f32 %v2499, %v2517
    %v2519 = vlog2.pop %v2516
    %v2520 = vmul.f32 %v2519, 0.6931472
    %v2521 = vsub.f32 0.0, %v2520
    %v2522 = vadd.f32 %v2251, %v2521
    %2524 = vset.pattern.permute.xlu0 0
    %2525 = vperm.xlu0 %2524, %v2518
    %v2526 = vpop.permute.xlu0 %2525
    %v2528 = vlaneseq
    %v2529 = vshrl.u32 %v2528, 7
    %v2530 = vsub.s32 1, %v2529
    %v2531 = vrot.slane %v2490, %v2530
    %v2532 = vmul.f32 %v2526, %v2531
    %2533 = vset.pattern.permute.xlu0 1
    %2534 = vperm.xlu0 %2533, %v2518
    %v2535 = vpop.permute.xlu0 %2534
    %v2537 = vlaneseq
    %v2538 = vshrl.u32 %v2537, 7
    %v2539 = vsub.s32 2, %v2538
    %v2540 = vrot.slane %v2490, %v2539
    %v2541 = vmul.f32 %v2535, %v2540
    %v2542 = vadd.f32 %v2532, %v2541
    %2544 = vset.pattern.permute.xlu0 1
    %2545 = vperm.xlu0 %2544, %v2542
    %v2546 = vpop.permute.xlu0 %2545
    %v2548 = vlaneseq
    %v2549 = vshrl.u32 %v2548, 7
    %v2550 = vsub.s32 0, %v2549
    %v2551 = vrot.slane %v2490, %v2550
    %v2552 = vmul.f32 %v2546, %v2551
    %v2553 = vrot.slane %v2552, 4
    %v2554 = vadd.f32 %v2552, %v2553
    %v2555 = vrot.slane %v2554, 2
    %v2556 = vadd.f32 %v2554, %v2555
    %v2557 = vrot.slane %v2556, 1
    %v2558 = vadd.f32 %v2556, %v2557
    %v2559 = vmul.f32 %v2552, %v2552
    %v2560 = vrot.slane %v2559, 4
    %v2561 = vadd.f32 %v2559, %v2560
    %v2562 = vrot.slane %v2561, 2
    %v2563 = vadd.f32 %v2561, %v2562
    %v2564 = vrot.slane %v2563, 1
    %v2565 = vadd.f32 %v2563, %v2564
    %v2566 = vmul.f32 %v2558, 0.125
    %v2567 = vmul.f32 %v2565, 0.125
    %v2568 = vmul.f32 %v2566, %v2566
    %v2569 = vsub.f32 %v2567, %v2568
    %v2570 = vmax.f32 %v2569, 0.0
    %v2571 = vadd.f32 %v2570, 1e-12
    %v2572 = vrsqrt.pop %v2571
    %v2573 = vsub.f32 %v2552, %v2566
    %v2574 = vmul.f32 %v2573, %v2572
    %v2575 = vmax.f32 %v2574, 0.0
    %v2576 = vpack.c.bf16 %v2575, %v2575
    %s2577 = scalar_lea.vmem [#allocation5], 576
    %v2578 = vld [vmem:[%s2577] sm:$0xf]
    %v2579 = vld [vmem:[%s2577 + $0x4] sm:$0xf]
    %v2580 = vld [vmem:[%s2577 + $0x8] sm:$0xf]
    %v2581 = vld [vmem:[%s2577 + $0xc] sm:$0xf]
    %v2582 = vld [vmem:[%s2577 + $0x10] sm:$0xf]
    %v2583 = vld [vmem:[%s2577 + $0x14] sm:$0xf]
    %v2584 = vld [vmem:[%s2577 + $0x18] sm:$0xf]
    %v2585 = vld [vmem:[%s2577 + $0x1c] sm:$0xf]
    %v2586 = vld [vmem:[%s2577 + $0x20] sm:$0xf]
    %v2587 = vld [vmem:[%s2577 + $0x24] sm:$0xf]
    %v2588 = vld [vmem:[%s2577 + $0x28] sm:$0xf]
    %v2589 = vld [vmem:[%s2577 + $0x2c] sm:$0xf]
    %v2590 = vld [vmem:[%s2577 + $0x30] sm:$0xf]
    %v2591 = vld [vmem:[%s2577 + $0x34] sm:$0xf]
    %v2592 = vld [vmem:[%s2577 + $0x38] sm:$0xf]
    %v2593 = vld [vmem:[%s2577 + $0x3c] sm:$0xf]
    %v2610 = vunpack.c.l.b16 %v2578
    %v2611 = vunpack.c.l.b16 %v2579
    %v2612 = vunpack.c.l.b16 %v2580
    %v2613 = vunpack.c.l.b16 %v2581
    %v2614 = vunpack.c.l.b16 %v2582
    %v2615 = vunpack.c.l.b16 %v2583
    %v2616 = vunpack.c.l.b16 %v2584
    %v2617 = vunpack.c.l.b16 %v2585
    %v2618 = vunpack.c.l.b16 %v2586
    %v2619 = vunpack.c.l.b16 %v2587
    %v2620 = vunpack.c.l.b16 %v2588
    %v2621 = vunpack.c.l.b16 %v2589
    %v2622 = vunpack.c.l.b16 %v2590
    %v2623 = vunpack.c.l.b16 %v2591
    %v2624 = vunpack.c.l.b16 %v2592
    %v2625 = vunpack.c.l.b16 %v2593
    %v2626 = vpack.c.b16 %v2611, %v2610
    %v2627 = vpack.c.b16 %v2613, %v2612
    %v2628 = vpack.c.b16 %v2615, %v2614
    %v2629 = vpack.c.b16 %v2617, %v2616
    %v2630 = vpack.c.b16 %v2619, %v2618
    %v2631 = vpack.c.b16 %v2621, %v2620
    %v2632 = vpack.c.b16 %v2623, %v2622
    %v2633 = vpack.c.b16 %v2625, %v2624
    %2642 = vmatprep.subr.bf16.mxu0 0
    %2643 = vmatpush1.bf16.msra.mxu0 %v2626
    %2644 = vmatprep.subr.bf16.mxu0 0
    %2645 = vmatpush1.bf16.msra.mxu0 %v2627
    %2646 = vmatprep.subr.bf16.mxu0 0
    %2647 = vmatpush1.bf16.msra.mxu0 %v2628
    %2648 = vmatprep.subr.bf16.mxu0 0
    %2649 = vmatpush1.bf16.msra.mxu0 %v2629
    %2650 = vmatprep.subr.bf16.mxu0 0
    %2651 = vmatpush1.bf16.msra.mxu0 %v2630
    %2652 = vmatprep.subr.bf16.mxu0 0
    %2653 = vmatpush1.bf16.msra.mxu0 %v2631
    %2654 = vmatprep.subr.bf16.mxu0 0
    %2655 = vmatpush1.bf16.msra.mxu0 %v2632
    %2656 = vmatprep.subr.bf16.mxu0 0
    %2657 = vmatpush1.bf16.msra.mxu0 %v2633
    %2658 = vmatprep.subr.bf16.mxu0 0
    %2659 = vmatpush1.bf16.msra.mxu0 0
    %2660 = vmatprep.subr.bf16.mxu0 0
    %2661 = vmatpush1.bf16.msra.mxu0 0
    %2662 = vmatprep.subr.bf16.mxu0 0
    %2663 = vmatpush1.bf16.msra.mxu0 0
    %2664 = vmatprep.subr.bf16.mxu0 0
    %2665 = vmatpush1.bf16.msra.mxu0 0
    %2666 = vmatprep.subr.bf16.mxu0 0
    %2667 = vmatpush1.bf16.msra.mxu0 0
    %2668 = vmatprep.subr.bf16.mxu0 0
    %2669 = vmatpush1.bf16.msra.mxu0 0
    %2670 = vmatprep.subr.bf16.mxu0 0
    %2671 = vmatpush1.bf16.msra.mxu0 0
    %2672 = vmatprep.subr.bf16.mxu0 0
    %2673 = vmatpush1.bf16.msra.mxu0 0
    %2674 = vmatprep.mubr.bf16.mxu0 0
    %2675 = vmatmul.mubr.bf16.gmra.mrb[0].mxu0 %v2576
    %v2676 = vpop.f32.mrb[0].mxu0
    %v2677 = vadd.f32 0.0, %v2676
    %v2678 = vpop.f32.mrb[0].mxu0
    %v2679 = vpop.f32.mrb[0].mxu0
    %v2680 = vpop.f32.mrb[0].mxu0
    %2681 = vdwg.mxu0
    %v2682 = vrot.slane %v2677, 4
    %v2683 = vadd.f32 %v2677, %v2682
    %v2684 = vrot.slane %v2683, 2
    %v2685 = vadd.f32 %v2683, %v2684
    %v2686 = vrot.slane %v2685, 1
    %v2687 = vadd.f32 %v2685, %v2686
    %v2688 = vmul.f32 %v2677, %v2677
    %v2689 = vrot.slane %v2688, 4
    %v2690 = vadd.f32 %v2688, %v2689
    %v2691 = vrot.slane %v2690, 2
    %v2692 = vadd.f32 %v2690, %v2691
    %v2693 = vrot.slane %v2692, 1
    %v2694 = vadd.f32 %v2692, %v2693
    %v2695 = vmul.f32 %v2687, 0.125
    %v2696 = vmul.f32 %v2694, 0.125
    %v2697 = vmul.f32 %v2695, %v2695
    %v2698 = vsub.f32 %v2696, %v2697
    %v2699 = vmax.f32 %v2698, 0.0
    %v2700 = vadd.f32 %v2699, 1e-12
    %v2701 = vrsqrt.pop %v2700
    %v2702 = vsub.f32 %v2677, %v2695
    %v2703 = vmul.f32 %v2702, %v2701
    %v2704 = vmax.f32 %v2703, 0.0
    %v2705 = vlaneseq
    %v2706 = vshrl.u32 %v2705, 7
    %v2707 = vsub.s32 3, %v2706
    %v2708 = vrot.slane %v2490, %v2707
    %v2709 = vmul.f32 %v2704, %v2708
    %2710 = vadd.xlane.f32.xlu0 %v2709
    %v2711 = vpop.xlane.xlu0 %2710
    %v2712 = vlaneseq
    %v2713 = vshrl.u32 %v2712, 7
    %v2714 = vsub.s32 4, %v2713
    %v2715 = vrot.slane %v2490, %v2714
    %v2716 = vmul.f32 %v2704, %v2715
    %2717 = vadd.xlane.f32.xlu0 %v2716
    %v2718 = vpop.xlane.xlu0 %2717
    %v2719 = vlaneseq
    %v2720 = vshrl.u32 %v2719, 7
    %v2721 = vsub.s32 5, %v2720
    %v2722 = vrot.slane %v2490, %v2721
    %v2723 = vadd.f32 %v2711, %v2722
    %v2724 = vlaneseq
    %v2725 = vshrl.u32 %v2724, 7
    %v2726 = vsub.s32 6, %v2725
    %v2727 = vrot.slane %v2490, %v2726
    %v2728 = vmul.f32 %v2723, %v2727
    %v2729 = vadd.f32 %v2718, %v2722
    %v2730 = vmul.f32 %v2729, %v2727
    %v2731 = vadd.f32 %v2730, 2.0
    %v2732 = vsub.f32 0.0, %v2731
    %v2733 = vmax.f32 %v2732, 0.0
    %v2734 = vand.u32 2147483647, %v2731
    %v2735 = vsub.f32 0.0, %v2734
    %v2736 = vmul.f32 %v2735, 1.442695
    %v2737 = vpow.pop %v2736
    %v2738 = vadd.f32 %v2737, 1.0
    %v2739 = vlog2.pop %v2738
    %v2740 = vmul.f32 %v2739, 0.6931472
    %v2741 = vadd.f32 %v2733, %v2740
    %v2742 = vsub.f32 0.0, %v2741
    %v2743 = vmul.f32 %v2742, 1.442695
    %v2744 = vpow.pop %v2743
    %2745 = vrot.lane.b32.xlu0 %v2542, 1
    %v2746 = vpop.permute.xlu0 %2745
    %v2748 = vmul.f32 %v2744, %v2746
    %2750 = vrot.lane.b32.xlu0 %v2728, 1
    %v2751 = vpop.permute.xlu0 %2750
    %v2753 = vadd.f32 %v2748, %v2751
    %2755 = vrot.lane.b32.xlu0 %v2753, 127
    %v2756 = vpop.permute.xlu0 %2755
    %v2758 = vsel %vm318, %v2756, %v2542
    %v2759 = vadd.f32 %v2488, %v2742
    %2760 = vst.msk [vmem:[%s4] sm:$0xff] %vm51, %v2758
    %vm2761 = vcmask 8192
    %v2762 = vsel %vm2761, %v2522, 0.0
    %2763 = vadd.xlane.f32.xlu0 %v2762
    %v2764 = vpop.xlane.xlu0 %2763
    %v2765 = vrot.slane %v2764, 4
    %v2766 = vadd.f32 %v2764, %v2765
    %v2767 = vrot.slane %v2766, 2
    %v2768 = vadd.f32 %v2766, %v2767
    %v2769 = vrot.slane %v2768, 1
    %v2770 = vadd.f32 %v2768, %v2769
    %s2771 = vtos %v2770
    %v2772 = vstv %s2771
    %v2773 = vadd.f32 %v2759, %v2772
    %s2774 = sld [smem:[#allocation2]]
    %v2775 = vstv %s2774
    %v2776 = vadd.f32 %v2773, %v2775
    %2778 = vrot.lane.b32.xlu0 %v2776, 127
    %v2779 = vpop.permute.xlu0 %2778
    %2781 = vst.msk [vmem:[%s5] sm:$0xff] %vm318, %v2779
    // Predicated region
    $region26: #{flow_level_forward.1} parent=1 // pred_check
      _
    $region27: #{flow_level_forward.1} parent=1 // pred_check_branch
      %2783 = sbr.rel (0) target = $region29
    $region28: #{flow_level_forward.1} parent=1 // pred_region
      _
    $region29: #{flow_level_forward.1} parent=1 // pred_fallthru
      _
    // Predicated region
    $region30: #{flow_level_forward.1} parent=1 // pred_check
      _
    $region31: #{flow_level_forward.1} parent=1 // pred_check_branch
      %2785 = sbr.rel (0) target = $region33
    $region32: #{flow_level_forward.1} parent=1 // pred_region
      _
    $region33: #{flow_level_forward.1} parent=1 // pred_fallthru
      _
    // Predicated region
    $region34: #{flow_level_forward.1} parent=1 // pred_check
      _
    $region35: #{flow_level_forward.1} parent=1 // pred_check_branch
      %2787 = sbr.rel (0) target = $region37
    $region36: #{flow_level_forward.1} parent=1 // pred_region
      _
    $region37: #{flow_level_forward.1} parent=1 // pred_fallthru
      _
    // Predicated region
    $region38: #{flow_level_forward.1} parent=1 // pred_check
      _
    $region39: #{flow_level_forward.1} parent=1 // pred_check_branch
      %2789 = sbr.rel (0) target = $region41
    $region40: #{flow_level_forward.1} parent=1 // pred_region
      _
    $region41: #{flow_level_forward.1} parent=1 // pred_fallthru
      _
    %2790 = vsyncpa [#allocation4], 1
    %2791 = vsyncpa [#allocation6], 1

</llo_original>
